<compile_context>
chip_gen: v7x
topology: tpu7x:2x2x1
jax: 0.10.0
libtpu: 0.0.40
codegen_flags: <defaults>
</compile_context>

<pallas_src>
import functools

import jax
import jax.numpy as jnp
from jax.experimental import pallas as pl
from jax.experimental.pallas import tpu as pltpu


_LANES = 128  # lane width of every packed / padded tile


def _round_up(n, m):
    return (n + m - 1) // m * m


def _pad2d(x, rows, cols):
    x = jnp.asarray(x, jnp.float32)
    assert x.ndim == 2 and x.shape[0] <= rows and x.shape[1] <= cols, x.shape
    return jnp.pad(x, ((0, rows - x.shape[0]), (0, cols - x.shape[1])))


def _pack_slab(pieces):
    """Pack (name, [r,128] f32) pairs into one [R,128] slab; every piece starts on a
    sublane-aligned (multiple-of-8) row. Returns slab + static row offsets."""
    offsets, chunks, row = {}, [], 0
    for name, arr in pieces:
        assert arr.shape[1] == _LANES, (name, arr.shape)
        h = _round_up(arr.shape[0], 8)
        chunks.append(jnp.pad(arr, ((0, h - arr.shape[0]), (0, 0))))
        offsets[name] = row
        row += h
    return jnp.concatenate(chunks, axis=0), offsets


def pack_ggnn_params(A, params):
    """Pack adjacency + all GGNN parameters of ONE instance into a [R,128] f32 slab.

    Call once at init (hoisted out of the per-call path). Gate weights are split per
    input operand (a0 | state) so the kernel never concatenates along lanes, and every
    weight is zero-padded to a full [128,128] tile so all in-kernel dots are full-width.
    """
    A = jnp.asarray(A, jnp.float32)
    S = params["W_f2s"].shape[0]          # state_dim
    C = params["W_f2s"].shape[1]          # fc_out_channels
    F = A.shape[0]                        # feature_dim == number of graph nodes
    F_pad = _round_up(F, 8)
    K = _LANES
    assert max(F_pad, C, 2 * S) <= K, "kernel assumes node/state/channel dims <= 128"

    def row(v):
        return jnp.asarray(v, jnp.float32).reshape(1, -1)

    W_r = jnp.asarray(params["W_r"], jnp.float32)   # torch Linear: [S, 2S]
    W_z = jnp.asarray(params["W_z"], jnp.float32)
    W_t = jnp.asarray(params["W_t"], jnp.float32)

    pieces = [
        ("A",    _pad2d(A, F_pad, K)),
        ("cw",   _pad2d(params["cw"], F_pad, K)),
        ("Wf2s", _pad2d(jnp.asarray(params["W_f2s"], jnp.float32).T, K, K)),
        ("bf2s", _pad2d(row(params["b_f2s"]), 1, K)),
        # split gate / transform Linears: columns [:S] act on a0, [S:] on state
        ("Wra",  _pad2d(W_r[:, :S].T, K, K)), ("Wrs", _pad2d(W_r[:, S:].T, K, K)),
        ("br",   _pad2d(row(params["b_r"]), 1, K)),
        ("Wza",  _pad2d(W_z[:, :S].T, K, K)), ("Wzs", _pad2d(W_z[:, S:].T, K, K)),
        ("bz",   _pad2d(row(params["b_z"]), 1, K)),
        ("Wta",  _pad2d(W_t[:, :S].T, K, K)), ("Wts", _pad2d(W_t[:, S:].T, K, K)),
        ("bt",   _pad2d(row(params["b_t"]), 1, K)),
        ("Ws2f", _pad2d(jnp.asarray(params["W_s2f"], jnp.float32).T, K, K)),
        ("bs2f", _pad2d(row(params["b_s2f"]), 1, K)),
    ]
    slab, off = _pack_slab(pieces)
    meta = dict(off=off, F=F, F_pad=F_pad, S=S, C=C, rows=slab.shape[0])
    return slab, meta


def _ggnn_kernel(n_steps, F_pad, off, slab_ref, featT_ref, outT_ref):
    """One GGNN instance per grid step.

    slab_ref : [R, 128]   f32 packed params (static layout in `off`)
    featT_ref: [128, 128] f32 feat.T zero-padded (rows=C real, cols=B real)
    outT_ref : [F_pad,128]f32 out.T zero-padded; wrapper slices [:F,:B] + transposes
    """
    K = _LANES
    bf16 = jnp.bfloat16
    dot = functools.partial(jnp.dot, preferred_element_type=jnp.float32)

    def piece(name, rows, cols=K):
        r0 = off[name]                       # static python int -> free view
        return slab_ref[r0:r0 + rows, :cols]

    # ---- prologue: one-time loads + bf16 casts of all MXU operands (hoisted) ----
    A_bf  = piece("A", F_pad, F_pad).astype(bf16)
    cw_bf = piece("cw", F_pad).astype(bf16)
    Wf2s  = piece("Wf2s", K).astype(bf16)
    Wra, Wrs = piece("Wra", K).astype(bf16), piece("Wrs", K).astype(bf16)
    Wza, Wzs = piece("Wza", K).astype(bf16), piece("Wzs", K).astype(bf16)
    Wta, Wts = piece("Wta", K).astype(bf16), piece("Wts", K).astype(bf16)
    Ws2f  = piece("Ws2f", K).astype(bf16)
    featT_bf = featT_ref[...].astype(bf16)

    # Bias broadcasts hoisted out of the unrolled loop (JAX does not CSE broadcasts).
    bf2s = jnp.broadcast_to(piece("bf2s", 1), (F_pad, K))
    br   = jnp.broadcast_to(piece("br", 1), (F_pad, K))
    bz   = jnp.broadcast_to(piece("bz", 1), (F_pad, K))
    bt   = jnp.broadcast_to(piece("bt", 1), (F_pad, K))
    bs2f = jnp.broadcast_to(piece("bs2f", 1), (F_pad, K))

    # state = feature2state_dim(classifier_weight): [F_pad, 128]; lanes >= S stay 0.
    state = dot(cw_bf, Wf2s) + bf2s

    # Fully unrolled propagation: 7 single-pass bf16 MXU matmuls per step, zero XLU
    # lane shuffles; per-step critical path = 3 serial matmuls + sigmoid + tanh.
    for _ in range(n_steps):
        state_bf = state.astype(bf16)
        a0 = dot(A_bf, state_bf)                                   # [F_pad, 128] f32
        a0_bf = a0.astype(bf16)
        r = jax.nn.sigmoid(dot(a0_bf, Wra) + dot(state_bf, Wrs) + br)
        z = jax.nn.sigmoid(dot(a0_bf, Wza) + dot(state_bf, Wzs) + bz)
        h_hat = jnp.tanh(dot(a0_bf, Wta) + dot((r * state).astype(bf16), Wts) + bt)
        state = (1.0 - z) * state + z * h_hat                      # f32 blend

    # result = state2feature_dim(state): lanes >= C are exactly zero.
    result = dot(state.astype(bf16), Ws2f) + bs2f
    # out.T (lane-padded) = result @ feat.T  -> full-vreg, lane-dense store.
    outT_ref[...] = dot(result.astype(bf16), featT_bf)


def ggnn_forward_batched(feats, slabs, meta, n_steps):
    """feats: [N, B, C] f32; slabs: [N, R, 128] from pack_ggnn_params (shared meta).
    Returns [N, B, F]. One grid step per instance; axis marked 'parallel'."""
    N, B, C = feats.shape
    F, F_pad, R, K = meta["F"], meta["F_pad"], meta["rows"], _LANES
    assert C == meta["C"] and B <= K and slabs.shape == (N, R, K), (feats.shape, slabs.shape)

    # feat.T zero-padded to a full [128,128] tile -> the epilogue matmul and the
    # output store are full-width and the kernel needs no slicing at all.
    featT = jnp.swapaxes(feats.astype(jnp.float32), 1, 2)          # [N, C, B]
    featT_p = jnp.pad(featT, ((0, 0), (0, K - C), (0, K - B)))     # [N, 128, 128]

    mm_flops = 2 * F_pad * K * K * (3 + 6 * n_steps) + n_steps * 2 * F_pad * F_pad * K
    cost = pl.CostEstimate(
        flops=N * mm_flops,
        transcendentals=N * n_steps * 3 * F_pad * K,
        bytes_accessed=N * 4 * (R * K + K * K + F_pad * K),
    )

    outT_p = pl.pallas_call(
        functools.partial(_ggnn_kernel, n_steps, F_pad, meta["off"]),
        out_shape=jax.ShapeDtypeStruct((N, F_pad, K), jnp.float32),
        grid=(N,),
        in_specs=[
            pl.BlockSpec((None, R, K), lambda i: (i, 0, 0)),   # per-instance param slab
            pl.BlockSpec((None, K, K), lambda i: (i, 0, 0)),   # per-instance feat.T tile
        ],
        out_specs=pl.BlockSpec((None, F_pad, K), lambda i: (i, 0, 0)),
        compiler_params=pltpu.CompilerParams(dimension_semantics=("parallel",)),
        cost_estimate=cost,
    )(slabs, featT_p)

    # [N, F_pad, 128] -> [N, B, F]  (tiny wrapper-side slice + transpose)
    return jnp.swapaxes(outT_p[:, :F, :B], 1, 2)


def ggnn_forward(feat, slab, meta, n_steps):
    """Single-instance forward matching GGNN.forward: feat [B, C] -> [B, F]."""
    return ggnn_forward_batched(feat[None], slab[None], meta, n_steps)[0]


def ggnn_reference(feat, A, p, n_steps):
    """Pure-JAX f32 reference mirroring the PyTorch module exactly."""
    state = p["cw"] @ p["W_f2s"].T + p["b_f2s"]
    for _ in range(n_steps):
        a0 = A @ state
        a = jnp.concatenate([a0, state], axis=1)
        r = jax.nn.sigmoid(a @ p["W_r"].T + p["b_r"])
        z = jax.nn.sigmoid(a @ p["W_z"].T + p["b_z"])
        joined = jnp.concatenate([a0, r * state], axis=1)
        h_hat = jnp.tanh(joined @ p["W_t"].T + p["b_t"])
        state = (1.0 - z) * state + z * h_hat
    result = state @ p["W_s2f"].T + p["b_s2f"]
    return feat @ result.T


if __name__ == "__main__":
    # Shapes consistent with the module defaults.
    feature_dim, state_dim, fc_out_channels = 20, 10, 16
    batch, n_steps, n_instances = 2, 5, 3

    key = jax.random.PRNGKey(0)

    def make_instance(k):
        ks = jax.random.split(k, 12)
        n = lambda i, shape: 0.02 * jax.random.normal(ks[i], shape, jnp.float32)
        p = {
            "cw":    n(0, (feature_dim, fc_out_channels)),
            "W_f2s": n(1, (state_dim, fc_out_channels)),
            "b_f2s": n(2, (state_dim,)),
            "W_r":   n(3, (state_dim, 2 * state_dim)),
            "b_r":   n(4, (state_dim,)),
            "W_z":   n(5, (state_dim, 2 * state_dim)),
            "b_z":   n(6, (state_dim,)),
            "W_t":   n(7, (state_dim, 2 * state_dim)),
            "b_t":   n(8, (state_dim,)),
            "W_s2f": n(9, (fc_out_channels, state_dim)),
            "b_s2f": n(10, (fc_out_channels,)),
        }
        A = jax.random.uniform(ks[11], (feature_dim, feature_dim), jnp.float32)
        return A, p

    keys = jax.random.split(key, n_instances + 1)
    insts = [make_instance(k) for k in keys[:n_instances]]
    feats = jax.random.normal(keys[-1], (n_instances, batch, fc_out_channels), jnp.float32)

    # Pack once at init (hoisted out of the per-call path), then stack instances.
    packed = [pack_ggnn_params(A, p) for A, p in insts]
    meta = packed[0][1]
    slabs = jnp.stack([s for s, _ in packed])

    fwd = jax.jit(lambda f, s: ggnn_forward_batched(f, s, meta, n_steps))
    out = jax.block_until_ready(fwd(feats, slabs))
    assert out.shape == (n_instances, batch, feature_dim), out.shape

    # Single-instance (module-equivalent) path.
    out0 = jax.block_until_ready(ggnn_forward(feats[0], packed[0][0], meta, n_steps))
    assert out0.shape == (batch, feature_dim), out0.shape

    # Validate every instance against the f32 reference. Tolerance accounts for the
    # bf16 MXU operands (per perf review); 0.02-scale weights keep errors tiny.
    for i, (A, p) in enumerate(insts):
        ref = ggnn_reference(feats[i], A, p, n_steps)
        assert jnp.allclose(out[i], ref, rtol=2e-2, atol=2e-3), \
            f"instance {i}: max abs err = {jnp.max(jnp.abs(out[i] - ref))}"
    ref0 = ggnn_reference(feats[0], insts[0][0], insts[0][1], n_steps)
    assert jnp.allclose(out0, ref0, rtol=2e-2, atol=2e-3), \
        f"single-instance max abs err = {jnp.max(jnp.abs(out0 - ref0))}"

    print("KERNEL_OK")
</pallas_src>

<mosaic_0001>
module attributes {stable_mosaic.version = 11 : i64} {
  func.func @_ggnn_kernel(%arg0: i32, %arg1: memref<1x1112x128xf32, #tpu.memory_space<vmem>>, %arg2: memref<1x128x128xf32, #tpu.memory_space<vmem>>, %arg3: memref<1x24x128xf32, #tpu.memory_space<vmem>>) attributes {dimension_semantics = [#tpu.dimension_semantics<parallel>], iteration_bounds = array<i64: 3>, scalar_prefetch = 0 : i64, scratch_operands = 0 : i64, tpu.core_type = #tpu.core_type<tc>, window_params = [{transform_indices = @transform_0, window_bounds = array<i64: 1, 1112, 128>}, {transform_indices = @transform_1, window_bounds = array<i64: 1, 128, 128>}, {transform_indices = @transform_2, window_bounds = array<i64: 1, 24, 128>}]} {
    %c0 = arith.constant 0 : index
    %c0_0 = arith.constant 0 : index
    %c0_1 = arith.constant 0 : index
    %0 = vector.load %arg1[%c0, %c0_0, %c0_1] : memref<1x1112x128xf32, #tpu.memory_space<vmem>>, vector<1x24x24xf32>
    %1 = vector.shape_cast %0 : vector<1x24x24xf32> to vector<24x24xf32>
    %2 = arith.truncf %1 : vector<24x24xf32> to vector<24x24xbf16>
    %c0_2 = arith.constant 0 : index
    %c24 = arith.constant 24 : index
    %c0_3 = arith.constant 0 : index
    %3 = vector.load %arg1[%c0_2, %c24, %c0_3] : memref<1x1112x128xf32, #tpu.memory_space<vmem>>, vector<1x24x128xf32>
    %4 = vector.shape_cast %3 : vector<1x24x128xf32> to vector<24x128xf32>
    %5 = arith.truncf %4 : vector<24x128xf32> to vector<24x128xbf16>
    %c0_4 = arith.constant 0 : index
    %c48 = arith.constant 48 : index
    %c0_5 = arith.constant 0 : index
    %6 = vector.load %arg1[%c0_4, %c48, %c0_5] : memref<1x1112x128xf32, #tpu.memory_space<vmem>>, vector<1x128x128xf32>
    %7 = vector.shape_cast %6 : vector<1x128x128xf32> to vector<128x128xf32>
    %8 = arith.truncf %7 : vector<128x128xf32> to vector<128x128xbf16>
    %c0_6 = arith.constant 0 : index
    %c184 = arith.constant 184 : index
    %c0_7 = arith.constant 0 : index
    %9 = vector.load %arg1[%c0_6, %c184, %c0_7] : memref<1x1112x128xf32, #tpu.memory_space<vmem>>, vector<1x128x128xf32>
    %10 = vector.shape_cast %9 : vector<1x128x128xf32> to vector<128x128xf32>
    %11 = arith.truncf %10 : vector<128x128xf32> to vector<128x128xbf16>
    %c0_8 = arith.constant 0 : index
    %c312 = arith.constant 312 : index
    %c0_9 = arith.constant 0 : index
    %12 = vector.load %arg1[%c0_8, %c312, %c0_9] : memref<1x1112x128xf32, #tpu.memory_space<vmem>>, vector<1x128x128xf32>
    %13 = vector.shape_cast %12 : vector<1x128x128xf32> to vector<128x128xf32>
    %14 = arith.truncf %13 : vector<128x128xf32> to vector<128x128xbf16>
    %c0_10 = arith.constant 0 : index
    %c448 = arith.constant 448 : index
    %c0_11 = arith.constant 0 : index
    %15 = vector.load %arg1[%c0_10, %c448, %c0_11] : memref<1x1112x128xf32, #tpu.memory_space<vmem>>, vector<1x128x128xf32>
    %16 = vector.shape_cast %15 : vector<1x128x128xf32> to vector<128x128xf32>
    %17 = arith.truncf %16 : vector<128x128xf32> to vector<128x128xbf16>
    %c0_12 = arith.constant 0 : index
    %c576 = arith.constant 576 : index
    %c0_13 = arith.constant 0 : index
    %18 = vector.load %arg1[%c0_12, %c576, %c0_13] : memref<1x1112x128xf32, #tpu.memory_space<vmem>>, vector<1x128x128xf32>
    %19 = vector.shape_cast %18 : vector<1x128x128xf32> to vector<128x128xf32>
    %20 = arith.truncf %19 : vector<128x128xf32> to vector<128x128xbf16>
    %c0_14 = arith.constant 0 : index
    %c712 = arith.constant 712 : index
    %c0_15 = arith.constant 0 : index
    %21 = vector.load %arg1[%c0_14, %c712, %c0_15] : memref<1x1112x128xf32, #tpu.memory_space<vmem>>, vector<1x128x128xf32>
    %22 = vector.shape_cast %21 : vector<1x128x128xf32> to vector<128x128xf32>
    %23 = arith.truncf %22 : vector<128x128xf32> to vector<128x128xbf16>
    %c0_16 = arith.constant 0 : index
    %c840 = arith.constant 840 : index
    %c0_17 = arith.constant 0 : index
    %24 = vector.load %arg1[%c0_16, %c840, %c0_17] : memref<1x1112x128xf32, #tpu.memory_space<vmem>>, vector<1x128x128xf32>
    %25 = vector.shape_cast %24 : vector<1x128x128xf32> to vector<128x128xf32>
    %26 = arith.truncf %25 : vector<128x128xf32> to vector<128x128xbf16>
    %c0_18 = arith.constant 0 : index
    %c976 = arith.constant 976 : index
    %c0_19 = arith.constant 0 : index
    %27 = vector.load %arg1[%c0_18, %c976, %c0_19] : memref<1x1112x128xf32, #tpu.memory_space<vmem>>, vector<1x128x128xf32>
    %28 = vector.shape_cast %27 : vector<1x128x128xf32> to vector<128x128xf32>
    %29 = arith.truncf %28 : vector<128x128xf32> to vector<128x128xbf16>
    %c0_20 = arith.constant 0 : index
    %c0_21 = arith.constant 0 : index
    %c0_22 = arith.constant 0 : index
    %30 = vector.load %arg2[%c0_20, %c0_21, %c0_22] : memref<1x128x128xf32, #tpu.memory_space<vmem>>, vector<1x128x128xf32>
    %31 = vector.shape_cast %30 : vector<1x128x128xf32> to vector<128x128xf32>
    %32 = arith.truncf %31 : vector<128x128xf32> to vector<128x128xbf16>
    %c0_23 = arith.constant 0 : index
    %c176 = arith.constant 176 : index
    %c0_24 = arith.constant 0 : index
    %33 = vector.load %arg1[%c0_23, %c176, %c0_24] : memref<1x1112x128xf32, #tpu.memory_space<vmem>>, vector<1x1x128xf32>
    %34 = vector.shape_cast %33 : vector<1x1x128xf32> to vector<1x128xf32>
    %35 = vector.shape_cast %34 : vector<1x128xf32> to vector<1x128xf32>
    %36 = vector.broadcast %35 : vector<1x128xf32> to vector<24x128xf32>
    %c0_25 = arith.constant 0 : index
    %c440 = arith.constant 440 : index
    %c0_26 = arith.constant 0 : index
    %37 = vector.load %arg1[%c0_25, %c440, %c0_26] : memref<1x1112x128xf32, #tpu.memory_space<vmem>>, vector<1x1x128xf32>
    %38 = vector.shape_cast %37 : vector<1x1x128xf32> to vector<1x128xf32>
    %39 = vector.shape_cast %38 : vector<1x128xf32> to vector<1x128xf32>
    %40 = vector.broadcast %39 : vector<1x128xf32> to vector<24x128xf32>
    %c0_27 = arith.constant 0 : index
    %c704 = arith.constant 704 : index
    %c0_28 = arith.constant 0 : index
    %41 = vector.load %arg1[%c0_27, %c704, %c0_28] : memref<1x1112x128xf32, #tpu.memory_space<vmem>>, vector<1x1x128xf32>
    %42 = vector.shape_cast %41 : vector<1x1x128xf32> to vector<1x128xf32>
    %43 = vector.shape_cast %42 : vector<1x128xf32> to vector<1x128xf32>
    %44 = vector.broadcast %43 : vector<1x128xf32> to vector<24x128xf32>
    %c0_29 = arith.constant 0 : index
    %c968 = arith.constant 968 : index
    %c0_30 = arith.constant 0 : index
    %45 = vector.load %arg1[%c0_29, %c968, %c0_30] : memref<1x1112x128xf32, #tpu.memory_space<vmem>>, vector<1x1x128xf32>
    %46 = vector.shape_cast %45 : vector<1x1x128xf32> to vector<1x128xf32>
    %47 = vector.shape_cast %46 : vector<1x128xf32> to vector<1x128xf32>
    %48 = vector.broadcast %47 : vector<1x128xf32> to vector<24x128xf32>
    %c0_31 = arith.constant 0 : index
    %c1104 = arith.constant 1104 : index
    %c0_32 = arith.constant 0 : index
    %49 = vector.load %arg1[%c0_31, %c1104, %c0_32] : memref<1x1112x128xf32, #tpu.memory_space<vmem>>, vector<1x1x128xf32>
    %50 = vector.shape_cast %49 : vector<1x1x128xf32> to vector<1x128xf32>
    %51 = vector.shape_cast %50 : vector<1x128xf32> to vector<1x128xf32>
    %52 = vector.broadcast %51 : vector<1x128xf32> to vector<24x128xf32>
    %cst = arith.constant dense<0.000000e+00> : vector<24x128xf32>
    %53 = tpu.matmul %5, %8, %cst {dimension_numbers = #tpu.dot_dimension_numbers<[1], [0], [0], [1], [0, 0, 1, 1], [], []>} : vector<24x128xbf16>, vector<128x128xbf16>, vector<24x128xf32> -> vector<24x128xf32>
    %54 = arith.addf %53, %36 : vector<24x128xf32>
    %55 = arith.truncf %54 : vector<24x128xf32> to vector<24x128xbf16>
    %cst_33 = arith.constant dense<0.000000e+00> : vector<24x128xf32>
    %56 = tpu.matmul %2, %55, %cst_33 {dimension_numbers = #tpu.dot_dimension_numbers<[1], [0], [0], [1], [0, 0, 1, 1], [], []>} : vector<24x24xbf16>, vector<24x128xbf16>, vector<24x128xf32> -> vector<24x128xf32>
    %57 = arith.truncf %56 : vector<24x128xf32> to vector<24x128xbf16>
    %cst_34 = arith.constant dense<0.000000e+00> : vector<24x128xf32>
    %58 = tpu.matmul %57, %11, %cst_34 {dimension_numbers = #tpu.dot_dimension_numbers<[1], [0], [0], [1], [0, 0, 1, 1], [], []>} : vector<24x128xbf16>, vector<128x128xbf16>, vector<24x128xf32> -> vector<24x128xf32>
    %cst_35 = arith.constant dense<0.000000e+00> : vector<24x128xf32>
    %59 = tpu.matmul %55, %14, %cst_35 {dimension_numbers = #tpu.dot_dimension_numbers<[1], [0], [0], [1], [0, 0, 1, 1], [], []>} : vector<24x128xbf16>, vector<128x128xbf16>, vector<24x128xf32> -> vector<24x128xf32>
    %60 = arith.addf %58, %59 : vector<24x128xf32>
    %61 = arith.addf %60, %40 : vector<24x128xf32>
    %62 = arith.negf %61 : vector<24x128xf32>
    %63 = math.exp %62 : vector<24x128xf32>
    %cst_36 = arith.constant 1.000000e+00 : f32
    %64 = vector.broadcast %cst_36 : f32 to vector<24x128xf32>
    %65 = arith.addf %64, %63 : vector<24x128xf32>
    %66 = arith.divf %64, %65 : vector<24x128xf32>
    %cst_37 = arith.constant dense<0.000000e+00> : vector<24x128xf32>
    %67 = tpu.matmul %57, %17, %cst_37 {dimension_numbers = #tpu.dot_dimension_numbers<[1], [0], [0], [1], [0, 0, 1, 1], [], []>} : vector<24x128xbf16>, vector<128x128xbf16>, vector<24x128xf32> -> vector<24x128xf32>
    %cst_38 = arith.constant dense<0.000000e+00> : vector<24x128xf32>
    %68 = tpu.matmul %55, %20, %cst_38 {dimension_numbers = #tpu.dot_dimension_numbers<[1], [0], [0], [1], [0, 0, 1, 1], [], []>} : vector<24x128xbf16>, vector<128x128xbf16>, vector<24x128xf32> -> vector<24x128xf32>
    %69 = arith.addf %67, %68 : vector<24x128xf32>
    %70 = arith.addf %69, %44 : vector<24x128xf32>
    %71 = arith.negf %70 : vector<24x128xf32>
    %72 = math.exp %71 : vector<24x128xf32>
    %cst_39 = arith.constant 1.000000e+00 : f32
    %73 = vector.broadcast %cst_39 : f32 to vector<24x128xf32>
    %74 = arith.addf %73, %72 : vector<24x128xf32>
    %75 = arith.divf %73, %74 : vector<24x128xf32>
    %cst_40 = arith.constant dense<0.000000e+00> : vector<24x128xf32>
    %76 = tpu.matmul %57, %23, %cst_40 {dimension_numbers = #tpu.dot_dimension_numbers<[1], [0], [0], [1], [0, 0, 1, 1], [], []>} : vector<24x128xbf16>, vector<128x128xbf16>, vector<24x128xf32> -> vector<24x128xf32>
    %77 = arith.mulf %66, %54 : vector<24x128xf32>
    %78 = arith.truncf %77 : vector<24x128xf32> to vector<24x128xbf16>
    %cst_41 = arith.constant dense<0.000000e+00> : vector<24x128xf32>
    %79 = tpu.matmul %78, %26, %cst_41 {dimension_numbers = #tpu.dot_dimension_numbers<[1], [0], [0], [1], [0, 0, 1, 1], [], []>} : vector<24x128xbf16>, vector<128x128xbf16>, vector<24x128xf32> -> vector<24x128xf32>
    %80 = arith.addf %76, %79 : vector<24x128xf32>
    %81 = arith.addf %80, %48 : vector<24x128xf32>
    %82 = math.tanh %81 : vector<24x128xf32>
    %cst_42 = arith.constant 1.000000e+00 : f32
    %83 = vector.broadcast %cst_42 : f32 to vector<24x128xf32>
    %84 = arith.subf %83, %75 : vector<24x128xf32>
    %85 = arith.mulf %84, %54 : vector<24x128xf32>
    %86 = arith.mulf %75, %82 : vector<24x128xf32>
    %87 = arith.addf %85, %86 : vector<24x128xf32>
    %88 = arith.truncf %87 : vector<24x128xf32> to vector<24x128xbf16>
    %cst_43 = arith.constant dense<0.000000e+00> : vector<24x128xf32>
    %89 = tpu.matmul %2, %88, %cst_43 {dimension_numbers = #tpu.dot_dimension_numbers<[1], [0], [0], [1], [0, 0, 1, 1], [], []>} : vector<24x24xbf16>, vector<24x128xbf16>, vector<24x128xf32> -> vector<24x128xf32>
    %90 = arith.truncf %89 : vector<24x128xf32> to vector<24x128xbf16>
    %cst_44 = arith.constant dense<0.000000e+00> : vector<24x128xf32>
    %91 = tpu.matmul %90, %11, %cst_44 {dimension_numbers = #tpu.dot_dimension_numbers<[1], [0], [0], [1], [0, 0, 1, 1], [], []>} : vector<24x128xbf16>, vector<128x128xbf16>, vector<24x128xf32> -> vector<24x128xf32>
    %cst_45 = arith.constant dense<0.000000e+00> : vector<24x128xf32>
    %92 = tpu.matmul %88, %14, %cst_45 {dimension_numbers = #tpu.dot_dimension_numbers<[1], [0], [0], [1], [0, 0, 1, 1], [], []>} : vector<24x128xbf16>, vector<128x128xbf16>, vector<24x128xf32> -> vector<24x128xf32>
    %93 = arith.addf %91, %92 : vector<24x128xf32>
    %94 = arith.addf %93, %40 : vector<24x128xf32>
    %95 = arith.negf %94 : vector<24x128xf32>
    %96 = math.exp %95 : vector<24x128xf32>
    %cst_46 = arith.constant 1.000000e+00 : f32
    %97 = vector.broadcast %cst_46 : f32 to vector<24x128xf32>
    %98 = arith.addf %97, %96 : vector<24x128xf32>
    %99 = arith.divf %97, %98 : vector<24x128xf32>
    %cst_47 = arith.constant dense<0.000000e+00> : vector<24x128xf32>
    %100 = tpu.matmul %90, %17, %cst_47 {dimension_numbers = #tpu.dot_dimension_numbers<[1], [0], [0], [1], [0, 0, 1, 1], [], []>} : vector<24x128xbf16>, vector<128x128xbf16>, vector<24x128xf32> -> vector<24x128xf32>
    %cst_48 = arith.constant dense<0.000000e+00> : vector<24x128xf32>
    %101 = tpu.matmul %88, %20, %cst_48 {dimension_numbers = #tpu.dot_dimension_numbers<[1], [0], [0], [1], [0, 0, 1, 1], [], []>} : vector<24x128xbf16>, vector<128x128xbf16>, vector<24x128xf32> -> vector<24x128xf32>
    %102 = arith.addf %100, %101 : vector<24x128xf32>
    %103 = arith.addf %102, %44 : vector<24x128xf32>
    %104 = arith.negf %103 : vector<24x128xf32>
    %105 = math.exp %104 : vector<24x128xf32>
    %cst_49 = arith.constant 1.000000e+00 : f32
    %106 = vector.broadcast %cst_49 : f32 to vector<24x128xf32>
    %107 = arith.addf %106, %105 : vector<24x128xf32>
    %108 = arith.divf %106, %107 : vector<24x128xf32>
    %cst_50 = arith.constant dense<0.000000e+00> : vector<24x128xf32>
    %109 = tpu.matmul %90, %23, %cst_50 {dimension_numbers = #tpu.dot_dimension_numbers<[1], [0], [0], [1], [0, 0, 1, 1], [], []>} : vector<24x128xbf16>, vector<128x128xbf16>, vector<24x128xf32> -> vector<24x128xf32>
    %110 = arith.mulf %99, %87 : vector<24x128xf32>
    %111 = arith.truncf %110 : vector<24x128xf32> to vector<24x128xbf16>
    %cst_51 = arith.constant dense<0.000000e+00> : vector<24x128xf32>
    %112 = tpu.matmul %111, %26, %cst_51 {dimension_numbers = #tpu.dot_dimension_numbers<[1], [0], [0], [1], [0, 0, 1, 1], [], []>} : vector<24x128xbf16>, vector<128x128xbf16>, vector<24x128xf32> -> vector<24x128xf32>
    %113 = arith.addf %109, %112 : vector<24x128xf32>
    %114 = arith.addf %113, %48 : vector<24x128xf32>
    %115 = math.tanh %114 : vector<24x128xf32>
    %cst_52 = arith.constant 1.000000e+00 : f32
    %116 = vector.broadcast %cst_52 : f32 to vector<24x128xf32>
    %117 = arith.subf %116, %108 : vector<24x128xf32>
    %118 = arith.mulf %117, %87 : vector<24x128xf32>
    %119 = arith.mulf %108, %115 : vector<24x128xf32>
    %120 = arith.addf %118, %119 : vector<24x128xf32>
    %121 = arith.truncf %120 : vector<24x128xf32> to vector<24x128xbf16>
    %cst_53 = arith.constant dense<0.000000e+00> : vector<24x128xf32>
    %122 = tpu.matmul %2, %121, %cst_53 {dimension_numbers = #tpu.dot_dimension_numbers<[1], [0], [0], [1], [0, 0, 1, 1], [], []>} : vector<24x24xbf16>, vector<24x128xbf16>, vector<24x128xf32> -> vector<24x128xf32>
    %123 = arith.truncf %122 : vector<24x128xf32> to vector<24x128xbf16>
    %cst_54 = arith.constant dense<0.000000e+00> : vector<24x128xf32>
    %124 = tpu.matmul %123, %11, %cst_54 {dimension_numbers = #tpu.dot_dimension_numbers<[1], [0], [0], [1], [0, 0, 1, 1], [], []>} : vector<24x128xbf16>, vector<128x128xbf16>, vector<24x128xf32> -> vector<24x128xf32>
    %cst_55 = arith.constant dense<0.000000e+00> : vector<24x128xf32>
    %125 = tpu.matmul %121, %14, %cst_55 {dimension_numbers = #tpu.dot_dimension_numbers<[1], [0], [0], [1], [0, 0, 1, 1], [], []>} : vector<24x128xbf16>, vector<128x128xbf16>, vector<24x128xf32> -> vector<24x128xf32>
    %126 = arith.addf %124, %125 : vector<24x128xf32>
    %127 = arith.addf %126, %40 : vector<24x128xf32>
    %128 = arith.negf %127 : vector<24x128xf32>
    %129 = math.exp %128 : vector<24x128xf32>
    %cst_56 = arith.constant 1.000000e+00 : f32
    %130 = vector.broadcast %cst_56 : f32 to vector<24x128xf32>
    %131 = arith.addf %130, %129 : vector<24x128xf32>
    %132 = arith.divf %130, %131 : vector<24x128xf32>
    %cst_57 = arith.constant dense<0.000000e+00> : vector<24x128xf32>
    %133 = tpu.matmul %123, %17, %cst_57 {dimension_numbers = #tpu.dot_dimension_numbers<[1], [0], [0], [1], [0, 0, 1, 1], [], []>} : vector<24x128xbf16>, vector<128x128xbf16>, vector<24x128xf32> -> vector<24x128xf32>
    %cst_58 = arith.constant dense<0.000000e+00> : vector<24x128xf32>
    %134 = tpu.matmul %121, %20, %cst_58 {dimension_numbers = #tpu.dot_dimension_numbers<[1], [0], [0], [1], [0, 0, 1, 1], [], []>} : vector<24x128xbf16>, vector<128x128xbf16>, vector<24x128xf32> -> vector<24x128xf32>
    %135 = arith.addf %133, %134 : vector<24x128xf32>
    %136 = arith.addf %135, %44 : vector<24x128xf32>
    %137 = arith.negf %136 : vector<24x128xf32>
    %138 = math.exp %137 : vector<24x128xf32>
    %cst_59 = arith.constant 1.000000e+00 : f32
    %139 = vector.broadcast %cst_59 : f32 to vector<24x128xf32>
    %140 = arith.addf %139, %138 : vector<24x128xf32>
    %141 = arith.divf %139, %140 : vector<24x128xf32>
    %cst_60 = arith.constant dense<0.000000e+00> : vector<24x128xf32>
    %142 = tpu.matmul %123, %23, %cst_60 {dimension_numbers = #tpu.dot_dimension_numbers<[1], [0], [0], [1], [0, 0, 1, 1], [], []>} : vector<24x128xbf16>, vector<128x128xbf16>, vector<24x128xf32> -> vector<24x128xf32>
    %143 = arith.mulf %132, %120 : vector<24x128xf32>
    %144 = arith.truncf %143 : vector<24x128xf32> to vector<24x128xbf16>
    %cst_61 = arith.constant dense<0.000000e+00> : vector<24x128xf32>
    %145 = tpu.matmul %144, %26, %cst_61 {dimension_numbers = #tpu.dot_dimension_numbers<[1], [0], [0], [1], [0, 0, 1, 1], [], []>} : vector<24x128xbf16>, vector<128x128xbf16>, vector<24x128xf32> -> vector<24x128xf32>
    %146 = arith.addf %142, %145 : vector<24x128xf32>
    %147 = arith.addf %146, %48 : vector<24x128xf32>
    %148 = math.tanh %147 : vector<24x128xf32>
    %cst_62 = arith.constant 1.000000e+00 : f32
    %149 = vector.broadcast %cst_62 : f32 to vector<24x128xf32>
    %150 = arith.subf %149, %141 : vector<24x128xf32>
    %151 = arith.mulf %150, %120 : vector<24x128xf32>
    %152 = arith.mulf %141, %148 : vector<24x128xf32>
    %153 = arith.addf %151, %152 : vector<24x128xf32>
    %154 = arith.truncf %153 : vector<24x128xf32> to vector<24x128xbf16>
    %cst_63 = arith.constant dense<0.000000e+00> : vector<24x128xf32>
    %155 = tpu.matmul %2, %154, %cst_63 {dimension_numbers = #tpu.dot_dimension_numbers<[1], [0], [0], [1], [0, 0, 1, 1], [], []>} : vector<24x24xbf16>, vector<24x128xbf16>, vector<24x128xf32> -> vector<24x128xf32>
    %156 = arith.truncf %155 : vector<24x128xf32> to vector<24x128xbf16>
    %cst_64 = arith.constant dense<0.000000e+00> : vector<24x128xf32>
    %157 = tpu.matmul %156, %11, %cst_64 {dimension_numbers = #tpu.dot_dimension_numbers<[1], [0], [0], [1], [0, 0, 1, 1], [], []>} : vector<24x128xbf16>, vector<128x128xbf16>, vector<24x128xf32> -> vector<24x128xf32>
    %cst_65 = arith.constant dense<0.000000e+00> : vector<24x128xf32>
    %158 = tpu.matmul %154, %14, %cst_65 {dimension_numbers = #tpu.dot_dimension_numbers<[1], [0], [0], [1], [0, 0, 1, 1], [], []>} : vector<24x128xbf16>, vector<128x128xbf16>, vector<24x128xf32> -> vector<24x128xf32>
    %159 = arith.addf %157, %158 : vector<24x128xf32>
    %160 = arith.addf %159, %40 : vector<24x128xf32>
    %161 = arith.negf %160 : vector<24x128xf32>
    %162 = math.exp %161 : vector<24x128xf32>
    %cst_66 = arith.constant 1.000000e+00 : f32
    %163 = vector.broadcast %cst_66 : f32 to vector<24x128xf32>
    %164 = arith.addf %163, %162 : vector<24x128xf32>
    %165 = arith.divf %163, %164 : vector<24x128xf32>
    %cst_67 = arith.constant dense<0.000000e+00> : vector<24x128xf32>
    %166 = tpu.matmul %156, %17, %cst_67 {dimension_numbers = #tpu.dot_dimension_numbers<[1], [0], [0], [1], [0, 0, 1, 1], [], []>} : vector<24x128xbf16>, vector<128x128xbf16>, vector<24x128xf32> -> vector<24x128xf32>
    %cst_68 = arith.constant dense<0.000000e+00> : vector<24x128xf32>
    %167 = tpu.matmul %154, %20, %cst_68 {dimension_numbers = #tpu.dot_dimension_numbers<[1], [0], [0], [1], [0, 0, 1, 1], [], []>} : vector<24x128xbf16>, vector<128x128xbf16>, vector<24x128xf32> -> vector<24x128xf32>
    %168 = arith.addf %166, %167 : vector<24x128xf32>
    %169 = arith.addf %168, %44 : vector<24x128xf32>
    %170 = arith.negf %169 : vector<24x128xf32>
    %171 = math.exp %170 : vector<24x128xf32>
    %cst_69 = arith.constant 1.000000e+00 : f32
    %172 = vector.broadcast %cst_69 : f32 to vector<24x128xf32>
    %173 = arith.addf %172, %171 : vector<24x128xf32>
    %174 = arith.divf %172, %173 : vector<24x128xf32>
    %cst_70 = arith.constant dense<0.000000e+00> : vector<24x128xf32>
    %175 = tpu.matmul %156, %23, %cst_70 {dimension_numbers = #tpu.dot_dimension_numbers<[1], [0], [0], [1], [0, 0, 1, 1], [], []>} : vector<24x128xbf16>, vector<128x128xbf16>, vector<24x128xf32> -> vector<24x128xf32>
    %176 = arith.mulf %165, %153 : vector<24x128xf32>
    %177 = arith.truncf %176 : vector<24x128xf32> to vector<24x128xbf16>
    %cst_71 = arith.constant dense<0.000000e+00> : vector<24x128xf32>
    %178 = tpu.matmul %177, %26, %cst_71 {dimension_numbers = #tpu.dot_dimension_numbers<[1], [0], [0], [1], [0, 0, 1, 1], [], []>} : vector<24x128xbf16>, vector<128x128xbf16>, vector<24x128xf32> -> vector<24x128xf32>
    %179 = arith.addf %175, %178 : vector<24x128xf32>
    %180 = arith.addf %179, %48 : vector<24x128xf32>
    %181 = math.tanh %180 : vector<24x128xf32>
    %cst_72 = arith.constant 1.000000e+00 : f32
    %182 = vector.broadcast %cst_72 : f32 to vector<24x128xf32>
    %183 = arith.subf %182, %174 : vector<24x128xf32>
    %184 = arith.mulf %183, %153 : vector<24x128xf32>
    %185 = arith.mulf %174, %181 : vector<24x128xf32>
    %186 = arith.addf %184, %185 : vector<24x128xf32>
    %187 = arith.truncf %186 : vector<24x128xf32> to vector<24x128xbf16>
    %cst_73 = arith.constant dense<0.000000e+00> : vector<24x128xf32>
    %188 = tpu.matmul %2, %187, %cst_73 {dimension_numbers = #tpu.dot_dimension_numbers<[1], [0], [0], [1], [0, 0, 1, 1], [], []>} : vector<24x24xbf16>, vector<24x128xbf16>, vector<24x128xf32> -> vector<24x128xf32>
    %189 = arith.truncf %188 : vector<24x128xf32> to vector<24x128xbf16>
    %cst_74 = arith.constant dense<0.000000e+00> : vector<24x128xf32>
    %190 = tpu.matmul %189, %11, %cst_74 {dimension_numbers = #tpu.dot_dimension_numbers<[1], [0], [0], [1], [0, 0, 1, 1], [], []>} : vector<24x128xbf16>, vector<128x128xbf16>, vector<24x128xf32> -> vector<24x128xf32>
    %cst_75 = arith.constant dense<0.000000e+00> : vector<24x128xf32>
    %191 = tpu.matmul %187, %14, %cst_75 {dimension_numbers = #tpu.dot_dimension_numbers<[1], [0], [0], [1], [0, 0, 1, 1], [], []>} : vector<24x128xbf16>, vector<128x128xbf16>, vector<24x128xf32> -> vector<24x128xf32>
    %192 = arith.addf %190, %191 : vector<24x128xf32>
    %193 = arith.addf %192, %40 : vector<24x128xf32>
    %194 = arith.negf %193 : vector<24x128xf32>
    %195 = math.exp %194 : vector<24x128xf32>
    %cst_76 = arith.constant 1.000000e+00 : f32
    %196 = vector.broadcast %cst_76 : f32 to vector<24x128xf32>
    %197 = arith.addf %196, %195 : vector<24x128xf32>
    %198 = arith.divf %196, %197 : vector<24x128xf32>
    %cst_77 = arith.constant dense<0.000000e+00> : vector<24x128xf32>
    %199 = tpu.matmul %189, %17, %cst_77 {dimension_numbers = #tpu.dot_dimension_numbers<[1], [0], [0], [1], [0, 0, 1, 1], [], []>} : vector<24x128xbf16>, vector<128x128xbf16>, vector<24x128xf32> -> vector<24x128xf32>
    %cst_78 = arith.constant dense<0.000000e+00> : vector<24x128xf32>
    %200 = tpu.matmul %187, %20, %cst_78 {dimension_numbers = #tpu.dot_dimension_numbers<[1], [0], [0], [1], [0, 0, 1, 1], [], []>} : vector<24x128xbf16>, vector<128x128xbf16>, vector<24x128xf32> -> vector<24x128xf32>
    %201 = arith.addf %199, %200 : vector<24x128xf32>
    %202 = arith.addf %201, %44 : vector<24x128xf32>
    %203 = arith.negf %202 : vector<24x128xf32>
    %204 = math.exp %203 : vector<24x128xf32>
    %cst_79 = arith.constant 1.000000e+00 : f32
    %205 = vector.broadcast %cst_79 : f32 to vector<24x128xf32>
    %206 = arith.addf %205, %204 : vector<24x128xf32>
    %207 = arith.divf %205, %206 : vector<24x128xf32>
    %cst_80 = arith.constant dense<0.000000e+00> : vector<24x128xf32>
    %208 = tpu.matmul %189, %23, %cst_80 {dimension_numbers = #tpu.dot_dimension_numbers<[1], [0], [0], [1], [0, 0, 1, 1], [], []>} : vector<24x128xbf16>, vector<128x128xbf16>, vector<24x128xf32> -> vector<24x128xf32>
    %209 = arith.mulf %198, %186 : vector<24x128xf32>
    %210 = arith.truncf %209 : vector<24x128xf32> to vector<24x128xbf16>
    %cst_81 = arith.constant dense<0.000000e+00> : vector<24x128xf32>
    %211 = tpu.matmul %210, %26, %cst_81 {dimension_numbers = #tpu.dot_dimension_numbers<[1], [0], [0], [1], [0, 0, 1, 1], [], []>} : vector<24x128xbf16>, vector<128x128xbf16>, vector<24x128xf32> -> vector<24x128xf32>
    %212 = arith.addf %208, %211 : vector<24x128xf32>
    %213 = arith.addf %212, %48 : vector<24x128xf32>
    %214 = math.tanh %213 : vector<24x128xf32>
    %cst_82 = arith.constant 1.000000e+00 : f32
    %215 = vector.broadcast %cst_82 : f32 to vector<24x128xf32>
    %216 = arith.subf %215, %207 : vector<24x128xf32>
    %217 = arith.mulf %216, %186 : vector<24x128xf32>
    %218 = arith.mulf %207, %214 : vector<24x128xf32>
    %219 = arith.addf %217, %218 : vector<24x128xf32>
    %220 = arith.truncf %219 : vector<24x128xf32> to vector<24x128xbf16>
    %cst_83 = arith.constant dense<0.000000e+00> : vector<24x128xf32>
    %221 = tpu.matmul %220, %29, %cst_83 {dimension_numbers = #tpu.dot_dimension_numbers<[1], [0], [0], [1], [0, 0, 1, 1], [], []>} : vector<24x128xbf16>, vector<128x128xbf16>, vector<24x128xf32> -> vector<24x128xf32>
    %222 = arith.addf %221, %52 : vector<24x128xf32>
    %223 = arith.truncf %222 : vector<24x128xf32> to vector<24x128xbf16>
    %cst_84 = arith.constant dense<0.000000e+00> : vector<24x128xf32>
    %224 = tpu.matmul %223, %32, %cst_84 {dimension_numbers = #tpu.dot_dimension_numbers<[1], [0], [0], [1], [0, 0, 1, 1], [], []>} : vector<24x128xbf16>, vector<128x128xbf16>, vector<24x128xf32> -> vector<24x128xf32>
    %c0_85 = arith.constant 0 : index
    %c0_86 = arith.constant 0 : index
    %c0_87 = arith.constant 0 : index
    %225 = vector.load %arg3[%c0_85, %c0_86, %c0_87] : memref<1x24x128xf32, #tpu.memory_space<vmem>>, vector<1x24x128xf32>
    %226 = vector.shape_cast %225 : vector<1x24x128xf32> to vector<24x128xf32>
    %227 = vector.shape_cast %224 : vector<24x128xf32> to vector<1x24x128xf32>
    tpu.vector_store %arg3[%c0_85, %c0_86, %c0_87], %227 {strides = array<i32>} : memref<1x24x128xf32, #tpu.memory_space<vmem>>, vector<1x24x128xf32>,
    return
  }
  func.func @transform_0(%arg0: i32) -> (i32, i32, i32) {
    %c0_i32 = arith.constant 0 : i32
    %c0_i32_0 = arith.constant 0 : i32
    %c0_i32_1 = arith.constant 0 : i32
    return %arg0, %c0_i32, %c0_i32_0 : i32, i32, i32
  }
  func.func @transform_1(%arg0: i32) -> (i32, i32, i32) {
    %c0_i32 = arith.constant 0 : i32
    %c0_i32_0 = arith.constant 0 : i32
    %c0_i32_1 = arith.constant 0 : i32
    return %arg0, %c0_i32, %c0_i32_0 : i32, i32, i32
  }
  func.func @transform_2(%arg0: i32) -> (i32, i32, i32) {
    %c0_i32 = arith.constant 0 : i32
    %c0_i32_0 = arith.constant 0 : i32
    %c0_i32_1 = arith.constant 0 : i32
    return %arg0, %c0_i32, %c0_i32_0 : i32, i32, i32
  }
}

</mosaic_0001>

<llo_original>
// kernel: _lambda_.1
$region0: #{_lambda_.1}
  #allocation0 [shape = 'u32[]', space=smem, size = 0x4, offset = 0x4, fixed_abs, tag = 'smem constant byte address 0x4 - core index']
  #allocation1 [shape = 'u32[144,128]{1,0:T(1,128)}', space=vmem, size = 0x12000, scoped, tag = 'internal scratch']
  %s0 = inlined_call_operand.hbm [shape: f32[3,1112,128], index: 0, kind: input, shape index: {}]
  %s1 = inlined_call_operand.vmem [shape: f32[3,128,128], index: 1, kind: input, shape index: {}]
  %s2 = inlined_call_operand.vmem [shape: f32[3,24,128], index: 2, kind: output, shape index: {}]
  %s3 = sld [smem:[#allocation0]]
  $region45: #{_lambda_.1} parent=0
    _
  %s5 = ssub.s32 1, %s3
  %s6 = scalar_select 0, %s5, %s3
  $region1: #{_lambda_.1} parent=0
    #allocation2 [shape = 'u8[1138688]{0}', space=vmem, size = 0x116000, scoped, tag = 'input window, operand 0']
    #allocation3 [shape = 's32[2]{0}', space=sflag, size = 0x8, scoped, tag = 'scoped memory for _lambda_.1']
    %7 = vsyncpa [#allocation3], 0
    %s8 = scalar_lea.sflag [#allocation3], 1
    %9 = vsyncpa %s8, 0
    loop: start=0, step=1, limit=5
    $region2: #{_lambda_.1} parent=1 // loop_pre_header
      _
    $region3: #{_lambda_.1} parent=1 // loop_header
      %s11 = sphi 0, %s15
      %p12 = scmp.ge.s32.totalorder %s11, 5
      %s21 = sphi 0, %s23
      %s24 = sphi 0, %s21
      %s25 = sphi 0, %s24
      %s41 = sphi 0, %s25
      %s47 = sphi 0, %s49
      %s50 = sphi 0, %s47
      %s51 = sphi 0, %s50
      %s67 = sphi 0, %s51
      %s73 = sphi 0, %s75
      %s76 = sphi 0, %s73
      %s77 = sphi 0, %s76
      %s93 = sphi 0, %s77
    $region4: #{_lambda_.1} parent=1 // loop_header_branch
      %14 = sbr.rel (%p12) target = $region8
    $region5: #{_lambda_.1} parent=1 // loop_body
      %s16 = ssub.s32 %s11, 1
      %s17 = ssub.s32 %s11, 2
      %s18 = sadd.s32 %s11, 1
      %s19 = ssub.s32 %s11, %s18
      %p20 = scmp.eq.s32.totalorder %s19, 0
      %s22 = sadd.s32 %s21, 1
      %s23 = scalar_select %p20, %s21, %s22
      %p26 = pneg %p20
      %p27 = scmp.eq.s32.totalorder %s11, 2
      %p28 = por %p26, %p27
      %p29 = scmp.ne.s32.totalorder %s21, %s24
      %p30 = scmp.eq.s32.totalorder %s11, 0
      %p31 = por %p29, %p30
      %p32 = scmp.ne.s32.totalorder %s21, %s24
      %p33 = scmp.eq.s32.totalorder %s16, 2
      %p34 = por %p32, %p33
      %p35 = scmp.ne.s32.totalorder %s24, %s25
      %p36 = scmp.eq.s32.totalorder %s16, 0
      %p37 = por %p35, %p36
      %p38 = scmp.ne.s32.totalorder %s24, %s25
      %p39 = scmp.eq.s32.totalorder %s17, 2
      %p40 = por %p38, %p39
      %p42 = scmp.ne.s32.totalorder %s25, %s41
      %p43 = scmp.eq.s32.totalorder %s17, 0
      %p44 = por %p42, %p43
      %s45 = ssub.s32 %s11, %s18
      %p46 = scmp.eq.s32.totalorder %s45, 0
      %s48 = sadd.s32 %s47, 1
      %s49 = scalar_select %p46, %s47, %s48
      %p52 = pneg %p46
      %p53 = scmp.eq.s32.totalorder %s11, 2
      %p54 = por %p52, %p53
      %p55 = scmp.ne.s32.totalorder %s47, %s50
      %p56 = scmp.eq.s32.totalorder %s11, 0
      %p57 = por %p55, %p56
      %p58 = scmp.ne.s32.totalorder %s47, %s50
      %p59 = scmp.eq.s32.totalorder %s16, 2
      %p60 = por %p58, %p59
      %p61 = scmp.ne.s32.totalorder %s50, %s51
      %p62 = scmp.eq.s32.totalorder %s16, 0
      %p63 = por %p61, %p62
      %p64 = scmp.ne.s32.totalorder %s50, %s51
      %p65 = scmp.eq.s32.totalorder %s17, 2
      %p66 = por %p64, %p65
      %p68 = scmp.ne.s32.totalorder %s51, %s67
      %p69 = scmp.eq.s32.totalorder %s17, 0
      %p70 = por %p68, %p69
      %s71 = ssub.s32 %s11, %s18
      %p72 = scmp.eq.s32.totalorder %s71, 0
      %s74 = sadd.s32 %s73, 1
      %s75 = scalar_select %p72, %s73, %s74
      %p78 = pneg %p72
      %p79 = scmp.eq.s32.totalorder %s11, 2
      %p80 = por %p78, %p79
      %p81 = scmp.ne.s32.totalorder %s73, %s76
      %p82 = scmp.eq.s32.totalorder %s11, 0
      %p83 = por %p81, %p82
      %p84 = scmp.ne.s32.totalorder %s73, %s76
      %p85 = scmp.eq.s32.totalorder %s16, 2
      %p86 = por %p84, %p85
      %p87 = scmp.ne.s32.totalorder %s76, %s77
      %p88 = scmp.eq.s32.totalorder %s16, 0
      %p89 = por %p87, %p88
      %p90 = scmp.ne.s32.totalorder %s76, %s77
      %p91 = scmp.eq.s32.totalorder %s17, 2
      %p92 = por %p90, %p91
      %p94 = scmp.ne.s32.totalorder %s77, %s93
      %p95 = scmp.eq.s32.totalorder %s17, 0
      %p96 = por %p94, %p95
      %p97 = scmp.le.s32.totalorder 1, %s11
      %p98 = scmp.lt.s32.totalorder %s11, 4
      %p99 = pnand %p97, %p98
      %p100 = pneg %p99
      // Predicated region
      $region9: #{_lambda_.1} parent=5 // pred_check
        _
      $region10: #{_lambda_.1} parent=5 // pred_check_branch
        %102 = sbr.rel (%p99) target = $region12
      $region11: #{_lambda_.1} parent=5 // pred_region
        %s103 = ssub.s32 %s11, 1
      $region12: #{_lambda_.1} parent=5 // pred_fallthru
        _
      %p104 = scmp.lt.s32.totalorder %s11, 3
      // Predicated region
      $region13: #{_lambda_.1} parent=5 // pred_check
        %p105 = pneg %p104
      $region14: #{_lambda_.1} parent=5 // pred_check_branch
        %107 = sbr.rel (%p105) target = $region16
      $region15: #{_lambda_.1} parent=5 // pred_region
        // Predicated region
        $region17: #{_lambda_.1} parent=15 // pred_check
          %p108 = pneg %p31
        $region18: #{_lambda_.1} parent=15 // pred_check_branch
          %110 = sbr.rel (%p108) target = $region20
        $region19: #{_lambda_.1} parent=15 // pred_region
          %s111 = sand.u32 %s21, 1
          %s112 = scalar_lea.sflag [#allocation3], %s111
          %s113 = sand.u32 %s21, 1
          %s114 = smul.addr %s113, 1112
          %s115 = scalar_lea.vmem [#allocation2], %s114
          %s117 = ssub.s32 17792, 17792
          %118 = vsyncadd %s112, %s117
          %s119 = smul.addr %s11, 139
          %s120 = smul.addr %s119, 128
          %s121 = scalar_lea.hbm %s0, %s120
          %s122 = sshll.u32 %s115, 4
          %s123 = int_to_ptr.vmem [resolvable:$true] %s122
          %128 = dma.hbm_to_vmem [thread:$0]  %s121, 17792, %s123, %s112, 128, 128, 8
        $region20: #{_lambda_.1} parent=15 // pred_fallthru
          _
        // Predicated region
        $region21: #{_lambda_.1} parent=15 // pred_check
          %p129 = pneg %p57
        $region22: #{_lambda_.1} parent=15 // pred_check_branch
          %131 = sbr.rel (%p129) target = $region24
        $region23: #{_lambda_.1} parent=15 // pred_region
          %p132 = scmp.lt.s32.totalorder %s11, 2
          %s133 = scalar_select %p132, %s11, 2
          %s134 = smul.addr %s133, 16
          %s135 = smul.addr %s134, 8
          %s136 = scalar_lea.vmem %s1, %s135
        $region24: #{_lambda_.1} parent=15 // pred_fallthru
          _
      $region16: #{_lambda_.1} parent=5 // pred_fallthru
        _
      %p137 = scmp.le.s32.totalorder 1, %s11
      %p138 = scmp.lt.s32.totalorder %s11, 4
      %p139 = pnand %p137, %p138
      %p140 = pneg %p139
      // Predicated region
      $region25: #{_lambda_.1} parent=5 // pred_check
        _
      $region26: #{_lambda_.1} parent=5 // pred_check_branch
        %142 = sbr.rel (%p139) target = $region28
      $region27: #{_lambda_.1} parent=5 // pred_region
        %s143 = ssub.s32 %s11, 1
        %s144 = sand.u32 %s24, 1
        %s145 = scalar_lea.sflag [#allocation3], %s144
        %s146 = sand.u32 %s24, 1
        %s147 = smul.addr %s146, 1112
        %s148 = scalar_lea.vmem [#allocation2], %s147
        // Predicated region
        $region29: #{_lambda_.1} parent=27 // pred_check
          %p149 = pneg %p37
        $region30: #{_lambda_.1} parent=27 // pred_check_branch
          %151 = sbr.rel (%p149) target = $region32
        $region31: #{_lambda_.1} parent=27 // pred_region
          %152 = dma.done %s145, 17792
        $region32: #{_lambda_.1} parent=27 // pred_fallthru
          _
        %s153 = sand.u32 %s24, 1
        %s154 = scalar_lea.sflag [#allocation3], %s153
        %s155 = sand.u32 %s24, 1
        %s156 = smul.addr %s155, 1112
        %s157 = scalar_lea.vmem [#allocation2], %s156
        %p158 = pneg %p37
        %p159 = pneg %p34
        %p160 = scmp.lt.s32.totalorder %s16, 2
        %s161 = scalar_select %p160, %s16, 2
        %s162 = smul.addr %s161, 16
        %s163 = smul.addr %s162, 8
        %s164 = scalar_lea.vmem %s1, %s163
        %p165 = pneg %p63
        %p166 = pneg %p60
        %p167 = pneg %p89
        %p168 = pneg %p86
        %p169 = scmp.lt.s32.totalorder %s16, 2
        %s170 = scalar_select %p169, %s16, 2
        %s171 = smul.addr %s170, 3
        %s172 = smul.addr %s171, 8
        %s173 = scalar_lea.vmem %s2, %s172
        %p174 = scmp.lt.s32.totalorder %s16, 2
        %s175 = scalar_select %p174, %s16, 2
        %s176 = smul.addr %s175, 16
        %s177 = smul.addr %s176, 8
        %s178 = scalar_lea.vmem %s1, %s177
        %p179 = scmp.lt.s32.totalorder %s16, 2
        %s180 = scalar_select %p179, %s16, 2
        %s181 = smul.addr %s180, 3
        %s182 = smul.addr %s181, 8
        %s183 = scalar_lea.vmem %s2, %s182
        %v185 = vld [vmem:[%s148] sm:$0xff]
        %v186 = vld [vmem:[%s148 + $0x8] sm:$0xff]
        %v187 = vld [vmem:[%s148 + $0x10] sm:$0xff]
        %v188 = vpack.c.bf16 %v186, %v185
        %v189 = vpack.c.bf16 %v187, %v187
        %v190 = vld [vmem:[%s148 + $0x18] sm:$0xff]
        %v191 = vld [vmem:[%s148 + $0x20] sm:$0xff]
        %v192 = vld [vmem:[%s148 + $0x28] sm:$0xff]
        %v193 = vpack.c.bf16 %v191, %v190
        %v194 = vpack.c.bf16 %v192, %v192
        %v195 = vld [vmem:[%s148 + $0x30] sm:$0xff]
        %v196 = vld [vmem:[%s148 + $0x38] sm:$0xff]
        %v197 = vld [vmem:[%s148 + $0x40] sm:$0xff]
        %v198 = vld [vmem:[%s148 + $0x48] sm:$0xff]
        %v199 = vld [vmem:[%s148 + $0x50] sm:$0xff]
        %v200 = vld [vmem:[%s148 + $0x58] sm:$0xff]
        %v201 = vld [vmem:[%s148 + $0x60] sm:$0xff]
        %v202 = vld [vmem:[%s148 + $0x68] sm:$0xff]
        %v203 = vld [vmem:[%s148 + $0x70] sm:$0xff]
        %v204 = vld [vmem:[%s148 + $0x78] sm:$0xff]
        %v205 = vld [vmem:[%s148 + $0x80] sm:$0xff]
        %v206 = vld [vmem:[%s148 + $0x88] sm:$0xff]
        %v207 = vld [vmem:[%s148 + $0x90] sm:$0xff]
        %v208 = vld [vmem:[%s148 + $0x98] sm:$0xff]
        %v209 = vld [vmem:[%s148 + $0xa0] sm:$0xff]
        %v210 = vld [vmem:[%s148 + $0xa8] sm:$0xff]
        %v211 = vpack.c.bf16 %v196, %v195
        %v212 = vpack.c.bf16 %v198, %v197
        %v213 = vpack.c.bf16 %v200, %v199
        %v214 = vpack.c.bf16 %v202, %v201
        %v215 = vpack.c.bf16 %v204, %v203
        %v216 = vpack.c.bf16 %v206, %v205
        %v217 = vpack.c.bf16 %v208, %v207
        %v218 = vpack.c.bf16 %v210, %v209
        %v219 = vld [vmem:[%s148 + $0xb8] sm:$0xff]
        %v220 = vld [vmem:[%s148 + $0xc0] sm:$0xff]
        %v221 = vld [vmem:[%s148 + $0xc8] sm:$0xff]
        %v222 = vld [vmem:[%s148 + $0xd0] sm:$0xff]
        %v223 = vld [vmem:[%s148 + $0xd8] sm:$0xff]
        %v224 = vld [vmem:[%s148 + $0xe0] sm:$0xff]
        %v225 = vld [vmem:[%s148 + $0xe8] sm:$0xff]
        %v226 = vld [vmem:[%s148 + $0xf0] sm:$0xff]
        %v227 = vld [vmem:[%s148 + $0xf8] sm:$0xff]
        %v228 = vld [vmem:[%s148 + $0x100] sm:$0xff]
        %v229 = vld [vmem:[%s148 + $0x108] sm:$0xff]
        %v230 = vld [vmem:[%s148 + $0x110] sm:$0xff]
        %v231 = vld [vmem:[%s148 + $0x118] sm:$0xff]
        %v232 = vld [vmem:[%s148 + $0x120] sm:$0xff]
        %v233 = vld [vmem:[%s148 + $0x128] sm:$0xff]
        %v234 = vld [vmem:[%s148 + $0x130] sm:$0xff]
        %v235 = vpack.c.bf16 %v220, %v219
        %v236 = vpack.c.bf16 %v222, %v221
        %v237 = vpack.c.bf16 %v224, %v223
        %v238 = vpack.c.bf16 %v226, %v225
        %v239 = vpack.c.bf16 %v228, %v227
        %v240 = vpack.c.bf16 %v230, %v229
        %v241 = vpack.c.bf16 %v232, %v231
        %v242 = vpack.c.bf16 %v234, %v233
        %v243 = vld [vmem:[%s148 + $0x138] sm:$0xff]
        %v244 = vld [vmem:[%s148 + $0x140] sm:$0xff]
        %v245 = vld [vmem:[%s148 + $0x148] sm:$0xff]
        %v246 = vld [vmem:[%s148 + $0x150] sm:$0xff]
        %v247 = vld [vmem:[%s148 + $0x158] sm:$0xff]
        %v248 = vld [vmem:[%s148 + $0x160] sm:$0xff]
        %v249 = vld [vmem:[%s148 + $0x168] sm:$0xff]
        %v250 = vld [vmem:[%s148 + $0x170] sm:$0xff]
        %v251 = vld [vmem:[%s148 + $0x178] sm:$0xff]
        %v252 = vld [vmem:[%s148 + $0x180] sm:$0xff]
        %v253 = vld [vmem:[%s148 + $0x188] sm:$0xff]
        %v254 = vld [vmem:[%s148 + $0x190] sm:$0xff]
        %v255 = vld [vmem:[%s148 + $0x198] sm:$0xff]
        %v256 = vld [vmem:[%s148 + $0x1a0] sm:$0xff]
        %v257 = vld [vmem:[%s148 + $0x1a8] sm:$0xff]
        %v258 = vld [vmem:[%s148 + $0x1b0] sm:$0xff]
        %v259 = vpack.c.bf16 %v244, %v243
        %v260 = vpack.c.bf16 %v246, %v245
        %v261 = vpack.c.bf16 %v248, %v247
        %v262 = vpack.c.bf16 %v250, %v249
        %v263 = vpack.c.bf16 %v252, %v251
        %v264 = vpack.c.bf16 %v254, %v253
        %v265 = vpack.c.bf16 %v256, %v255
        %v266 = vpack.c.bf16 %v258, %v257
        %v267 = vld [vmem:[%s148 + $0x1c0] sm:$0xff]
        %v268 = vld [vmem:[%s148 + $0x1c8] sm:$0xff]
        %v269 = vld [vmem:[%s148 + $0x1d0] sm:$0xff]
        %v270 = vld [vmem:[%s148 + $0x1d8] sm:$0xff]
        %v271 = vld [vmem:[%s148 + $0x1e0] sm:$0xff]
        %v272 = vld [vmem:[%s148 + $0x1e8] sm:$0xff]
        %v273 = vld [vmem:[%s148 + $0x1f0] sm:$0xff]
        %v274 = vld [vmem:[%s148 + $0x1f8] sm:$0xff]
        %v275 = vld [vmem:[%s148 + $0x200] sm:$0xff]
        %v276 = vld [vmem:[%s148 + $0x208] sm:$0xff]
        %v277 = vld [vmem:[%s148 + $0x210] sm:$0xff]
        %v278 = vld [vmem:[%s148 + $0x218] sm:$0xff]
        %v279 = vld [vmem:[%s148 + $0x220] sm:$0xff]
        %v280 = vld [vmem:[%s148 + $0x228] sm:$0xff]
        %v281 = vld [vmem:[%s148 + $0x230] sm:$0xff]
        %v282 = vld [vmem:[%s148 + $0x238] sm:$0xff]
        %v283 = vpack.c.bf16 %v268, %v267
        %v284 = vpack.c.bf16 %v270, %v269
        %v285 = vpack.c.bf16 %v272, %v271
        %v286 = vpack.c.bf16 %v274, %v273
        %v287 = vpack.c.bf16 %v276, %v275
        %v288 = vpack.c.bf16 %v278, %v277
        %v289 = vpack.c.bf16 %v280, %v279
        %v290 = vpack.c.bf16 %v282, %v281
        %v291 = vld [vmem:[%s148 + $0x240] sm:$0xff]
        %v292 = vld [vmem:[%s148 + $0x248] sm:$0xff]
        %v293 = vld [vmem:[%s148 + $0x250] sm:$0xff]
        %v294 = vld [vmem:[%s148 + $0x258] sm:$0xff]
        %v295 = vld [vmem:[%s148 + $0x260] sm:$0xff]
        %v296 = vld [vmem:[%s148 + $0x268] sm:$0xff]
        %v297 = vld [vmem:[%s148 + $0x270] sm:$0xff]
        %v298 = vld [vmem:[%s148 + $0x278] sm:$0xff]
        %v299 = vld [vmem:[%s148 + $0x280] sm:$0xff]
        %v300 = vld [vmem:[%s148 + $0x288] sm:$0xff]
        %v301 = vld [vmem:[%s148 + $0x290] sm:$0xff]
        %v302 = vld [vmem:[%s148 + $0x298] sm:$0xff]
        %v303 = vld [vmem:[%s148 + $0x2a0] sm:$0xff]
        %v304 = vld [vmem:[%s148 + $0x2a8] sm:$0xff]
        %v305 = vld [vmem:[%s148 + $0x2b0] sm:$0xff]
        %v306 = vld [vmem:[%s148 + $0x2b8] sm:$0xff]
        %v307 = vpack.c.bf16 %v292, %v291
        %v308 = vpack.c.bf16 %v294, %v293
        %v309 = vpack.c.bf16 %v296, %v295
        %v310 = vpack.c.bf16 %v298, %v297
        %v311 = vpack.c.bf16 %v300, %v299
        %v312 = vpack.c.bf16 %v302, %v301
        %v313 = vpack.c.bf16 %v304, %v303
        %v314 = vpack.c.bf16 %v306, %v305
        %v315 = vld [vmem:[%s148 + $0x2c8] sm:$0xff]
        %v316 = vld [vmem:[%s148 + $0x2d0] sm:$0xff]
        %v317 = vld [vmem:[%s148 + $0x2d8] sm:$0xff]
        %v318 = vld [vmem:[%s148 + $0x2e0] sm:$0xff]
        %v319 = vld [vmem:[%s148 + $0x2e8] sm:$0xff]
        %v320 = vld [vmem:[%s148 + $0x2f0] sm:$0xff]
        %v321 = vld [vmem:[%s148 + $0x2f8] sm:$0xff]
        %v322 = vld [vmem:[%s148 + $0x300] sm:$0xff]
        %v323 = vld [vmem:[%s148 + $0x308] sm:$0xff]
        %v324 = vld [vmem:[%s148 + $0x310] sm:$0xff]
        %v325 = vld [vmem:[%s148 + $0x318] sm:$0xff]
        %v326 = vld [vmem:[%s148 + $0x320] sm:$0xff]
        %v327 = vld [vmem:[%s148 + $0x328] sm:$0xff]
        %v328 = vld [vmem:[%s148 + $0x330] sm:$0xff]
        %v329 = vld [vmem:[%s148 + $0x338] sm:$0xff]
        %v330 = vld [vmem:[%s148 + $0x340] sm:$0xff]
        %v331 = vpack.c.bf16 %v316, %v315
        %v332 = vpack.c.bf16 %v318, %v317
        %v333 = vpack.c.bf16 %v320, %v319
        %v334 = vpack.c.bf16 %v322, %v321
        %v335 = vpack.c.bf16 %v324, %v323
        %v336 = vpack.c.bf16 %v326, %v325
        %v337 = vpack.c.bf16 %v328, %v327
        %v338 = vpack.c.bf16 %v330, %v329
        %v339 = vld [vmem:[%s148 + $0x348] sm:$0xff]
        %v340 = vld [vmem:[%s148 + $0x350] sm:$0xff]
        %v341 = vld [vmem:[%s148 + $0x358] sm:$0xff]
        %v342 = vld [vmem:[%s148 + $0x360] sm:$0xff]
        %v343 = vld [vmem:[%s148 + $0x368] sm:$0xff]
        %v344 = vld [vmem:[%s148 + $0x370] sm:$0xff]
        %v345 = vld [vmem:[%s148 + $0x378] sm:$0xff]
        %v346 = vld [vmem:[%s148 + $0x380] sm:$0xff]
        %v347 = vld [vmem:[%s148 + $0x388] sm:$0xff]
        %v348 = vld [vmem:[%s148 + $0x390] sm:$0xff]
        %v349 = vld [vmem:[%s148 + $0x398] sm:$0xff]
        %v350 = vld [vmem:[%s148 + $0x3a0] sm:$0xff]
        %v351 = vld [vmem:[%s148 + $0x3a8] sm:$0xff]
        %v352 = vld [vmem:[%s148 + $0x3b0] sm:$0xff]
        %v353 = vld [vmem:[%s148 + $0x3b8] sm:$0xff]
        %v354 = vld [vmem:[%s148 + $0x3c0] sm:$0xff]
        %v355 = vpack.c.bf16 %v340, %v339
        %v356 = vpack.c.bf16 %v342, %v341
        %v357 = vpack.c.bf16 %v344, %v343
        %v358 = vpack.c.bf16 %v346, %v345
        %v359 = vpack.c.bf16 %v348, %v347
        %v360 = vpack.c.bf16 %v350, %v349
        %v361 = vpack.c.bf16 %v352, %v351
        %v362 = vpack.c.bf16 %v354, %v353
        %v363 = vld [vmem:[%s148 + $0x3d0] sm:$0xff]
        %v364 = vld [vmem:[%s148 + $0x3d8] sm:$0xff]
        %v365 = vld [vmem:[%s148 + $0x3e0] sm:$0xff]
        %v366 = vld [vmem:[%s148 + $0x3e8] sm:$0xff]
        %v367 = vld [vmem:[%s148 + $0x3f0] sm:$0xff]
        %v368 = vld [vmem:[%s148 + $0x3f8] sm:$0xff]
        %v369 = vld [vmem:[%s148 + $0x400] sm:$0xff]
        %v370 = vld [vmem:[%s148 + $0x408] sm:$0xff]
        %v371 = vld [vmem:[%s148 + $0x410] sm:$0xff]
        %v372 = vld [vmem:[%s148 + $0x418] sm:$0xff]
        %v373 = vld [vmem:[%s148 + $0x420] sm:$0xff]
        %v374 = vld [vmem:[%s148 + $0x428] sm:$0xff]
        %v375 = vld [vmem:[%s148 + $0x430] sm:$0xff]
        %v376 = vld [vmem:[%s148 + $0x438] sm:$0xff]
        %v377 = vld [vmem:[%s148 + $0x440] sm:$0xff]
        %v378 = vld [vmem:[%s148 + $0x448] sm:$0xff]
        %v379 = vpack.c.bf16 %v364, %v363
        %v380 = vpack.c.bf16 %v366, %v365
        %v381 = vpack.c.bf16 %v368, %v367
        %v382 = vpack.c.bf16 %v370, %v369
        %v383 = vpack.c.bf16 %v372, %v371
        %v384 = vpack.c.bf16 %v374, %v373
        %v385 = vpack.c.bf16 %v376, %v375
        %v386 = vpack.c.bf16 %v378, %v377
        %v387 = vld [vmem:[%s178] sm:$0xff]
        %v388 = vld [vmem:[%s178 + $0x8] sm:$0xff]
        %v389 = vld [vmem:[%s178 + $0x10] sm:$0xff]
        %v390 = vld [vmem:[%s178 + $0x18] sm:$0xff]
        %v391 = vld [vmem:[%s178 + $0x20] sm:$0xff]
        %v392 = vld [vmem:[%s178 + $0x28] sm:$0xff]
        %v393 = vld [vmem:[%s178 + $0x30] sm:$0xff]
        %v394 = vld [vmem:[%s178 + $0x38] sm:$0xff]
        %v395 = vld [vmem:[%s178 + $0x40] sm:$0xff]
        %v396 = vld [vmem:[%s178 + $0x48] sm:$0xff]
        %v397 = vld [vmem:[%s178 + $0x50] sm:$0xff]
        %v398 = vld [vmem:[%s178 + $0x58] sm:$0xff]
        %v399 = vld [vmem:[%s178 + $0x60] sm:$0xff]
        %v400 = vld [vmem:[%s178 + $0x68] sm:$0xff]
        %v401 = vld [vmem:[%s178 + $0x70] sm:$0xff]
        %v402 = vld [vmem:[%s178 + $0x78] sm:$0xff]
        %v403 = vpack.c.bf16 %v388, %v387
        %v404 = vpack.c.bf16 %v390, %v389
        %v405 = vpack.c.bf16 %v392, %v391
        %v406 = vpack.c.bf16 %v394, %v393
        %v407 = vpack.c.bf16 %v396, %v395
        %v408 = vpack.c.bf16 %v398, %v397
        %v409 = vpack.c.bf16 %v400, %v399
        %v410 = vpack.c.bf16 %v402, %v401
        %v411 = vld [vmem:[%s148 + $0xb0] sm:$0x1]
        %v412 = vlaneseq
        %v413 = vshrl.u32 %v412, 7
        %v414 = vsub.s32 0, %v413
        %v415 = vrot.slane %v411, %v414
        %v416 = vld [vmem:[%s148 + $0x1b8] sm:$0x1]
        %v417 = vlaneseq
        %v418 = vshrl.u32 %v417, 7
        %v419 = vsub.s32 0, %v418
        %v420 = vrot.slane %v416, %v419
        %v421 = vld [vmem:[%s148 + $0x2c0] sm:$0x1]
        %v422 = vlaneseq
        %v423 = vshrl.u32 %v422, 7
        %v424 = vsub.s32 0, %v423
        %v425 = vrot.slane %v421, %v424
        %v426 = vld [vmem:[%s148 + $0x3c8] sm:$0x1]
        %v427 = vlaneseq
        %v428 = vshrl.u32 %v427, 7
        %v429 = vsub.s32 0, %v428
        %v430 = vrot.slane %v426, %v429
        %v431 = vld [vmem:[%s148 + $0x450] sm:$0x1]
        %v432 = vlaneseq
        %v433 = vshrl.u32 %v432, 7
        %v434 = vsub.s32 0, %v433
        %v435 = vrot.slane %v431, %v434
        %436 = vmatprep.subr.bf16.mxu0 0
        %437 = vmatpush1.bf16.msra.mxu0 %v211
        %438 = vmatprep.subr.bf16.mxu0 0
        %439 = vmatpush1.bf16.msra.mxu0 %v212
        %440 = vmatprep.subr.bf16.mxu0 0
        %441 = vmatpush1.bf16.msra.mxu0 %v213
        %442 = vmatprep.subr.bf16.mxu0 0
        %443 = vmatpush1.bf16.msra.mxu0 %v214
        %444 = vmatprep.subr.bf16.mxu0 0
        %445 = vmatpush1.bf16.msra.mxu0 %v215
        %446 = vmatprep.subr.bf16.mxu0 0
        %447 = vmatpush1.bf16.msra.mxu0 %v216
        %448 = vmatprep.subr.bf16.mxu0 0
        %449 = vmatpush1.bf16.msra.mxu0 %v217
        %450 = vmatprep.subr.bf16.mxu0 0
        %451 = vmatpush1.bf16.msra.mxu0 %v218
        %452 = vmatprep.subr.bf16.mxu0 0
        %453 = vmatpush1.bf16.msra.mxu0 0
        %454 = vmatprep.subr.bf16.mxu0 0
        %455 = vmatpush1.bf16.msra.mxu0 0
        %456 = vmatprep.subr.bf16.mxu0 0
        %457 = vmatpush1.bf16.msra.mxu0 0
        %458 = vmatprep.subr.bf16.mxu0 0
        %459 = vmatpush1.bf16.msra.mxu0 0
        %460 = vmatprep.subr.bf16.mxu0 0
        %461 = vmatpush1.bf16.msra.mxu0 0
        %462 = vmatprep.subr.bf16.mxu0 0
        %463 = vmatpush1.bf16.msra.mxu0 0
        %464 = vmatprep.subr.bf16.mxu0 0
        %465 = vmatpush1.bf16.msra.mxu0 0
        %466 = vmatprep.subr.bf16.mxu0 0
        %467 = vmatpush1.bf16.msra.mxu0 0
        %468 = vmatprep.mubr.bf16.mxu0 0
        %469 = vmatmul.mubr.bf16.gmra.mrb[0].mxu0 %v193
        %v470 = vpop.f32.mrb[0].mxu0
        %v471 = vadd.f32 %v415, %v470
        %v472 = vpop.f32.mrb[0].mxu0
        %v473 = vpop.f32.mrb[0].mxu0
        %v474 = vadd.f32 %v415, %v473
        %v475 = vpop.f32.mrb[0].mxu0
        %476 = vmatprep.mubr.bf16.mxu0 0
        %477 = vmatmul.mubr.bf16.gmra.mrb[0].mxu0 %v194
        %v478 = vpop.f32.mrb[0].mxu0
        %v479 = vadd.f32 %v415, %v478
        %v480 = vpop.f32.mrb[0].mxu0
        %v481 = vpop.f32.mrb[0].mxu0
        %v482 = vpop.f32.mrb[0].mxu0
        %483 = vdwg.mxu0
        %v484 = vpack.c.bf16 %v474, %v471
        %v485 = vpack.c.bf16 %v479, %v479
        %vm486 = vcmask 195584
        %v488 = vsel %vm486, %v188, 0
        %v491 = vsel %vm486, %v189, 0
        %vm493 = vcmask 1043456
        %v495 = vsel %vm493, %v485, 0
        %497 = vmatprep.subr.bf16.mxu0 0
        %498 = vmatpush1.bf16.msra.mxu0 %v484
        %499 = vmatprep.subr.bf16.mxu0 0
        %500 = vmatpush1.bf16.msra.mxu0 %v495
        %501 = vmatprep.subr.bf16.mxu0 0
        %502 = vmatpush1.bf16.msra.mxu0 0
        %503 = vmatprep.subr.bf16.mxu0 0
        %504 = vmatpush1.bf16.msra.mxu0 0
        %505 = vmatprep.subr.bf16.mxu0 0
        %506 = vmatpush1.bf16.msra.mxu0 0
        %507 = vmatprep.subr.bf16.mxu0 0
        %508 = vmatpush1.bf16.msra.mxu0 0
        %509 = vmatprep.subr.bf16.mxu0 0
        %510 = vmatpush1.bf16.msra.mxu0 0
        %511 = vmatprep.subr.bf16.mxu0 0
        %512 = vmatpush1.bf16.msra.mxu0 0
        %513 = vmatprep.subr.bf16.mxu0 0
        %514 = vmatpush1.bf16.msra.mxu0 0
        %515 = vmatprep.subr.bf16.mxu0 0
        %516 = vmatpush1.bf16.msra.mxu0 0
        %517 = vmatprep.subr.bf16.mxu0 0
        %518 = vmatpush1.bf16.msra.mxu0 0
        %519 = vmatprep.subr.bf16.mxu0 0
        %520 = vmatpush1.bf16.msra.mxu0 0
        %521 = vmatprep.subr.bf16.mxu0 0
        %522 = vmatpush1.bf16.msra.mxu0 0
        %523 = vmatprep.subr.bf16.mxu0 0
        %524 = vmatpush1.bf16.msra.mxu0 0
        %525 = vmatprep.subr.bf16.mxu0 0
        %526 = vmatpush1.bf16.msra.mxu0 0
        %527 = vmatprep.subr.bf16.mxu0 0
        %528 = vmatpush1.bf16.msra.mxu0 0
        %529 = vmatprep.mubr.bf16.mxu0 0
        %530 = vmatmul.mubr.bf16.gmra.mrb[0].mxu0 %v488
        %v531 = vpop.f32.mrb[0].mxu0
        %v532 = vadd.f32 0.0, %v531
        %v533 = vpop.f32.mrb[0].mxu0
        %v534 = vpop.f32.mrb[0].mxu0
        %v535 = vadd.f32 0.0, %v534
        %v536 = vpop.f32.mrb[0].mxu0
        %537 = vmatprep.mubr.bf16.mxu0 0
        %538 = vmatmul.mubr.bf16.gmra.mrb[0].mxu0 %v491
        %v539 = vpop.f32.mrb[0].mxu0
        %v540 = vadd.f32 0.0, %v539
        %v541 = vpop.f32.mrb[0].mxu0
        %v542 = vpop.f32.mrb[0].mxu0
        %v543 = vpop.f32.mrb[0].mxu0
        %544 = vdwg.mxu0
        %v545 = vpack.c.bf16 %v535, %v532
        %v546 = vpack.c.bf16 %v540, %v540
        %547 = vmatprep.subr.bf16.mxu0 0
        %548 = vmatpush1.bf16.msra.mxu0 %v259
        %549 = vmatprep.subr.bf16.mxu0 0
        %550 = vmatpush1.bf16.msra.mxu0 %v260
        %551 = vmatprep.subr.bf16.mxu0 0
        %552 = vmatpush1.bf16.msra.mxu0 %v261
        %553 = vmatprep.subr.bf16.mxu0 0
        %554 = vmatpush1.bf16.msra.mxu0 %v262
        %555 = vmatprep.subr.bf16.mxu0 0
        %556 = vmatpush1.bf16.msra.mxu0 %v263
        %557 = vmatprep.subr.bf16.mxu0 0
        %558 = vmatpush1.bf16.msra.mxu0 %v264
        %559 = vmatprep.subr.bf16.mxu0 0
        %560 = vmatpush1.bf16.msra.mxu0 %v265
        %561 = vmatprep.subr.bf16.mxu0 0
        %562 = vmatpush1.bf16.msra.mxu0 %v266
        %563 = vmatprep.subr.bf16.mxu0 0
        %564 = vmatpush1.bf16.msra.mxu0 0
        %565 = vmatprep.subr.bf16.mxu0 0
        %566 = vmatpush1.bf16.msra.mxu0 0
        %567 = vmatprep.subr.bf16.mxu0 0
        %568 = vmatpush1.bf16.msra.mxu0 0
        %569 = vmatprep.subr.bf16.mxu0 0
        %570 = vmatpush1.bf16.msra.mxu0 0
        %571 = vmatprep.subr.bf16.mxu0 0
        %572 = vmatpush1.bf16.msra.mxu0 0
        %573 = vmatprep.subr.bf16.mxu0 0
        %574 = vmatpush1.bf16.msra.mxu0 0
        %575 = vmatprep.subr.bf16.mxu0 0
        %576 = vmatpush1.bf16.msra.mxu0 0
        %577 = vmatprep.subr.bf16.mxu0 0
        %578 = vmatpush1.bf16.msra.mxu0 0
        %579 = vmatprep.mubr.bf16.mxu0 0
        %580 = vmatmul.mubr.bf16.gmra.mrb[0].mxu0 %v484
        %v581 = vpop.f32.mrb[0].mxu0
        %v582 = vadd.f32 0.0, %v581
        %v583 = vpop.f32.mrb[0].mxu0
        %v584 = vpop.f32.mrb[0].mxu0
        %v585 = vadd.f32 0.0, %v584
        %v586 = vpop.f32.mrb[0].mxu0
        %587 = vmatprep.mubr.bf16.mxu0 0
        %588 = vmatmul.mubr.bf16.gmra.mrb[0].mxu0 %v485
        %v589 = vpop.f32.mrb[0].mxu0
        %v590 = vadd.f32 0.0, %v589
        %v591 = vpop.f32.mrb[0].mxu0
        %v592 = vpop.f32.mrb[0].mxu0
        %v593 = vpop.f32.mrb[0].mxu0
        %594 = vdwg.mxu0
        %595 = vmatprep.subr.bf16.mxu0 0
        %596 = vmatpush1.bf16.msra.mxu0 %v235
        %597 = vmatprep.subr.bf16.mxu0 0
        %598 = vmatpush1.bf16.msra.mxu0 %v236
        %599 = vmatprep.subr.bf16.mxu0 0
        %600 = vmatpush1.bf16.msra.mxu0 %v237
        %601 = vmatprep.subr.bf16.mxu0 0
        %602 = vmatpush1.bf16.msra.mxu0 %v238
        %603 = vmatprep.subr.bf16.mxu0 0
        %604 = vmatpush1.bf16.msra.mxu0 %v239
        %605 = vmatprep.subr.bf16.mxu0 0
        %606 = vmatpush1.bf16.msra.mxu0 %v240
        %607 = vmatprep.subr.bf16.mxu0 0
        %608 = vmatpush1.bf16.msra.mxu0 %v241
        %609 = vmatprep.subr.bf16.mxu0 0
        %610 = vmatpush1.bf16.msra.mxu0 %v242
        %611 = vmatprep.subr.bf16.mxu0 0
        %612 = vmatpush1.bf16.msra.mxu0 0
        %613 = vmatprep.subr.bf16.mxu0 0
        %614 = vmatpush1.bf16.msra.mxu0 0
        %615 = vmatprep.subr.bf16.mxu0 0
        %616 = vmatpush1.bf16.msra.mxu0 0
        %617 = vmatprep.subr.bf16.mxu0 0
        %618 = vmatpush1.bf16.msra.mxu0 0
        %619 = vmatprep.subr.bf16.mxu0 0
        %620 = vmatpush1.bf16.msra.mxu0 0
        %621 = vmatprep.subr.bf16.mxu0 0
        %622 = vmatpush1.bf16.msra.mxu0 0
        %623 = vmatprep.subr.bf16.mxu0 0
        %624 = vmatpush1.bf16.msra.mxu0 0
        %625 = vmatprep.subr.bf16.mxu0 0
        %626 = vmatpush1.bf16.msra.mxu0 0
        %627 = vmatprep.mubr.bf16.mxu0 0
        %628 = vmatmul.mubr.bf16.gmra.mrb[0].mxu0 %v545
        %v629 = vpop.f32.mrb[0].mxu0
        %v630 = vadd.f32 %v582, %v629
        %v631 = vpop.f32.mrb[0].mxu0
        %v632 = vpop.f32.mrb[0].mxu0
        %v633 = vadd.f32 %v585, %v632
        %v634 = vpop.f32.mrb[0].mxu0
        %635 = vmatprep.mubr.bf16.mxu0 0
        %636 = vmatmul.mubr.bf16.gmra.mrb[0].mxu0 %v546
        %v637 = vpop.f32.mrb[0].mxu0
        %v638 = vadd.f32 %v590, %v637
        %v639 = vpop.f32.mrb[0].mxu0
        %v640 = vpop.f32.mrb[0].mxu0
        %v641 = vpop.f32.mrb[0].mxu0
        %642 = vdwg.mxu0
        %v643 = vadd.f32 %v630, %v420
        %v644 = vadd.f32 %v633, %v420
        %v645 = vadd.f32 %v638, %v420
        %v646 = vxor.u32 %v643, 2147483648
        %v647 = vxor.u32 %v644, 2147483648
        %v648 = vxor.u32 %v645, 2147483648
        %v649 = vmul.f32 %v646, 1.442695
        %v650 = vpow.pop %v649
        %v651 = vmul.f32 %v647, 1.442695
        %v652 = vpow.pop %v651
        %v653 = vmul.f32 %v648, 1.442695
        %v654 = vpow.pop %v653
        %v655 = vadd.f32 %v650, 1.0
        %v656 = vadd.f32 %v652, 1.0
        %v657 = vadd.f32 %v654, 1.0
        %v658 = vrcp.pop %v655
        %v659 = vmul.f32 1.0, %v658
        %v660 = vrcp.pop %v656
        %v661 = vmul.f32 1.0, %v660
        %v662 = vrcp.pop %v657
        %v663 = vmul.f32 1.0, %v662
        %664 = vmatprep.subr.bf16.mxu0 0
        %665 = vmatpush1.bf16.msra.mxu0 %v307
        %666 = vmatprep.subr.bf16.mxu0 0
        %667 = vmatpush1.bf16.msra.mxu0 %v308
        %668 = vmatprep.subr.bf16.mxu0 0
        %669 = vmatpush1.bf16.msra.mxu0 %v309
        %670 = vmatprep.subr.bf16.mxu0 0
        %671 = vmatpush1.bf16.msra.mxu0 %v310
        %672 = vmatprep.subr.bf16.mxu0 0
        %673 = vmatpush1.bf16.msra.mxu0 %v311
        %674 = vmatprep.subr.bf16.mxu0 0
        %675 = vmatpush1.bf16.msra.mxu0 %v312
        %676 = vmatprep.subr.bf16.mxu0 0
        %677 = vmatpush1.bf16.msra.mxu0 %v313
        %678 = vmatprep.subr.bf16.mxu0 0
        %679 = vmatpush1.bf16.msra.mxu0 %v314
        %680 = vmatprep.subr.bf16.mxu0 0
        %681 = vmatpush1.bf16.msra.mxu0 0
        %682 = vmatprep.subr.bf16.mxu0 0
        %683 = vmatpush1.bf16.msra.mxu0 0
        %684 = vmatprep.subr.bf16.mxu0 0
        %685 = vmatpush1.bf16.msra.mxu0 0
        %686 = vmatprep.subr.bf16.mxu0 0
        %687 = vmatpush1.bf16.msra.mxu0 0
        %688 = vmatprep.subr.bf16.mxu0 0
        %689 = vmatpush1.bf16.msra.mxu0 0
        %690 = vmatprep.subr.bf16.mxu0 0
        %691 = vmatpush1.bf16.msra.mxu0 0
        %692 = vmatprep.subr.bf16.mxu0 0
        %693 = vmatpush1.bf16.msra.mxu0 0
        %694 = vmatprep.subr.bf16.mxu0 0
        %695 = vmatpush1.bf16.msra.mxu0 0
        %696 = vmatprep.mubr.bf16.mxu0 0
        %697 = vmatmul.mubr.bf16.gmra.mrb[0].mxu0 %v484
        %v698 = vpop.f32.mrb[0].mxu0
        %v699 = vadd.f32 0.0, %v698
        %v700 = vpop.f32.mrb[0].mxu0
        %v701 = vpop.f32.mrb[0].mxu0
        %v702 = vadd.f32 0.0, %v701
        %v703 = vpop.f32.mrb[0].mxu0
        %704 = vmatprep.mubr.bf16.mxu0 0
        %705 = vmatmul.mubr.bf16.gmra.mrb[0].mxu0 %v485
        %v706 = vpop.f32.mrb[0].mxu0
        %v707 = vadd.f32 0.0, %v706
        %v708 = vpop.f32.mrb[0].mxu0
        %v709 = vpop.f32.mrb[0].mxu0
        %v710 = vpop.f32.mrb[0].mxu0
        %711 = vdwg.mxu0
        %712 = vmatprep.subr.bf16.mxu0 0
        %713 = vmatpush1.bf16.msra.mxu0 %v283
        %714 = vmatprep.subr.bf16.mxu0 0
        %715 = vmatpush1.bf16.msra.mxu0 %v284
        %716 = vmatprep.subr.bf16.mxu0 0
        %717 = vmatpush1.bf16.msra.mxu0 %v285
        %718 = vmatprep.subr.bf16.mxu0 0
        %719 = vmatpush1.bf16.msra.mxu0 %v286
        %720 = vmatprep.subr.bf16.mxu0 0
        %721 = vmatpush1.bf16.msra.mxu0 %v287
        %722 = vmatprep.subr.bf16.mxu0 0
        %723 = vmatpush1.bf16.msra.mxu0 %v288
        %724 = vmatprep.subr.bf16.mxu0 0
        %725 = vmatpush1.bf16.msra.mxu0 %v289
        %726 = vmatprep.subr.bf16.mxu0 0
        %727 = vmatpush1.bf16.msra.mxu0 %v290
        %728 = vmatprep.subr.bf16.mxu0 0
        %729 = vmatpush1.bf16.msra.mxu0 0
        %730 = vmatprep.subr.bf16.mxu0 0
        %731 = vmatpush1.bf16.msra.mxu0 0
        %732 = vmatprep.subr.bf16.mxu0 0
        %733 = vmatpush1.bf16.msra.mxu0 0
        %734 = vmatprep.subr.bf16.mxu0 0
        %735 = vmatpush1.bf16.msra.mxu0 0
        %736 = vmatprep.subr.bf16.mxu0 0
        %737 = vmatpush1.bf16.msra.mxu0 0
        %738 = vmatprep.subr.bf16.mxu0 0
        %739 = vmatpush1.bf16.msra.mxu0 0
        %740 = vmatprep.subr.bf16.mxu0 0
        %741 = vmatpush1.bf16.msra.mxu0 0
        %742 = vmatprep.subr.bf16.mxu0 0
        %743 = vmatpush1.bf16.msra.mxu0 0
        %744 = vmatprep.mubr.bf16.mxu0 0
        %745 = vmatmul.mubr.bf16.gmra.mrb[0].mxu0 %v545
        %v746 = vpop.f32.mrb[0].mxu0
        %v747 = vadd.f32 %v699, %v746
        %v748 = vpop.f32.mrb[0].mxu0
        %v749 = vpop.f32.mrb[0].mxu0
        %v750 = vadd.f32 %v702, %v749
        %v751 = vpop.f32.mrb[0].mxu0
        %752 = vmatprep.mubr.bf16.mxu0 0
        %753 = vmatmul.mubr.bf16.gmra.mrb[0].mxu0 %v546
        %v754 = vpop.f32.mrb[0].mxu0
        %v755 = vadd.f32 %v707, %v754
        %v756 = vpop.f32.mrb[0].mxu0
        %v757 = vpop.f32.mrb[0].mxu0
        %v758 = vpop.f32.mrb[0].mxu0
        %759 = vdwg.mxu0
        %v760 = vadd.f32 %v747, %v425
        %v761 = vadd.f32 %v750, %v425
        %v762 = vadd.f32 %v755, %v425
        %v763 = vxor.u32 %v760, 2147483648
        %v764 = vxor.u32 %v761, 2147483648
        %v765 = vxor.u32 %v762, 2147483648
        %v766 = vmul.f32 %v763, 1.442695
        %v767 = vpow.pop %v766
        %v768 = vmul.f32 %v764, 1.442695
        %v769 = vpow.pop %v768
        %v770 = vmul.f32 %v765, 1.442695
        %v771 = vpow.pop %v770
        %v772 = vadd.f32 %v767, 1.0
        %v773 = vadd.f32 %v769, 1.0
        %v774 = vadd.f32 %v771, 1.0
        %v775 = vrcp.pop %v772
        %v776 = vmul.f32 1.0, %v775
        %v777 = vrcp.pop %v773
        %v778 = vmul.f32 1.0, %v777
        %v779 = vrcp.pop %v774
        %v780 = vmul.f32 1.0, %v779
        %v781 = vmul.f32 %v659, %v471
        %v782 = vmul.f32 %v661, %v474
        %v783 = vmul.f32 %v663, %v479
        %v784 = vpack.c.bf16 %v782, %v781
        %v785 = vpack.c.bf16 %v783, %v783
        %786 = vmatprep.subr.bf16.mxu0 0
        %787 = vmatpush1.bf16.msra.mxu0 %v355
        %788 = vmatprep.subr.bf16.mxu0 0
        %789 = vmatpush1.bf16.msra.mxu0 %v356
        %790 = vmatprep.subr.bf16.mxu0 0
        %791 = vmatpush1.bf16.msra.mxu0 %v357
        %792 = vmatprep.subr.bf16.mxu0 0
        %793 = vmatpush1.bf16.msra.mxu0 %v358
        %794 = vmatprep.subr.bf16.mxu0 0
        %795 = vmatpush1.bf16.msra.mxu0 %v359
        %796 = vmatprep.subr.bf16.mxu0 0
        %797 = vmatpush1.bf16.msra.mxu0 %v360
        %798 = vmatprep.subr.bf16.mxu0 0
        %799 = vmatpush1.bf16.msra.mxu0 %v361
        %800 = vmatprep.subr.bf16.mxu0 0
        %801 = vmatpush1.bf16.msra.mxu0 %v362
        %802 = vmatprep.subr.bf16.mxu0 0
        %803 = vmatpush1.bf16.msra.mxu0 0
        %804 = vmatprep.subr.bf16.mxu0 0
        %805 = vmatpush1.bf16.msra.mxu0 0
        %806 = vmatprep.subr.bf16.mxu0 0
        %807 = vmatpush1.bf16.msra.mxu0 0
        %808 = vmatprep.subr.bf16.mxu0 0
        %809 = vmatpush1.bf16.msra.mxu0 0
        %810 = vmatprep.subr.bf16.mxu0 0
        %811 = vmatpush1.bf16.msra.mxu0 0
        %812 = vmatprep.subr.bf16.mxu0 0
        %813 = vmatpush1.bf16.msra.mxu0 0
        %814 = vmatprep.subr.bf16.mxu0 0
        %815 = vmatpush1.bf16.msra.mxu0 0
        %816 = vmatprep.subr.bf16.mxu0 0
        %817 = vmatpush1.bf16.msra.mxu0 0
        %818 = vmatprep.mubr.bf16.mxu0 0
        %819 = vmatmul.mubr.bf16.gmra.mrb[0].mxu0 %v784
        %v820 = vpop.f32.mrb[0].mxu0
        %v821 = vadd.f32 0.0, %v820
        %v822 = vpop.f32.mrb[0].mxu0
        %v823 = vpop.f32.mrb[0].mxu0
        %v824 = vadd.f32 0.0, %v823
        %v825 = vpop.f32.mrb[0].mxu0
        %826 = vmatprep.mubr.bf16.mxu0 0
        %827 = vmatmul.mubr.bf16.gmra.mrb[0].mxu0 %v785
        %v828 = vpop.f32.mrb[0].mxu0
        %v829 = vadd.f32 0.0, %v828
        %v830 = vpop.f32.mrb[0].mxu0
        %v831 = vpop.f32.mrb[0].mxu0
        %v832 = vpop.f32.mrb[0].mxu0
        %833 = vdwg.mxu0
        %834 = vmatprep.subr.bf16.mxu0 0
        %835 = vmatpush1.bf16.msra.mxu0 %v331
        %836 = vmatprep.subr.bf16.mxu0 0
        %837 = vmatpush1.bf16.msra.mxu0 %v332
        %838 = vmatprep.subr.bf16.mxu0 0
        %839 = vmatpush1.bf16.msra.mxu0 %v333
        %840 = vmatprep.subr.bf16.mxu0 0
        %841 = vmatpush1.bf16.msra.mxu0 %v334
        %842 = vmatprep.subr.bf16.mxu0 0
        %843 = vmatpush1.bf16.msra.mxu0 %v335
        %844 = vmatprep.subr.bf16.mxu0 0
        %845 = vmatpush1.bf16.msra.mxu0 %v336
        %846 = vmatprep.subr.bf16.mxu0 0
        %847 = vmatpush1.bf16.msra.mxu0 %v337
        %848 = vmatprep.subr.bf16.mxu0 0
        %849 = vmatpush1.bf16.msra.mxu0 %v338
        %850 = vmatprep.subr.bf16.mxu0 0
        %851 = vmatpush1.bf16.msra.mxu0 0
        %852 = vmatprep.subr.bf16.mxu0 0
        %853 = vmatpush1.bf16.msra.mxu0 0
        %854 = vmatprep.subr.bf16.mxu0 0
        %855 = vmatpush1.bf16.msra.mxu0 0
        %856 = vmatprep.subr.bf16.mxu0 0
        %857 = vmatpush1.bf16.msra.mxu0 0
        %858 = vmatprep.subr.bf16.mxu0 0
        %859 = vmatpush1.bf16.msra.mxu0 0
        %860 = vmatprep.subr.bf16.mxu0 0
        %861 = vmatpush1.bf16.msra.mxu0 0
        %862 = vmatprep.subr.bf16.mxu0 0
        %863 = vmatpush1.bf16.msra.mxu0 0
        %864 = vmatprep.subr.bf16.mxu0 0
        %865 = vmatpush1.bf16.msra.mxu0 0
        %866 = vmatprep.mubr.bf16.mxu0 0
        %867 = vmatmul.mubr.bf16.gmra.mrb[0].mxu0 %v545
        %v868 = vpop.f32.mrb[0].mxu0
        %v869 = vadd.f32 %v821, %v868
        %v870 = vpop.f32.mrb[0].mxu0
        %v871 = vpop.f32.mrb[0].mxu0
        %v872 = vadd.f32 %v824, %v871
        %v873 = vpop.f32.mrb[0].mxu0
        %874 = vmatprep.mubr.bf16.mxu0 0
        %875 = vmatmul.mubr.bf16.gmra.mrb[0].mxu0 %v546
        %v876 = vpop.f32.mrb[0].mxu0
        %v877 = vadd.f32 %v829, %v876
        %v878 = vpop.f32.mrb[0].mxu0
        %v879 = vpop.f32.mrb[0].mxu0
        %v880 = vpop.f32.mrb[0].mxu0
        %881 = vdwg.mxu0
        %v882 = vadd.f32 %v869, %v430
        %v883 = vadd.f32 %v872, %v430
        %v884 = vadd.f32 %v877, %v430
        %v885 = vtanh.pop %v882
        %v886 = vtanh.pop %v883
        %v887 = vtanh.pop %v884
        %v888 = vsub.f32 1.0, %v776
        %v889 = vsub.f32 1.0, %v778
        %v890 = vsub.f32 1.0, %v780
        %v891 = vmul.f32 %v888, %v471
        %v892 = vmul.f32 %v889, %v474
        %v893 = vmul.f32 %v890, %v479
        %v894 = vmul.f32 %v776, %v885
        %v895 = vmul.f32 %v778, %v886
        %v896 = vmul.f32 %v780, %v887
        %v897 = vadd.f32 %v891, %v894
        %v898 = vadd.f32 %v892, %v895
        %v899 = vadd.f32 %v893, %v896
        %v900 = vpack.c.bf16 %v898, %v897
        %v901 = vpack.c.bf16 %v899, %v899
        %v903 = vsel %vm493, %v901, 0
        %905 = vmatprep.subr.bf16.mxu0 0
        %906 = vmatpush1.bf16.msra.mxu0 %v900
        %907 = vmatprep.subr.bf16.mxu0 0
        %908 = vmatpush1.bf16.msra.mxu0 %v903
        %909 = vmatprep.subr.bf16.mxu0 0
        %910 = vmatpush1.bf16.msra.mxu0 0
        %911 = vmatprep.subr.bf16.mxu0 0
        %912 = vmatpush1.bf16.msra.mxu0 0
        %913 = vmatprep.subr.bf16.mxu0 0
        %914 = vmatpush1.bf16.msra.mxu0 0
        %915 = vmatprep.subr.bf16.mxu0 0
        %916 = vmatpush1.bf16.msra.mxu0 0
        %917 = vmatprep.subr.bf16.mxu0 0
        %918 = vmatpush1.bf16.msra.mxu0 0
        %919 = vmatprep.subr.bf16.mxu0 0
        %920 = vmatpush1.bf16.msra.mxu0 0
        %921 = vmatprep.subr.bf16.mxu0 0
        %922 = vmatpush1.bf16.msra.mxu0 0
        %923 = vmatprep.subr.bf16.mxu0 0
        %924 = vmatpush1.bf16.msra.mxu0 0
        %925 = vmatprep.subr.bf16.mxu0 0
        %926 = vmatpush1.bf16.msra.mxu0 0
        %927 = vmatprep.subr.bf16.mxu0 0
        %928 = vmatpush1.bf16.msra.mxu0 0
        %929 = vmatprep.subr.bf16.mxu0 0
        %930 = vmatpush1.bf16.msra.mxu0 0
        %931 = vmatprep.subr.bf16.mxu0 0
        %932 = vmatpush1.bf16.msra.mxu0 0
        %933 = vmatprep.subr.bf16.mxu0 0
        %934 = vmatpush1.bf16.msra.mxu0 0
        %935 = vmatprep.subr.bf16.mxu0 0
        %936 = vmatpush1.bf16.msra.mxu0 0
        %937 = vmatprep.mubr.bf16.mxu0 0
        %938 = vmatmul.mubr.bf16.gmra.mrb[0].mxu0 %v488
        %v939 = vpop.f32.mrb[0].mxu0
        %v940 = vadd.f32 0.0, %v939
        %v941 = vpop.f32.mrb[0].mxu0
        %v942 = vpop.f32.mrb[0].mxu0
        %v943 = vadd.f32 0.0, %v942
        %v944 = vpop.f32.mrb[0].mxu0
        %945 = vmatprep.mubr.bf16.mxu0 0
        %946 = vmatmul.mubr.bf16.gmra.mrb[0].mxu0 %v491
        %v947 = vpop.f32.mrb[0].mxu0
        %v948 = vadd.f32 0.0, %v947
        %v949 = vpop.f32.mrb[0].mxu0
        %v950 = vpop.f32.mrb[0].mxu0
        %v951 = vpop.f32.mrb[0].mxu0
        %952 = vdwg.mxu0
        %v953 = vpack.c.bf16 %v943, %v940
        %v954 = vpack.c.bf16 %v948, %v948
        %955 = vmatprep.subr.bf16.mxu0 0
        %956 = vmatpush1.bf16.msra.mxu0 %v259
        %957 = vmatprep.subr.bf16.mxu0 0
        %958 = vmatpush1.bf16.msra.mxu0 %v260
        %959 = vmatprep.subr.bf16.mxu0 0
        %960 = vmatpush1.bf16.msra.mxu0 %v261
        %961 = vmatprep.subr.bf16.mxu0 0
        %962 = vmatpush1.bf16.msra.mxu0 %v262
        %963 = vmatprep.subr.bf16.mxu0 0
        %964 = vmatpush1.bf16.msra.mxu0 %v263
        %965 = vmatprep.subr.bf16.mxu0 0
        %966 = vmatpush1.bf16.msra.mxu0 %v264
        %967 = vmatprep.subr.bf16.mxu0 0
        %968 = vmatpush1.bf16.msra.mxu0 %v265
        %969 = vmatprep.subr.bf16.mxu0 0
        %970 = vmatpush1.bf16.msra.mxu0 %v266
        %971 = vmatprep.subr.bf16.mxu0 0
        %972 = vmatpush1.bf16.msra.mxu0 0
        %973 = vmatprep.subr.bf16.mxu0 0
        %974 = vmatpush1.bf16.msra.mxu0 0
        %975 = vmatprep.subr.bf16.mxu0 0
        %976 = vmatpush1.bf16.msra.mxu0 0
        %977 = vmatprep.subr.bf16.mxu0 0
        %978 = vmatpush1.bf16.msra.mxu0 0
        %979 = vmatprep.subr.bf16.mxu0 0
        %980 = vmatpush1.bf16.msra.mxu0 0
        %981 = vmatprep.subr.bf16.mxu0 0
        %982 = vmatpush1.bf16.msra.mxu0 0
        %983 = vmatprep.subr.bf16.mxu0 0
        %984 = vmatpush1.bf16.msra.mxu0 0
        %985 = vmatprep.subr.bf16.mxu0 0
        %986 = vmatpush1.bf16.msra.mxu0 0
        %987 = vmatprep.mubr.bf16.mxu0 0
        %988 = vmatmul.mubr.bf16.gmra.mrb[0].mxu0 %v900
        %v989 = vpop.f32.mrb[0].mxu0
        %v990 = vadd.f32 0.0, %v989
        %v991 = vpop.f32.mrb[0].mxu0
        %v992 = vpop.f32.mrb[0].mxu0
        %v993 = vadd.f32 0.0, %v992
        %v994 = vpop.f32.mrb[0].mxu0
        %995 = vmatprep.mubr.bf16.mxu0 0
        %996 = vmatmul.mubr.bf16.gmra.mrb[0].mxu0 %v901
        %v997 = vpop.f32.mrb[0].mxu0
        %v998 = vadd.f32 0.0, %v997
        %v999 = vpop.f32.mrb[0].mxu0
        %v1000 = vpop.f32.mrb[0].mxu0
        %v1001 = vpop.f32.mrb[0].mxu0
        %1002 = vdwg.mxu0
        %1003 = vmatprep.subr.bf16.mxu0 0
        %1004 = vmatpush1.bf16.msra.mxu0 %v235
        %1005 = vmatprep.subr.bf16.mxu0 0
        %1006 = vmatpush1.bf16.msra.mxu0 %v236
        %1007 = vmatprep.subr.bf16.mxu0 0
        %1008 = vmatpush1.bf16.msra.mxu0 %v237
        %1009 = vmatprep.subr.bf16.mxu0 0
        %1010 = vmatpush1.bf16.msra.mxu0 %v238
        %1011 = vmatprep.subr.bf16.mxu0 0
        %1012 = vmatpush1.bf16.msra.mxu0 %v239
        %1013 = vmatprep.subr.bf16.mxu0 0
        %1014 = vmatpush1.bf16.msra.mxu0 %v240
        %1015 = vmatprep.subr.bf16.mxu0 0
        %1016 = vmatpush1.bf16.msra.mxu0 %v241
        %1017 = vmatprep.subr.bf16.mxu0 0
        %1018 = vmatpush1.bf16.msra.mxu0 %v242
        %1019 = vmatprep.subr.bf16.mxu0 0
        %1020 = vmatpush1.bf16.msra.mxu0 0
        %1021 = vmatprep.subr.bf16.mxu0 0
        %1022 = vmatpush1.bf16.msra.mxu0 0
        %1023 = vmatprep.subr.bf16.mxu0 0
        %1024 = vmatpush1.bf16.msra.mxu0 0
        %1025 = vmatprep.subr.bf16.mxu0 0
        %1026 = vmatpush1.bf16.msra.mxu0 0
        %1027 = vmatprep.subr.bf16.mxu0 0
        %1028 = vmatpush1.bf16.msra.mxu0 0
        %1029 = vmatprep.subr.bf16.mxu0 0
        %1030 = vmatpush1.bf16.msra.mxu0 0
        %1031 = vmatprep.subr.bf16.mxu0 0
        %1032 = vmatpush1.bf16.msra.mxu0 0
        %1033 = vmatprep.subr.bf16.mxu0 0
        %1034 = vmatpush1.bf16.msra.mxu0 0
        %1035 = vmatprep.mubr.bf16.mxu0 0
        %1036 = vmatmul.mubr.bf16.gmra.mrb[0].mxu0 %v953
        %v1037 = vpop.f32.mrb[0].mxu0
        %v1038 = vadd.f32 %v990, %v1037
        %v1039 = vpop.f32.mrb[0].mxu0
        %v1040 = vpop.f32.mrb[0].mxu0
        %v1041 = vadd.f32 %v993, %v1040
        %v1042 = vpop.f32.mrb[0].mxu0
        %1043 = vmatprep.mubr.bf16.mxu0 0
        %1044 = vmatmul.mubr.bf16.gmra.mrb[0].mxu0 %v954
        %v1045 = vpop.f32.mrb[0].mxu0
        %v1046 = vadd.f32 %v998, %v1045
        %v1047 = vpop.f32.mrb[0].mxu0
        %v1048 = vpop.f32.mrb[0].mxu0
        %v1049 = vpop.f32.mrb[0].mxu0
        %1050 = vdwg.mxu0
        %v1051 = vadd.f32 %v1038, %v420
        %v1052 = vadd.f32 %v1041, %v420
        %v1053 = vadd.f32 %v1046, %v420
        %v1054 = vxor.u32 %v1051, 2147483648
        %v1055 = vxor.u32 %v1052, 2147483648
        %v1056 = vxor.u32 %v1053, 2147483648
        %v1057 = vmul.f32 %v1054, 1.442695
        %v1058 = vpow.pop %v1057
        %v1059 = vmul.f32 %v1055, 1.442695
        %v1060 = vpow.pop %v1059
        %v1061 = vmul.f32 %v1056, 1.442695
        %v1062 = vpow.pop %v1061
        %v1063 = vadd.f32 %v1058, 1.0
        %v1064 = vadd.f32 %v1060, 1.0
        %v1065 = vadd.f32 %v1062, 1.0
        %v1066 = vrcp.pop %v1063
        %v1067 = vmul.f32 1.0, %v1066
        %v1068 = vrcp.pop %v1064
        %v1069 = vmul.f32 1.0, %v1068
        %v1070 = vrcp.pop %v1065
        %v1071 = vmul.f32 1.0, %v1070
        %1072 = vmatprep.subr.bf16.mxu0 0
        %1073 = vmatpush1.bf16.msra.mxu0 %v307
        %1074 = vmatprep.subr.bf16.mxu0 0
        %1075 = vmatpush1.bf16.msra.mxu0 %v308
        %1076 = vmatprep.subr.bf16.mxu0 0
        %1077 = vmatpush1.bf16.msra.mxu0 %v309
        %1078 = vmatprep.subr.bf16.mxu0 0
        %1079 = vmatpush1.bf16.msra.mxu0 %v310
        %1080 = vmatprep.subr.bf16.mxu0 0
        %1081 = vmatpush1.bf16.msra.mxu0 %v311
        %1082 = vmatprep.subr.bf16.mxu0 0
        %1083 = vmatpush1.bf16.msra.mxu0 %v312
        %1084 = vmatprep.subr.bf16.mxu0 0
        %1085 = vmatpush1.bf16.msra.mxu0 %v313
        %1086 = vmatprep.subr.bf16.mxu0 0
        %1087 = vmatpush1.bf16.msra.mxu0 %v314
        %1088 = vmatprep.subr.bf16.mxu0 0
        %1089 = vmatpush1.bf16.msra.mxu0 0
        %1090 = vmatprep.subr.bf16.mxu0 0
        %1091 = vmatpush1.bf16.msra.mxu0 0
        %1092 = vmatprep.subr.bf16.mxu0 0
        %1093 = vmatpush1.bf16.msra.mxu0 0
        %1094 = vmatprep.subr.bf16.mxu0 0
        %1095 = vmatpush1.bf16.msra.mxu0 0
        %1096 = vmatprep.subr.bf16.mxu0 0
        %1097 = vmatpush1.bf16.msra.mxu0 0
        %1098 = vmatprep.subr.bf16.mxu0 0
        %1099 = vmatpush1.bf16.msra.mxu0 0
        %1100 = vmatprep.subr.bf16.mxu0 0
        %1101 = vmatpush1.bf16.msra.mxu0 0
        %1102 = vmatprep.subr.bf16.mxu0 0
        %1103 = vmatpush1.bf16.msra.mxu0 0
        %1104 = vmatprep.mubr.bf16.mxu0 0
        %1105 = vmatmul.mubr.bf16.gmra.mrb[0].mxu0 %v900
        %v1106 = vpop.f32.mrb[0].mxu0
        %v1107 = vadd.f32 0.0, %v1106
        %v1108 = vpop.f32.mrb[0].mxu0
        %v1109 = vpop.f32.mrb[0].mxu0
        %v1110 = vadd.f32 0.0, %v1109
        %v1111 = vpop.f32.mrb[0].mxu0
        %1112 = vmatprep.mubr.bf16.mxu0 0
        %1113 = vmatmul.mubr.bf16.gmra.mrb[0].mxu0 %v901
        %v1114 = vpop.f32.mrb[0].mxu0
        %v1115 = vadd.f32 0.0, %v1114
        %v1116 = vpop.f32.mrb[0].mxu0
        %v1117 = vpop.f32.mrb[0].mxu0
        %v1118 = vpop.f32.mrb[0].mxu0
        %1119 = vdwg.mxu0
        %1120 = vmatprep.subr.bf16.mxu0 0
        %1121 = vmatpush1.bf16.msra.mxu0 %v283
        %1122 = vmatprep.subr.bf16.mxu0 0
        %1123 = vmatpush1.bf16.msra.mxu0 %v284
        %1124 = vmatprep.subr.bf16.mxu0 0
        %1125 = vmatpush1.bf16.msra.mxu0 %v285
        %1126 = vmatprep.subr.bf16.mxu0 0
        %1127 = vmatpush1.bf16.msra.mxu0 %v286
        %1128 = vmatprep.subr.bf16.mxu0 0
        %1129 = vmatpush1.bf16.msra.mxu0 %v287
        %1130 = vmatprep.subr.bf16.mxu0 0
        %1131 = vmatpush1.bf16.msra.mxu0 %v288
        %1132 = vmatprep.subr.bf16.mxu0 0
        %1133 = vmatpush1.bf16.msra.mxu0 %v289
        %1134 = vmatprep.subr.bf16.mxu0 0
        %1135 = vmatpush1.bf16.msra.mxu0 %v290
        %1136 = vmatprep.subr.bf16.mxu0 0
        %1137 = vmatpush1.bf16.msra.mxu0 0
        %1138 = vmatprep.subr.bf16.mxu0 0
        %1139 = vmatpush1.bf16.msra.mxu0 0
        %1140 = vmatprep.subr.bf16.mxu0 0
        %1141 = vmatpush1.bf16.msra.mxu0 0
        %1142 = vmatprep.subr.bf16.mxu0 0
        %1143 = vmatpush1.bf16.msra.mxu0 0
        %1144 = vmatprep.subr.bf16.mxu0 0
        %1145 = vmatpush1.bf16.msra.mxu0 0
        %1146 = vmatprep.subr.bf16.mxu0 0
        %1147 = vmatpush1.bf16.msra.mxu0 0
        %1148 = vmatprep.subr.bf16.mxu0 0
        %1149 = vmatpush1.bf16.msra.mxu0 0
        %1150 = vmatprep.subr.bf16.mxu0 0
        %1151 = vmatpush1.bf16.msra.mxu0 0
        %1152 = vmatprep.mubr.bf16.mxu0 0
        %1153 = vmatmul.mubr.bf16.gmra.mrb[0].mxu0 %v953
        %v1154 = vpop.f32.mrb[0].mxu0
        %v1155 = vadd.f32 %v1107, %v1154
        %v1156 = vpop.f32.mrb[0].mxu0
        %v1157 = vpop.f32.mrb[0].mxu0
        %v1158 = vadd.f32 %v1110, %v1157
        %v1159 = vpop.f32.mrb[0].mxu0
        %1160 = vmatprep.mubr.bf16.mxu0 0
        %1161 = vmatmul.mubr.bf16.gmra.mrb[0].mxu0 %v954
        %v1162 = vpop.f32.mrb[0].mxu0
        %v1163 = vadd.f32 %v1115, %v1162
        %v1164 = vpop.f32.mrb[0].mxu0
        %v1165 = vpop.f32.mrb[0].mxu0
        %v1166 = vpop.f32.mrb[0].mxu0
        %1167 = vdwg.mxu0
        %v1168 = vadd.f32 %v1155, %v425
        %v1169 = vadd.f32 %v1158, %v425
        %v1170 = vadd.f32 %v1163, %v425
        %v1171 = vxor.u32 %v1168, 2147483648
        %v1172 = vxor.u32 %v1169, 2147483648
        %v1173 = vxor.u32 %v1170, 2147483648
        %v1174 = vmul.f32 %v1171, 1.442695
        %v1175 = vpow.pop %v1174
        %v1176 = vmul.f32 %v1172, 1.442695
        %v1177 = vpow.pop %v1176
        %v1178 = vmul.f32 %v1173, 1.442695
        %v1179 = vpow.pop %v1178
        %v1180 = vadd.f32 %v1175, 1.0
        %v1181 = vadd.f32 %v1177, 1.0
        %v1182 = vadd.f32 %v1179, 1.0
        %v1183 = vrcp.pop %v1180
        %v1184 = vmul.f32 1.0, %v1183
        %v1185 = vrcp.pop %v1181
        %v1186 = vmul.f32 1.0, %v1185
        %v1187 = vrcp.pop %v1182
        %v1188 = vmul.f32 1.0, %v1187
        %v1189 = vmul.f32 %v1067, %v897
        %v1190 = vmul.f32 %v1069, %v898
        %v1191 = vmul.f32 %v1071, %v899
        %v1192 = vpack.c.bf16 %v1190, %v1189
        %v1193 = vpack.c.bf16 %v1191, %v1191
        %1194 = vmatprep.subr.bf16.mxu0 0
        %1195 = vmatpush1.bf16.msra.mxu0 %v355
        %1196 = vmatprep.subr.bf16.mxu0 0
        %1197 = vmatpush1.bf16.msra.mxu0 %v356
        %1198 = vmatprep.subr.bf16.mxu0 0
        %1199 = vmatpush1.bf16.msra.mxu0 %v357
        %1200 = vmatprep.subr.bf16.mxu0 0
        %1201 = vmatpush1.bf16.msra.mxu0 %v358
        %1202 = vmatprep.subr.bf16.mxu0 0
        %1203 = vmatpush1.bf16.msra.mxu0 %v359
        %1204 = vmatprep.subr.bf16.mxu0 0
        %1205 = vmatpush1.bf16.msra.mxu0 %v360
        %1206 = vmatprep.subr.bf16.mxu0 0
        %1207 = vmatpush1.bf16.msra.mxu0 %v361
        %1208 = vmatprep.subr.bf16.mxu0 0
        %1209 = vmatpush1.bf16.msra.mxu0 %v362
        %1210 = vmatprep.subr.bf16.mxu0 0
        %1211 = vmatpush1.bf16.msra.mxu0 0
        %1212 = vmatprep.subr.bf16.mxu0 0
        %1213 = vmatpush1.bf16.msra.mxu0 0
        %1214 = vmatprep.subr.bf16.mxu0 0
        %1215 = vmatpush1.bf16.msra.mxu0 0
        %1216 = vmatprep.subr.bf16.mxu0 0
        %1217 = vmatpush1.bf16.msra.mxu0 0
        %1218 = vmatprep.subr.bf16.mxu0 0
        %1219 = vmatpush1.bf16.msra.mxu0 0
        %1220 = vmatprep.subr.bf16.mxu0 0
        %1221 = vmatpush1.bf16.msra.mxu0 0
        %1222 = vmatprep.subr.bf16.mxu0 0
        %1223 = vmatpush1.bf16.msra.mxu0 0
        %1224 = vmatprep.subr.bf16.mxu0 0
        %1225 = vmatpush1.bf16.msra.mxu0 0
        %1226 = vmatprep.mubr.bf16.mxu0 0
        %1227 = vmatmul.mubr.bf16.gmra.mrb[0].mxu0 %v1192
        %v1228 = vpop.f32.mrb[0].mxu0
        %v1229 = vadd.f32 0.0, %v1228
        %v1230 = vpop.f32.mrb[0].mxu0
        %v1231 = vpop.f32.mrb[0].mxu0
        %v1232 = vadd.f32 0.0, %v1231
        %v1233 = vpop.f32.mrb[0].mxu0
        %1234 = vmatprep.mubr.bf16.mxu0 0
        %1235 = vmatmul.mubr.bf16.gmra.mrb[0].mxu0 %v1193
        %v1236 = vpop.f32.mrb[0].mxu0
        %v1237 = vadd.f32 0.0, %v1236
        %v1238 = vpop.f32.mrb[0].mxu0
        %v1239 = vpop.f32.mrb[0].mxu0
        %v1240 = vpop.f32.mrb[0].mxu0
        %1241 = vdwg.mxu0
        %1242 = vmatprep.subr.bf16.mxu0 0
        %1243 = vmatpush1.bf16.msra.mxu0 %v331
        %1244 = vmatprep.subr.bf16.mxu0 0
        %1245 = vmatpush1.bf16.msra.mxu0 %v332
        %1246 = vmatprep.subr.bf16.mxu0 0
        %1247 = vmatpush1.bf16.msra.mxu0 %v333
        %1248 = vmatprep.subr.bf16.mxu0 0
        %1249 = vmatpush1.bf16.msra.mxu0 %v334
        %1250 = vmatprep.subr.bf16.mxu0 0
        %1251 = vmatpush1.bf16.msra.mxu0 %v335
        %1252 = vmatprep.subr.bf16.mxu0 0
        %1253 = vmatpush1.bf16.msra.mxu0 %v336
        %1254 = vmatprep.subr.bf16.mxu0 0
        %1255 = vmatpush1.bf16.msra.mxu0 %v337
        %1256 = vmatprep.subr.bf16.mxu0 0
        %1257 = vmatpush1.bf16.msra.mxu0 %v338
        %1258 = vmatprep.subr.bf16.mxu0 0
        %1259 = vmatpush1.bf16.msra.mxu0 0
        %1260 = vmatprep.subr.bf16.mxu0 0
        %1261 = vmatpush1.bf16.msra.mxu0 0
        %1262 = vmatprep.subr.bf16.mxu0 0
        %1263 = vmatpush1.bf16.msra.mxu0 0
        %1264 = vmatprep.subr.bf16.mxu0 0
        %1265 = vmatpush1.bf16.msra.mxu0 0
        %1266 = vmatprep.subr.bf16.mxu0 0
        %1267 = vmatpush1.bf16.msra.mxu0 0
        %1268 = vmatprep.subr.bf16.mxu0 0
        %1269 = vmatpush1.bf16.msra.mxu0 0
        %1270 = vmatprep.subr.bf16.mxu0 0
        %1271 = vmatpush1.bf16.msra.mxu0 0
        %1272 = vmatprep.subr.bf16.mxu0 0
        %1273 = vmatpush1.bf16.msra.mxu0 0
        %1274 = vmatprep.mubr.bf16.mxu0 0
        %1275 = vmatmul.mubr.bf16.gmra.mrb[0].mxu0 %v953
        %v1276 = vpop.f32.mrb[0].mxu0
        %v1277 = vadd.f32 %v1229, %v1276
        %v1278 = vpop.f32.mrb[0].mxu0
        %v1279 = vpop.f32.mrb[0].mxu0
        %v1280 = vadd.f32 %v1232, %v1279
        %v1281 = vpop.f32.mrb[0].mxu0
        %1282 = vmatprep.mubr.bf16.mxu0 0
        %1283 = vmatmul.mubr.bf16.gmra.mrb[0].mxu0 %v954
        %v1284 = vpop.f32.mrb[0].mxu0
        %v1285 = vadd.f32 %v1237, %v1284
        %v1286 = vpop.f32.mrb[0].mxu0
        %v1287 = vpop.f32.mrb[0].mxu0
        %v1288 = vpop.f32.mrb[0].mxu0
        %1289 = vdwg.mxu0
        %v1290 = vadd.f32 %v1277, %v430
        %v1291 = vadd.f32 %v1280, %v430
        %v1292 = vadd.f32 %v1285, %v430
        %v1293 = vtanh.pop %v1290
        %v1294 = vtanh.pop %v1291
        %v1295 = vtanh.pop %v1292
        %v1296 = vsub.f32 1.0, %v1184
        %v1297 = vsub.f32 1.0, %v1186
        %v1298 = vsub.f32 1.0, %v1188
        %v1299 = vmul.f32 %v1296, %v897
        %v1300 = vmul.f32 %v1297, %v898
        %v1301 = vmul.f32 %v1298, %v899
        %v1302 = vmul.f32 %v1184, %v1293
        %v1303 = vmul.f32 %v1186, %v1294
        %v1304 = vmul.f32 %v1188, %v1295
        %v1305 = vadd.f32 %v1299, %v1302
        %v1306 = vadd.f32 %v1300, %v1303
        %v1307 = vadd.f32 %v1301, %v1304
        %v1308 = vpack.c.bf16 %v1306, %v1305
        %v1309 = vpack.c.bf16 %v1307, %v1307
        %v1311 = vsel %vm493, %v1309, 0
        %1313 = vmatprep.subr.bf16.mxu0 0
        %1314 = vmatpush1.bf16.msra.mxu0 %v1308
        %1315 = vmatprep.subr.bf16.mxu0 0
        %1316 = vmatpush1.bf16.msra.mxu0 %v1311
        %1317 = vmatprep.subr.bf16.mxu0 0
        %1318 = vmatpush1.bf16.msra.mxu0 0
        %1319 = vmatprep.subr.bf16.mxu0 0
        %1320 = vmatpush1.bf16.msra.mxu0 0
        %1321 = vmatprep.subr.bf16.mxu0 0
        %1322 = vmatpush1.bf16.msra.mxu0 0
        %1323 = vmatprep.subr.bf16.mxu0 0
        %1324 = vmatpush1.bf16.msra.mxu0 0
        %1325 = vmatprep.subr.bf16.mxu0 0
        %1326 = vmatpush1.bf16.msra.mxu0 0
        %1327 = vmatprep.subr.bf16.mxu0 0
        %1328 = vmatpush1.bf16.msra.mxu0 0
        %1329 = vmatprep.subr.bf16.mxu0 0
        %1330 = vmatpush1.bf16.msra.mxu0 0
        %1331 = vmatprep.subr.bf16.mxu0 0
        %1332 = vmatpush1.bf16.msra.mxu0 0
        %1333 = vmatprep.subr.bf16.mxu0 0
        %1334 = vmatpush1.bf16.msra.mxu0 0
        %1335 = vmatprep.subr.bf16.mxu0 0
        %1336 = vmatpush1.bf16.msra.mxu0 0
        %1337 = vmatprep.subr.bf16.mxu0 0
        %1338 = vmatpush1.bf16.msra.mxu0 0
        %1339 = vmatprep.subr.bf16.mxu0 0
        %1340 = vmatpush1.bf16.msra.mxu0 0
        %1341 = vmatprep.subr.bf16.mxu0 0
        %1342 = vmatpush1.bf16.msra.mxu0 0
        %1343 = vmatprep.subr.bf16.mxu0 0
        %1344 = vmatpush1.bf16.msra.mxu0 0
        %1345 = vmatprep.mubr.bf16.mxu0 0
        %1346 = vmatmul.mubr.bf16.gmra.mrb[0].mxu0 %v488
        %v1347 = vpop.f32.mrb[0].mxu0
        %v1348 = vadd.f32 0.0, %v1347
        %v1349 = vpop.f32.mrb[0].mxu0
        %v1350 = vpop.f32.mrb[0].mxu0
        %v1351 = vadd.f32 0.0, %v1350
        %v1352 = vpop.f32.mrb[0].mxu0
        %1353 = vmatprep.mubr.bf16.mxu0 0
        %1354 = vmatmul.mubr.bf16.gmra.mrb[0].mxu0 %v491
        %v1355 = vpop.f32.mrb[0].mxu0
        %v1356 = vadd.f32 0.0, %v1355
        %v1357 = vpop.f32.mrb[0].mxu0
        %v1358 = vpop.f32.mrb[0].mxu0
        %v1359 = vpop.f32.mrb[0].mxu0
        %1360 = vdwg.mxu0
        %v1361 = vpack.c.bf16 %v1351, %v1348
        %v1362 = vpack.c.bf16 %v1356, %v1356
        %1363 = vmatprep.subr.bf16.mxu0 0
        %1364 = vmatpush1.bf16.msra.mxu0 %v259
        %1365 = vmatprep.subr.bf16.mxu0 0
        %1366 = vmatpush1.bf16.msra.mxu0 %v260
        %1367 = vmatprep.subr.bf16.mxu0 0
        %1368 = vmatpush1.bf16.msra.mxu0 %v261
        %1369 = vmatprep.subr.bf16.mxu0 0
        %1370 = vmatpush1.bf16.msra.mxu0 %v262
        %1371 = vmatprep.subr.bf16.mxu0 0
        %1372 = vmatpush1.bf16.msra.mxu0 %v263
        %1373 = vmatprep.subr.bf16.mxu0 0
        %1374 = vmatpush1.bf16.msra.mxu0 %v264
        %1375 = vmatprep.subr.bf16.mxu0 0
        %1376 = vmatpush1.bf16.msra.mxu0 %v265
        %1377 = vmatprep.subr.bf16.mxu0 0
        %1378 = vmatpush1.bf16.msra.mxu0 %v266
        %1379 = vmatprep.subr.bf16.mxu0 0
        %1380 = vmatpush1.bf16.msra.mxu0 0
        %1381 = vmatprep.subr.bf16.mxu0 0
        %1382 = vmatpush1.bf16.msra.mxu0 0
        %1383 = vmatprep.subr.bf16.mxu0 0
        %1384 = vmatpush1.bf16.msra.mxu0 0
        %1385 = vmatprep.subr.bf16.mxu0 0
        %1386 = vmatpush1.bf16.msra.mxu0 0
        %1387 = vmatprep.subr.bf16.mxu0 0
        %1388 = vmatpush1.bf16.msra.mxu0 0
        %1389 = vmatprep.subr.bf16.mxu0 0
        %1390 = vmatpush1.bf16.msra.mxu0 0
        %1391 = vmatprep.subr.bf16.mxu0 0
        %1392 = vmatpush1.bf16.msra.mxu0 0
        %1393 = vmatprep.subr.bf16.mxu0 0
        %1394 = vmatpush1.bf16.msra.mxu0 0
        %1395 = vmatprep.mubr.bf16.mxu0 0
        %1396 = vmatmul.mubr.bf16.gmra.mrb[0].mxu0 %v1308
        %v1397 = vpop.f32.mrb[0].mxu0
        %v1398 = vadd.f32 0.0, %v1397
        %v1399 = vpop.f32.mrb[0].mxu0
        %v1400 = vpop.f32.mrb[0].mxu0
        %v1401 = vadd.f32 0.0, %v1400
        %v1402 = vpop.f32.mrb[0].mxu0
        %1403 = vmatprep.mubr.bf16.mxu0 0
        %1404 = vmatmul.mubr.bf16.gmra.mrb[0].mxu0 %v1309
        %v1405 = vpop.f32.mrb[0].mxu0
        %v1406 = vadd.f32 0.0, %v1405
        %v1407 = vpop.f32.mrb[0].mxu0
        %v1408 = vpop.f32.mrb[0].mxu0
        %v1409 = vpop.f32.mrb[0].mxu0
        %1410 = vdwg.mxu0
        %1411 = vmatprep.subr.bf16.mxu0 0
        %1412 = vmatpush1.bf16.msra.mxu0 %v235
        %1413 = vmatprep.subr.bf16.mxu0 0
        %1414 = vmatpush1.bf16.msra.mxu0 %v236
        %1415 = vmatprep.subr.bf16.mxu0 0
        %1416 = vmatpush1.bf16.msra.mxu0 %v237
        %1417 = vmatprep.subr.bf16.mxu0 0
        %1418 = vmatpush1.bf16.msra.mxu0 %v238
        %1419 = vmatprep.subr.bf16.mxu0 0
        %1420 = vmatpush1.bf16.msra.mxu0 %v239
        %1421 = vmatprep.subr.bf16.mxu0 0
        %1422 = vmatpush1.bf16.msra.mxu0 %v240
        %1423 = vmatprep.subr.bf16.mxu0 0
        %1424 = vmatpush1.bf16.msra.mxu0 %v241
        %1425 = vmatprep.subr.bf16.mxu0 0
        %1426 = vmatpush1.bf16.msra.mxu0 %v242
        %1427 = vmatprep.subr.bf16.mxu0 0
        %1428 = vmatpush1.bf16.msra.mxu0 0
        %1429 = vmatprep.subr.bf16.mxu0 0
        %1430 = vmatpush1.bf16.msra.mxu0 0
        %1431 = vmatprep.subr.bf16.mxu0 0
        %1432 = vmatpush1.bf16.msra.mxu0 0
        %1433 = vmatprep.subr.bf16.mxu0 0
        %1434 = vmatpush1.bf16.msra.mxu0 0
        %1435 = vmatprep.subr.bf16.mxu0 0
        %1436 = vmatpush1.bf16.msra.mxu0 0
        %1437 = vmatprep.subr.bf16.mxu0 0
        %1438 = vmatpush1.bf16.msra.mxu0 0
        %1439 = vmatprep.subr.bf16.mxu0 0
        %1440 = vmatpush1.bf16.msra.mxu0 0
        %1441 = vmatprep.subr.bf16.mxu0 0
        %1442 = vmatpush1.bf16.msra.mxu0 0
        %1443 = vmatprep.mubr.bf16.mxu0 0
        %1444 = vmatmul.mubr.bf16.gmra.mrb[0].mxu0 %v1361
        %v1445 = vpop.f32.mrb[0].mxu0
        %v1446 = vadd.f32 %v1398, %v1445
        %v1447 = vpop.f32.mrb[0].mxu0
        %v1448 = vpop.f32.mrb[0].mxu0
        %v1449 = vadd.f32 %v1401, %v1448
        %v1450 = vpop.f32.mrb[0].mxu0
        %1451 = vmatprep.mubr.bf16.mxu0 0
        %1452 = vmatmul.mubr.bf16.gmra.mrb[0].mxu0 %v1362
        %v1453 = vpop.f32.mrb[0].mxu0
        %v1454 = vadd.f32 %v1406, %v1453
        %v1455 = vpop.f32.mrb[0].mxu0
        %v1456 = vpop.f32.mrb[0].mxu0
        %v1457 = vpop.f32.mrb[0].mxu0
        %1458 = vdwg.mxu0
        %v1459 = vadd.f32 %v1446, %v420
        %v1460 = vadd.f32 %v1449, %v420
        %v1461 = vadd.f32 %v1454, %v420
        %v1462 = vxor.u32 %v1459, 2147483648
        %v1463 = vxor.u32 %v1460, 2147483648
        %v1464 = vxor.u32 %v1461, 2147483648
        %v1465 = vmul.f32 %v1462, 1.442695
        %v1466 = vpow.pop %v1465
        %v1467 = vmul.f32 %v1463, 1.442695
        %v1468 = vpow.pop %v1467
        %v1469 = vmul.f32 %v1464, 1.442695
        %v1470 = vpow.pop %v1469
        %v1471 = vadd.f32 %v1466, 1.0
        %v1472 = vadd.f32 %v1468, 1.0
        %v1473 = vadd.f32 %v1470, 1.0
        %v1474 = vrcp.pop %v1471
        %v1475 = vmul.f32 1.0, %v1474
        %v1476 = vrcp.pop %v1472
        %v1477 = vmul.f32 1.0, %v1476
        %v1478 = vrcp.pop %v1473
        %v1479 = vmul.f32 1.0, %v1478
        %1480 = vmatprep.subr.bf16.mxu0 0
        %1481 = vmatpush1.bf16.msra.mxu0 %v307
        %1482 = vmatprep.subr.bf16.mxu0 0
        %1483 = vmatpush1.bf16.msra.mxu0 %v308
        %1484 = vmatprep.subr.bf16.mxu0 0
        %1485 = vmatpush1.bf16.msra.mxu0 %v309
        %1486 = vmatprep.subr.bf16.mxu0 0
        %1487 = vmatpush1.bf16.msra.mxu0 %v310
        %1488 = vmatprep.subr.bf16.mxu0 0
        %1489 = vmatpush1.bf16.msra.mxu0 %v311
        %1490 = vmatprep.subr.bf16.mxu0 0
        %1491 = vmatpush1.bf16.msra.mxu0 %v312
        %1492 = vmatprep.subr.bf16.mxu0 0
        %1493 = vmatpush1.bf16.msra.mxu0 %v313
        %1494 = vmatprep.subr.bf16.mxu0 0
        %1495 = vmatpush1.bf16.msra.mxu0 %v314
        %1496 = vmatprep.subr.bf16.mxu0 0
        %1497 = vmatpush1.bf16.msra.mxu0 0
        %1498 = vmatprep.subr.bf16.mxu0 0
        %1499 = vmatpush1.bf16.msra.mxu0 0
        %1500 = vmatprep.subr.bf16.mxu0 0
        %1501 = vmatpush1.bf16.msra.mxu0 0
        %1502 = vmatprep.subr.bf16.mxu0 0
        %1503 = vmatpush1.bf16.msra.mxu0 0
        %1504 = vmatprep.subr.bf16.mxu0 0
        %1505 = vmatpush1.bf16.msra.mxu0 0
        %1506 = vmatprep.subr.bf16.mxu0 0
        %1507 = vmatpush1.bf16.msra.mxu0 0
        %1508 = vmatprep.subr.bf16.mxu0 0
        %1509 = vmatpush1.bf16.msra.mxu0 0
        %1510 = vmatprep.subr.bf16.mxu0 0
        %1511 = vmatpush1.bf16.msra.mxu0 0
        %1512 = vmatprep.mubr.bf16.mxu0 0
        %1513 = vmatmul.mubr.bf16.gmra.mrb[0].mxu0 %v1308
        %v1514 = vpop.f32.mrb[0].mxu0
        %v1515 = vadd.f32 0.0, %v1514
        %v1516 = vpop.f32.mrb[0].mxu0
        %v1517 = vpop.f32.mrb[0].mxu0
        %v1518 = vadd.f32 0.0, %v1517
        %v1519 = vpop.f32.mrb[0].mxu0
        %1520 = vmatprep.mubr.bf16.mxu0 0
        %1521 = vmatmul.mubr.bf16.gmra.mrb[0].mxu0 %v1309
        %v1522 = vpop.f32.mrb[0].mxu0
        %v1523 = vadd.f32 0.0, %v1522
        %v1524 = vpop.f32.mrb[0].mxu0
        %v1525 = vpop.f32.mrb[0].mxu0
        %v1526 = vpop.f32.mrb[0].mxu0
        %1527 = vdwg.mxu0
        %1528 = vmatprep.subr.bf16.mxu0 0
        %1529 = vmatpush1.bf16.msra.mxu0 %v283
        %1530 = vmatprep.subr.bf16.mxu0 0
        %1531 = vmatpush1.bf16.msra.mxu0 %v284
        %1532 = vmatprep.subr.bf16.mxu0 0
        %1533 = vmatpush1.bf16.msra.mxu0 %v285
        %1534 = vmatprep.subr.bf16.mxu0 0
        %1535 = vmatpush1.bf16.msra.mxu0 %v286
        %1536 = vmatprep.subr.bf16.mxu0 0
        %1537 = vmatpush1.bf16.msra.mxu0 %v287
        %1538 = vmatprep.subr.bf16.mxu0 0
        %1539 = vmatpush1.bf16.msra.mxu0 %v288
        %1540 = vmatprep.subr.bf16.mxu0 0
        %1541 = vmatpush1.bf16.msra.mxu0 %v289
        %1542 = vmatprep.subr.bf16.mxu0 0
        %1543 = vmatpush1.bf16.msra.mxu0 %v290
        %1544 = vmatprep.subr.bf16.mxu0 0
        %1545 = vmatpush1.bf16.msra.mxu0 0
        %1546 = vmatprep.subr.bf16.mxu0 0
        %1547 = vmatpush1.bf16.msra.mxu0 0
        %1548 = vmatprep.subr.bf16.mxu0 0
        %1549 = vmatpush1.bf16.msra.mxu0 0
        %1550 = vmatprep.subr.bf16.mxu0 0
        %1551 = vmatpush1.bf16.msra.mxu0 0
        %1552 = vmatprep.subr.bf16.mxu0 0
        %1553 = vmatpush1.bf16.msra.mxu0 0
        %1554 = vmatprep.subr.bf16.mxu0 0
        %1555 = vmatpush1.bf16.msra.mxu0 0
        %1556 = vmatprep.subr.bf16.mxu0 0
        %1557 = vmatpush1.bf16.msra.mxu0 0
        %1558 = vmatprep.subr.bf16.mxu0 0
        %1559 = vmatpush1.bf16.msra.mxu0 0
        %1560 = vmatprep.mubr.bf16.mxu0 0
        %1561 = vmatmul.mubr.bf16.gmra.mrb[0].mxu0 %v1361
        %v1562 = vpop.f32.mrb[0].mxu0
        %v1563 = vadd.f32 %v1515, %v1562
        %v1564 = vpop.f32.mrb[0].mxu0
        %v1565 = vpop.f32.mrb[0].mxu0
        %v1566 = vadd.f32 %v1518, %v1565
        %v1567 = vpop.f32.mrb[0].mxu0
        %1568 = vmatprep.mubr.bf16.mxu0 0
        %1569 = vmatmul.mubr.bf16.gmra.mrb[0].mxu0 %v1362
        %v1570 = vpop.f32.mrb[0].mxu0
        %v1571 = vadd.f32 %v1523, %v1570
        %v1572 = vpop.f32.mrb[0].mxu0
        %v1573 = vpop.f32.mrb[0].mxu0
        %v1574 = vpop.f32.mrb[0].mxu0
        %1575 = vdwg.mxu0
        %v1576 = vadd.f32 %v1563, %v425
        %v1577 = vadd.f32 %v1566, %v425
        %v1578 = vadd.f32 %v1571, %v425
        %v1579 = vxor.u32 %v1576, 2147483648
        %v1580 = vxor.u32 %v1577, 2147483648
        %v1581 = vxor.u32 %v1578, 2147483648
        %v1582 = vmul.f32 %v1579, 1.442695
        %v1583 = vpow.pop %v1582
        %v1584 = vmul.f32 %v1580, 1.442695
        %v1585 = vpow.pop %v1584
        %v1586 = vmul.f32 %v1581, 1.442695
        %v1587 = vpow.pop %v1586
        %v1588 = vadd.f32 %v1583, 1.0
        %v1589 = vadd.f32 %v1585, 1.0
        %v1590 = vadd.f32 %v1587, 1.0
        %v1591 = vrcp.pop %v1588
        %v1592 = vmul.f32 1.0, %v1591
        %v1593 = vrcp.pop %v1589
        %v1594 = vmul.f32 1.0, %v1593
        %v1595 = vrcp.pop %v1590
        %v1596 = vmul.f32 1.0, %v1595
        %v1597 = vmul.f32 %v1475, %v1305
        %v1598 = vmul.f32 %v1477, %v1306
        %v1599 = vmul.f32 %v1479, %v1307
        %v1600 = vpack.c.bf16 %v1598, %v1597
        %v1601 = vpack.c.bf16 %v1599, %v1599
        %1602 = vmatprep.subr.bf16.mxu0 0
        %1603 = vmatpush1.bf16.msra.mxu0 %v355
        %1604 = vmatprep.subr.bf16.mxu0 0
        %1605 = vmatpush1.bf16.msra.mxu0 %v356
        %1606 = vmatprep.subr.bf16.mxu0 0
        %1607 = vmatpush1.bf16.msra.mxu0 %v357
        %1608 = vmatprep.subr.bf16.mxu0 0
        %1609 = vmatpush1.bf16.msra.mxu0 %v358
        %1610 = vmatprep.subr.bf16.mxu0 0
        %1611 = vmatpush1.bf16.msra.mxu0 %v359
        %1612 = vmatprep.subr.bf16.mxu0 0
        %1613 = vmatpush1.bf16.msra.mxu0 %v360
        %1614 = vmatprep.subr.bf16.mxu0 0
        %1615 = vmatpush1.bf16.msra.mxu0 %v361
        %1616 = vmatprep.subr.bf16.mxu0 0
        %1617 = vmatpush1.bf16.msra.mxu0 %v362
        %1618 = vmatprep.subr.bf16.mxu0 0
        %1619 = vmatpush1.bf16.msra.mxu0 0
        %1620 = vmatprep.subr.bf16.mxu0 0
        %1621 = vmatpush1.bf16.msra.mxu0 0
        %1622 = vmatprep.subr.bf16.mxu0 0
        %1623 = vmatpush1.bf16.msra.mxu0 0
        %1624 = vmatprep.subr.bf16.mxu0 0
        %1625 = vmatpush1.bf16.msra.mxu0 0
        %1626 = vmatprep.subr.bf16.mxu0 0
        %1627 = vmatpush1.bf16.msra.mxu0 0
        %1628 = vmatprep.subr.bf16.mxu0 0
        %1629 = vmatpush1.bf16.msra.mxu0 0
        %1630 = vmatprep.subr.bf16.mxu0 0
        %1631 = vmatpush1.bf16.msra.mxu0 0
        %1632 = vmatprep.subr.bf16.mxu0 0
        %1633 = vmatpush1.bf16.msra.mxu0 0
        %1634 = vmatprep.mubr.bf16.mxu0 0
        %1635 = vmatmul.mubr.bf16.gmra.mrb[0].mxu0 %v1600
        %v1636 = vpop.f32.mrb[0].mxu0
        %v1637 = vadd.f32 0.0, %v1636
        %v1638 = vpop.f32.mrb[0].mxu0
        %v1639 = vpop.f32.mrb[0].mxu0
        %v1640 = vadd.f32 0.0, %v1639
        %v1641 = vpop.f32.mrb[0].mxu0
        %1642 = vmatprep.mubr.bf16.mxu0 0
        %1643 = vmatmul.mubr.bf16.gmra.mrb[0].mxu0 %v1601
        %v1644 = vpop.f32.mrb[0].mxu0
        %v1645 = vadd.f32 0.0, %v1644
        %v1646 = vpop.f32.mrb[0].mxu0
        %v1647 = vpop.f32.mrb[0].mxu0
        %v1648 = vpop.f32.mrb[0].mxu0
        %1649 = vdwg.mxu0
        %1650 = vmatprep.subr.bf16.mxu0 0
        %1651 = vmatpush1.bf16.msra.mxu0 %v331
        %1652 = vmatprep.subr.bf16.mxu0 0
        %1653 = vmatpush1.bf16.msra.mxu0 %v332
        %1654 = vmatprep.subr.bf16.mxu0 0
        %1655 = vmatpush1.bf16.msra.mxu0 %v333
        %1656 = vmatprep.subr.bf16.mxu0 0
        %1657 = vmatpush1.bf16.msra.mxu0 %v334
        %1658 = vmatprep.subr.bf16.mxu0 0
        %1659 = vmatpush1.bf16.msra.mxu0 %v335
        %1660 = vmatprep.subr.bf16.mxu0 0
        %1661 = vmatpush1.bf16.msra.mxu0 %v336
        %1662 = vmatprep.subr.bf16.mxu0 0
        %1663 = vmatpush1.bf16.msra.mxu0 %v337
        %1664 = vmatprep.subr.bf16.mxu0 0
        %1665 = vmatpush1.bf16.msra.mxu0 %v338
        %1666 = vmatprep.subr.bf16.mxu0 0
        %1667 = vmatpush1.bf16.msra.mxu0 0
        %1668 = vmatprep.subr.bf16.mxu0 0
        %1669 = vmatpush1.bf16.msra.mxu0 0
        %1670 = vmatprep.subr.bf16.mxu0 0
        %1671 = vmatpush1.bf16.msra.mxu0 0
        %1672 = vmatprep.subr.bf16.mxu0 0
        %1673 = vmatpush1.bf16.msra.mxu0 0
        %1674 = vmatprep.subr.bf16.mxu0 0
        %1675 = vmatpush1.bf16.msra.mxu0 0
        %1676 = vmatprep.subr.bf16.mxu0 0
        %1677 = vmatpush1.bf16.msra.mxu0 0
        %1678 = vmatprep.subr.bf16.mxu0 0
        %1679 = vmatpush1.bf16.msra.mxu0 0
        %1680 = vmatprep.subr.bf16.mxu0 0
        %1681 = vmatpush1.bf16.msra.mxu0 0
        %1682 = vmatprep.mubr.bf16.mxu0 0
        %1683 = vmatmul.mubr.bf16.gmra.mrb[0].mxu0 %v1361
        %v1684 = vpop.f32.mrb[0].mxu0
        %v1685 = vadd.f32 %v1637, %v1684
        %v1686 = vpop.f32.mrb[0].mxu0
        %v1687 = vpop.f32.mrb[0].mxu0
        %v1688 = vadd.f32 %v1640, %v1687
        %v1689 = vpop.f32.mrb[0].mxu0
        %1690 = vmatprep.mubr.bf16.mxu0 0
        %1691 = vmatmul.mubr.bf16.gmra.mrb[0].mxu0 %v1362
        %v1692 = vpop.f32.mrb[0].mxu0
        %v1693 = vadd.f32 %v1645, %v1692
        %v1694 = vpop.f32.mrb[0].mxu0
        %v1695 = vpop.f32.mrb[0].mxu0
        %v1696 = vpop.f32.mrb[0].mxu0
        %1697 = vdwg.mxu0
        %v1698 = vadd.f32 %v1685, %v430
        %v1699 = vadd.f32 %v1688, %v430
        %v1700 = vadd.f32 %v1693, %v430
        %v1701 = vtanh.pop %v1698
        %v1702 = vtanh.pop %v1699
        %v1703 = vtanh.pop %v1700
        %v1704 = vsub.f32 1.0, %v1592
        %v1705 = vsub.f32 1.0, %v1594
        %v1706 = vsub.f32 1.0, %v1596
        %v1707 = vmul.f32 %v1704, %v1305
        %v1708 = vmul.f32 %v1705, %v1306
        %v1709 = vmul.f32 %v1706, %v1307
        %v1710 = vmul.f32 %v1592, %v1701
        %v1711 = vmul.f32 %v1594, %v1702
        %v1712 = vmul.f32 %v1596, %v1703
        %v1713 = vadd.f32 %v1707, %v1710
        %v1714 = vadd.f32 %v1708, %v1711
        %v1715 = vadd.f32 %v1709, %v1712
        %v1716 = vpack.c.bf16 %v1714, %v1713
        %v1717 = vpack.c.bf16 %v1715, %v1715
        %v1719 = vsel %vm493, %v1717, 0
        %1721 = vmatprep.subr.bf16.mxu0 0
        %1722 = vmatpush1.bf16.msra.mxu0 %v1716
        %1723 = vmatprep.subr.bf16.mxu0 0
        %1724 = vmatpush1.bf16.msra.mxu0 %v1719
        %1725 = vmatprep.subr.bf16.mxu0 0
        %1726 = vmatpush1.bf16.msra.mxu0 0
        %1727 = vmatprep.subr.bf16.mxu0 0
        %1728 = vmatpush1.bf16.msra.mxu0 0
        %1729 = vmatprep.subr.bf16.mxu0 0
        %1730 = vmatpush1.bf16.msra.mxu0 0
        %1731 = vmatprep.subr.bf16.mxu0 0
        %1732 = vmatpush1.bf16.msra.mxu0 0
        %1733 = vmatprep.subr.bf16.mxu0 0
        %1734 = vmatpush1.bf16.msra.mxu0 0
        %1735 = vmatprep.subr.bf16.mxu0 0
        %1736 = vmatpush1.bf16.msra.mxu0 0
        %1737 = vmatprep.subr.bf16.mxu0 0
        %1738 = vmatpush1.bf16.msra.mxu0 0
        %1739 = vmatprep.subr.bf16.mxu0 0
        %1740 = vmatpush1.bf16.msra.mxu0 0
        %1741 = vmatprep.subr.bf16.mxu0 0
        %1742 = vmatpush1.bf16.msra.mxu0 0
        %1743 = vmatprep.subr.bf16.mxu0 0
        %1744 = vmatpush1.bf16.msra.mxu0 0
        %1745 = vmatprep.subr.bf16.mxu0 0
        %1746 = vmatpush1.bf16.msra.mxu0 0
        %1747 = vmatprep.subr.bf16.mxu0 0
        %1748 = vmatpush1.bf16.msra.mxu0 0
        %1749 = vmatprep.subr.bf16.mxu0 0
        %1750 = vmatpush1.bf16.msra.mxu0 0
        %1751 = vmatprep.subr.bf16.mxu0 0
        %1752 = vmatpush1.bf16.msra.mxu0 0
        %1753 = vmatprep.mubr.bf16.mxu0 0
        %1754 = vmatmul.mubr.bf16.gmra.mrb[0].mxu0 %v488
        %v1755 = vpop.f32.mrb[0].mxu0
        %v1756 = vadd.f32 0.0, %v1755
        %v1757 = vpop.f32.mrb[0].mxu0
        %v1758 = vpop.f32.mrb[0].mxu0
        %v1759 = vadd.f32 0.0, %v1758
        %v1760 = vpop.f32.mrb[0].mxu0
        %1761 = vmatprep.mubr.bf16.mxu0 0
        %1762 = vmatmul.mubr.bf16.gmra.mrb[0].mxu0 %v491
        %v1763 = vpop.f32.mrb[0].mxu0
        %v1764 = vadd.f32 0.0, %v1763
        %v1765 = vpop.f32.mrb[0].mxu0
        %v1766 = vpop.f32.mrb[0].mxu0
        %v1767 = vpop.f32.mrb[0].mxu0
        %1768 = vdwg.mxu0
        %v1769 = vpack.c.bf16 %v1759, %v1756
        %v1770 = vpack.c.bf16 %v1764, %v1764
        %1771 = vmatprep.subr.bf16.mxu0 0
        %1772 = vmatpush1.bf16.msra.mxu0 %v259
        %1773 = vmatprep.subr.bf16.mxu0 0
        %1774 = vmatpush1.bf16.msra.mxu0 %v260
        %1775 = vmatprep.subr.bf16.mxu0 0
        %1776 = vmatpush1.bf16.msra.mxu0 %v261
        %1777 = vmatprep.subr.bf16.mxu0 0
        %1778 = vmatpush1.bf16.msra.mxu0 %v262
        %1779 = vmatprep.subr.bf16.mxu0 0
        %1780 = vmatpush1.bf16.msra.mxu0 %v263
        %1781 = vmatprep.subr.bf16.mxu0 0
        %1782 = vmatpush1.bf16.msra.mxu0 %v264
        %1783 = vmatprep.subr.bf16.mxu0 0
        %1784 = vmatpush1.bf16.msra.mxu0 %v265
        %1785 = vmatprep.subr.bf16.mxu0 0
        %1786 = vmatpush1.bf16.msra.mxu0 %v266
        %1787 = vmatprep.subr.bf16.mxu0 0
        %1788 = vmatpush1.bf16.msra.mxu0 0
        %1789 = vmatprep.subr.bf16.mxu0 0
        %1790 = vmatpush1.bf16.msra.mxu0 0
        %1791 = vmatprep.subr.bf16.mxu0 0
        %1792 = vmatpush1.bf16.msra.mxu0 0
        %1793 = vmatprep.subr.bf16.mxu0 0
        %1794 = vmatpush1.bf16.msra.mxu0 0
        %1795 = vmatprep.subr.bf16.mxu0 0
        %1796 = vmatpush1.bf16.msra.mxu0 0
        %1797 = vmatprep.subr.bf16.mxu0 0
        %1798 = vmatpush1.bf16.msra.mxu0 0
        %1799 = vmatprep.subr.bf16.mxu0 0
        %1800 = vmatpush1.bf16.msra.mxu0 0
        %1801 = vmatprep.subr.bf16.mxu0 0
        %1802 = vmatpush1.bf16.msra.mxu0 0
        %1803 = vmatprep.mubr.bf16.mxu0 0
        %1804 = vmatmul.mubr.bf16.gmra.mrb[0].mxu0 %v1716
        %v1805 = vpop.f32.mrb[0].mxu0
        %v1806 = vadd.f32 0.0, %v1805
        %v1807 = vpop.f32.mrb[0].mxu0
        %v1808 = vpop.f32.mrb[0].mxu0
        %v1809 = vadd.f32 0.0, %v1808
        %v1810 = vpop.f32.mrb[0].mxu0
        %1811 = vmatprep.mubr.bf16.mxu0 0
        %1812 = vmatmul.mubr.bf16.gmra.mrb[0].mxu0 %v1717
        %v1813 = vpop.f32.mrb[0].mxu0
        %v1814 = vadd.f32 0.0, %v1813
        %v1815 = vpop.f32.mrb[0].mxu0
        %v1816 = vpop.f32.mrb[0].mxu0
        %v1817 = vpop.f32.mrb[0].mxu0
        %1818 = vdwg.mxu0
        %1819 = vmatprep.subr.bf16.mxu0 0
        %1820 = vmatpush1.bf16.msra.mxu0 %v235
        %1821 = vmatprep.subr.bf16.mxu0 0
        %1822 = vmatpush1.bf16.msra.mxu0 %v236
        %1823 = vmatprep.subr.bf16.mxu0 0
        %1824 = vmatpush1.bf16.msra.mxu0 %v237
        %1825 = vmatprep.subr.bf16.mxu0 0
        %1826 = vmatpush1.bf16.msra.mxu0 %v238
        %1827 = vmatprep.subr.bf16.mxu0 0
        %1828 = vmatpush1.bf16.msra.mxu0 %v239
        %1829 = vmatprep.subr.bf16.mxu0 0
        %1830 = vmatpush1.bf16.msra.mxu0 %v240
        %1831 = vmatprep.subr.bf16.mxu0 0
        %1832 = vmatpush1.bf16.msra.mxu0 %v241
        %1833 = vmatprep.subr.bf16.mxu0 0
        %1834 = vmatpush1.bf16.msra.mxu0 %v242
        %1835 = vmatprep.subr.bf16.mxu0 0
        %1836 = vmatpush1.bf16.msra.mxu0 0
        %1837 = vmatprep.subr.bf16.mxu0 0
        %1838 = vmatpush1.bf16.msra.mxu0 0
        %1839 = vmatprep.subr.bf16.mxu0 0
        %1840 = vmatpush1.bf16.msra.mxu0 0
        %1841 = vmatprep.subr.bf16.mxu0 0
        %1842 = vmatpush1.bf16.msra.mxu0 0
        %1843 = vmatprep.subr.bf16.mxu0 0
        %1844 = vmatpush1.bf16.msra.mxu0 0
        %1845 = vmatprep.subr.bf16.mxu0 0
        %1846 = vmatpush1.bf16.msra.mxu0 0
        %1847 = vmatprep.subr.bf16.mxu0 0
        %1848 = vmatpush1.bf16.msra.mxu0 0
        %1849 = vmatprep.subr.bf16.mxu0 0
        %1850 = vmatpush1.bf16.msra.mxu0 0
        %1851 = vmatprep.mubr.bf16.mxu0 0
        %1852 = vmatmul.mubr.bf16.gmra.mrb[0].mxu0 %v1769
        %v1853 = vpop.f32.mrb[0].mxu0
        %v1854 = vadd.f32 %v1806, %v1853
        %v1855 = vpop.f32.mrb[0].mxu0
        %v1856 = vpop.f32.mrb[0].mxu0
        %v1857 = vadd.f32 %v1809, %v1856
        %v1858 = vpop.f32.mrb[0].mxu0
        %1859 = vmatprep.mubr.bf16.mxu0 0
        %1860 = vmatmul.mubr.bf16.gmra.mrb[0].mxu0 %v1770
        %v1861 = vpop.f32.mrb[0].mxu0
        %v1862 = vadd.f32 %v1814, %v1861
        %v1863 = vpop.f32.mrb[0].mxu0
        %v1864 = vpop.f32.mrb[0].mxu0
        %v1865 = vpop.f32.mrb[0].mxu0
        %1866 = vdwg.mxu0
        %v1867 = vadd.f32 %v1854, %v420
        %v1868 = vadd.f32 %v1857, %v420
        %v1869 = vadd.f32 %v1862, %v420
        %v1870 = vxor.u32 %v1867, 2147483648
        %v1871 = vxor.u32 %v1868, 2147483648
        %v1872 = vxor.u32 %v1869, 2147483648
        %v1873 = vmul.f32 %v1870, 1.442695
        %v1874 = vpow.pop %v1873
        %v1875 = vmul.f32 %v1871, 1.442695
        %v1876 = vpow.pop %v1875
        %v1877 = vmul.f32 %v1872, 1.442695
        %v1878 = vpow.pop %v1877
        %v1879 = vadd.f32 %v1874, 1.0
        %v1880 = vadd.f32 %v1876, 1.0
        %v1881 = vadd.f32 %v1878, 1.0
        %v1882 = vrcp.pop %v1879
        %v1883 = vmul.f32 1.0, %v1882
        %v1884 = vrcp.pop %v1880
        %v1885 = vmul.f32 1.0, %v1884
        %v1886 = vrcp.pop %v1881
        %v1887 = vmul.f32 1.0, %v1886
        %1888 = vmatprep.subr.bf16.mxu0 0
        %1889 = vmatpush1.bf16.msra.mxu0 %v307
        %1890 = vmatprep.subr.bf16.mxu0 0
        %1891 = vmatpush1.bf16.msra.mxu0 %v308
        %1892 = vmatprep.subr.bf16.mxu0 0
        %1893 = vmatpush1.bf16.msra.mxu0 %v309
        %1894 = vmatprep.subr.bf16.mxu0 0
        %1895 = vmatpush1.bf16.msra.mxu0 %v310
        %1896 = vmatprep.subr.bf16.mxu0 0
        %1897 = vmatpush1.bf16.msra.mxu0 %v311
        %1898 = vmatprep.subr.bf16.mxu0 0
        %1899 = vmatpush1.bf16.msra.mxu0 %v312
        %1900 = vmatprep.subr.bf16.mxu0 0
        %1901 = vmatpush1.bf16.msra.mxu0 %v313
        %1902 = vmatprep.subr.bf16.mxu0 0
        %1903 = vmatpush1.bf16.msra.mxu0 %v314
        %1904 = vmatprep.subr.bf16.mxu0 0
        %1905 = vmatpush1.bf16.msra.mxu0 0
        %1906 = vmatprep.subr.bf16.mxu0 0
        %1907 = vmatpush1.bf16.msra.mxu0 0
        %1908 = vmatprep.subr.bf16.mxu0 0
        %1909 = vmatpush1.bf16.msra.mxu0 0
        %1910 = vmatprep.subr.bf16.mxu0 0
        %1911 = vmatpush1.bf16.msra.mxu0 0
        %1912 = vmatprep.subr.bf16.mxu0 0
        %1913 = vmatpush1.bf16.msra.mxu0 0
        %1914 = vmatprep.subr.bf16.mxu0 0
        %1915 = vmatpush1.bf16.msra.mxu0 0
        %1916 = vmatprep.subr.bf16.mxu0 0
        %1917 = vmatpush1.bf16.msra.mxu0 0
        %1918 = vmatprep.subr.bf16.mxu0 0
        %1919 = vmatpush1.bf16.msra.mxu0 0
        %1920 = vmatprep.mubr.bf16.mxu0 0
        %1921 = vmatmul.mubr.bf16.gmra.mrb[0].mxu0 %v1716
        %v1922 = vpop.f32.mrb[0].mxu0
        %v1923 = vadd.f32 0.0, %v1922
        %v1924 = vpop.f32.mrb[0].mxu0
        %v1925 = vpop.f32.mrb[0].mxu0
        %v1926 = vadd.f32 0.0, %v1925
        %v1927 = vpop.f32.mrb[0].mxu0
        %1928 = vmatprep.mubr.bf16.mxu0 0
        %1929 = vmatmul.mubr.bf16.gmra.mrb[0].mxu0 %v1717
        %v1930 = vpop.f32.mrb[0].mxu0
        %v1931 = vadd.f32 0.0, %v1930
        %v1932 = vpop.f32.mrb[0].mxu0
        %v1933 = vpop.f32.mrb[0].mxu0
        %v1934 = vpop.f32.mrb[0].mxu0
        %1935 = vdwg.mxu0
        %1936 = vmatprep.subr.bf16.mxu0 0
        %1937 = vmatpush1.bf16.msra.mxu0 %v283
        %1938 = vmatprep.subr.bf16.mxu0 0
        %1939 = vmatpush1.bf16.msra.mxu0 %v284
        %1940 = vmatprep.subr.bf16.mxu0 0
        %1941 = vmatpush1.bf16.msra.mxu0 %v285
        %1942 = vmatprep.subr.bf16.mxu0 0
        %1943 = vmatpush1.bf16.msra.mxu0 %v286
        %1944 = vmatprep.subr.bf16.mxu0 0
        %1945 = vmatpush1.bf16.msra.mxu0 %v287
        %1946 = vmatprep.subr.bf16.mxu0 0
        %1947 = vmatpush1.bf16.msra.mxu0 %v288
        %1948 = vmatprep.subr.bf16.mxu0 0
        %1949 = vmatpush1.bf16.msra.mxu0 %v289
        %1950 = vmatprep.subr.bf16.mxu0 0
        %1951 = vmatpush1.bf16.msra.mxu0 %v290
        %1952 = vmatprep.subr.bf16.mxu0 0
        %1953 = vmatpush1.bf16.msra.mxu0 0
        %1954 = vmatprep.subr.bf16.mxu0 0
        %1955 = vmatpush1.bf16.msra.mxu0 0
        %1956 = vmatprep.subr.bf16.mxu0 0
        %1957 = vmatpush1.bf16.msra.mxu0 0
        %1958 = vmatprep.subr.bf16.mxu0 0
        %1959 = vmatpush1.bf16.msra.mxu0 0
        %1960 = vmatprep.subr.bf16.mxu0 0
        %1961 = vmatpush1.bf16.msra.mxu0 0
        %1962 = vmatprep.subr.bf16.mxu0 0
        %1963 = vmatpush1.bf16.msra.mxu0 0
        %1964 = vmatprep.subr.bf16.mxu0 0
        %1965 = vmatpush1.bf16.msra.mxu0 0
        %1966 = vmatprep.subr.bf16.mxu0 0
        %1967 = vmatpush1.bf16.msra.mxu0 0
        %1968 = vmatprep.mubr.bf16.mxu0 0
        %1969 = vmatmul.mubr.bf16.gmra.mrb[0].mxu0 %v1769
        %v1970 = vpop.f32.mrb[0].mxu0
        %v1971 = vadd.f32 %v1923, %v1970
        %v1972 = vpop.f32.mrb[0].mxu0
        %v1973 = vpop.f32.mrb[0].mxu0
        %v1974 = vadd.f32 %v1926, %v1973
        %v1975 = vpop.f32.mrb[0].mxu0
        %1976 = vmatprep.mubr.bf16.mxu0 0
        %1977 = vmatmul.mubr.bf16.gmra.mrb[0].mxu0 %v1770
        %v1978 = vpop.f32.mrb[0].mxu0
        %v1979 = vadd.f32 %v1931, %v1978
        %v1980 = vpop.f32.mrb[0].mxu0
        %v1981 = vpop.f32.mrb[0].mxu0
        %v1982 = vpop.f32.mrb[0].mxu0
        %1983 = vdwg.mxu0
        %v1984 = vadd.f32 %v1971, %v425
        %v1985 = vadd.f32 %v1974, %v425
        %v1986 = vadd.f32 %v1979, %v425
        %v1987 = vxor.u32 %v1984, 2147483648
        %v1988 = vxor.u32 %v1985, 2147483648
        %v1989 = vxor.u32 %v1986, 2147483648
        %v1990 = vmul.f32 %v1987, 1.442695
        %v1991 = vpow.pop %v1990
        %v1992 = vmul.f32 %v1988, 1.442695
        %v1993 = vpow.pop %v1992
        %v1994 = vmul.f32 %v1989, 1.442695
        %v1995 = vpow.pop %v1994
        %v1996 = vadd.f32 %v1991, 1.0
        %v1997 = vadd.f32 %v1993, 1.0
        %v1998 = vadd.f32 %v1995, 1.0
        %v1999 = vrcp.pop %v1996
        %v2000 = vmul.f32 1.0, %v1999
        %v2001 = vrcp.pop %v1997
        %v2002 = vmul.f32 1.0, %v2001
        %v2003 = vrcp.pop %v1998
        %v2004 = vmul.f32 1.0, %v2003
        %v2005 = vmul.f32 %v1883, %v1713
        %v2006 = vmul.f32 %v1885, %v1714
        %v2007 = vmul.f32 %v1887, %v1715
        %v2008 = vpack.c.bf16 %v2006, %v2005
        %v2009 = vpack.c.bf16 %v2007, %v2007
        %2010 = vmatprep.subr.bf16.mxu0 0
        %2011 = vmatpush1.bf16.msra.mxu0 %v355
        %2012 = vmatprep.subr.bf16.mxu0 0
        %2013 = vmatpush1.bf16.msra.mxu0 %v356
        %2014 = vmatprep.subr.bf16.mxu0 0
        %2015 = vmatpush1.bf16.msra.mxu0 %v357
        %2016 = vmatprep.subr.bf16.mxu0 0
        %2017 = vmatpush1.bf16.msra.mxu0 %v358
        %2018 = vmatprep.subr.bf16.mxu0 0
        %2019 = vmatpush1.bf16.msra.mxu0 %v359
        %2020 = vmatprep.subr.bf16.mxu0 0
        %2021 = vmatpush1.bf16.msra.mxu0 %v360
        %2022 = vmatprep.subr.bf16.mxu0 0
        %2023 = vmatpush1.bf16.msra.mxu0 %v361
        %2024 = vmatprep.subr.bf16.mxu0 0
        %2025 = vmatpush1.bf16.msra.mxu0 %v362
        %2026 = vmatprep.subr.bf16.mxu0 0
        %2027 = vmatpush1.bf16.msra.mxu0 0
        %2028 = vmatprep.subr.bf16.mxu0 0
        %2029 = vmatpush1.bf16.msra.mxu0 0
        %2030 = vmatprep.subr.bf16.mxu0 0
        %2031 = vmatpush1.bf16.msra.mxu0 0
        %2032 = vmatprep.subr.bf16.mxu0 0
        %2033 = vmatpush1.bf16.msra.mxu0 0
        %2034 = vmatprep.subr.bf16.mxu0 0
        %2035 = vmatpush1.bf16.msra.mxu0 0
        %2036 = vmatprep.subr.bf16.mxu0 0
        %2037 = vmatpush1.bf16.msra.mxu0 0
        %2038 = vmatprep.subr.bf16.mxu0 0
        %2039 = vmatpush1.bf16.msra.mxu0 0
        %2040 = vmatprep.subr.bf16.mxu0 0
        %2041 = vmatpush1.bf16.msra.mxu0 0
        %2042 = vmatprep.mubr.bf16.mxu0 0
        %2043 = vmatmul.mubr.bf16.gmra.mrb[0].mxu0 %v2008
        %v2044 = vpop.f32.mrb[0].mxu0
        %v2045 = vadd.f32 0.0, %v2044
        %v2046 = vpop.f32.mrb[0].mxu0
        %v2047 = vpop.f32.mrb[0].mxu0
        %v2048 = vadd.f32 0.0, %v2047
        %v2049 = vpop.f32.mrb[0].mxu0
        %2050 = vmatprep.mubr.bf16.mxu0 0
        %2051 = vmatmul.mubr.bf16.gmra.mrb[0].mxu0 %v2009
        %v2052 = vpop.f32.mrb[0].mxu0
        %v2053 = vadd.f32 0.0, %v2052
        %v2054 = vpop.f32.mrb[0].mxu0
        %v2055 = vpop.f32.mrb[0].mxu0
        %v2056 = vpop.f32.mrb[0].mxu0
        %2057 = vdwg.mxu0
        %2058 = vmatprep.subr.bf16.mxu0 0
        %2059 = vmatpush1.bf16.msra.mxu0 %v331
        %2060 = vmatprep.subr.bf16.mxu0 0
        %2061 = vmatpush1.bf16.msra.mxu0 %v332
        %2062 = vmatprep.subr.bf16.mxu0 0
        %2063 = vmatpush1.bf16.msra.mxu0 %v333
        %2064 = vmatprep.subr.bf16.mxu0 0
        %2065 = vmatpush1.bf16.msra.mxu0 %v334
        %2066 = vmatprep.subr.bf16.mxu0 0
        %2067 = vmatpush1.bf16.msra.mxu0 %v335
        %2068 = vmatprep.subr.bf16.mxu0 0
        %2069 = vmatpush1.bf16.msra.mxu0 %v336
        %2070 = vmatprep.subr.bf16.mxu0 0
        %2071 = vmatpush1.bf16.msra.mxu0 %v337
        %2072 = vmatprep.subr.bf16.mxu0 0
        %2073 = vmatpush1.bf16.msra.mxu0 %v338
        %2074 = vmatprep.subr.bf16.mxu0 0
        %2075 = vmatpush1.bf16.msra.mxu0 0
        %2076 = vmatprep.subr.bf16.mxu0 0
        %2077 = vmatpush1.bf16.msra.mxu0 0
        %2078 = vmatprep.subr.bf16.mxu0 0
        %2079 = vmatpush1.bf16.msra.mxu0 0
        %2080 = vmatprep.subr.bf16.mxu0 0
        %2081 = vmatpush1.bf16.msra.mxu0 0
        %2082 = vmatprep.subr.bf16.mxu0 0
        %2083 = vmatpush1.bf16.msra.mxu0 0
        %2084 = vmatprep.subr.bf16.mxu0 0
        %2085 = vmatpush1.bf16.msra.mxu0 0
        %2086 = vmatprep.subr.bf16.mxu0 0
        %2087 = vmatpush1.bf16.msra.mxu0 0
        %2088 = vmatprep.subr.bf16.mxu0 0
        %2089 = vmatpush1.bf16.msra.mxu0 0
        %2090 = vmatprep.mubr.bf16.mxu0 0
        %2091 = vmatmul.mubr.bf16.gmra.mrb[0].mxu0 %v1769
        %v2092 = vpop.f32.mrb[0].mxu0
        %v2093 = vadd.f32 %v2045, %v2092
        %v2094 = vpop.f32.mrb[0].mxu0
        %v2095 = vpop.f32.mrb[0].mxu0
        %v2096 = vadd.f32 %v2048, %v2095
        %v2097 = vpop.f32.mrb[0].mxu0
        %2098 = vmatprep.mubr.bf16.mxu0 0
        %2099 = vmatmul.mubr.bf16.gmra.mrb[0].mxu0 %v1770
        %v2100 = vpop.f32.mrb[0].mxu0
        %v2101 = vadd.f32 %v2053, %v2100
        %v2102 = vpop.f32.mrb[0].mxu0
        %v2103 = vpop.f32.mrb[0].mxu0
        %v2104 = vpop.f32.mrb[0].mxu0
        %2105 = vdwg.mxu0
        %v2106 = vadd.f32 %v2093, %v430
        %v2107 = vadd.f32 %v2096, %v430
        %v2108 = vadd.f32 %v2101, %v430
        %v2109 = vtanh.pop %v2106
        %v2110 = vtanh.pop %v2107
        %v2111 = vtanh.pop %v2108
        %v2112 = vsub.f32 1.0, %v2000
        %v2113 = vsub.f32 1.0, %v2002
        %v2114 = vsub.f32 1.0, %v2004
        %v2115 = vmul.f32 %v2112, %v1713
        %v2116 = vmul.f32 %v2113, %v1714
        %v2117 = vmul.f32 %v2114, %v1715
        %v2118 = vmul.f32 %v2000, %v2109
        %v2119 = vmul.f32 %v2002, %v2110
        %v2120 = vmul.f32 %v2004, %v2111
        %v2121 = vadd.f32 %v2115, %v2118
        %v2122 = vadd.f32 %v2116, %v2119
        %v2123 = vadd.f32 %v2117, %v2120
        %v2124 = vpack.c.bf16 %v2122, %v2121
        %v2125 = vpack.c.bf16 %v2123, %v2123
        %v2127 = vsel %vm493, %v2125, 0
        %2129 = vmatprep.subr.bf16.mxu0 0
        %2130 = vmatpush1.bf16.msra.mxu0 %v2124
        %2131 = vmatprep.subr.bf16.mxu0 0
        %2132 = vmatpush1.bf16.msra.mxu0 %v2127
        %2133 = vmatprep.subr.bf16.mxu0 0
        %2134 = vmatpush1.bf16.msra.mxu0 0
        %2135 = vmatprep.subr.bf16.mxu0 0
        %2136 = vmatpush1.bf16.msra.mxu0 0
        %2137 = vmatprep.subr.bf16.mxu0 0
        %2138 = vmatpush1.bf16.msra.mxu0 0
        %2139 = vmatprep.subr.bf16.mxu0 0
        %2140 = vmatpush1.bf16.msra.mxu0 0
        %2141 = vmatprep.subr.bf16.mxu0 0
        %2142 = vmatpush1.bf16.msra.mxu0 0
        %2143 = vmatprep.subr.bf16.mxu0 0
        %2144 = vmatpush1.bf16.msra.mxu0 0
        %2145 = vmatprep.subr.bf16.mxu0 0
        %2146 = vmatpush1.bf16.msra.mxu0 0
        %2147 = vmatprep.subr.bf16.mxu0 0
        %2148 = vmatpush1.bf16.msra.mxu0 0
        %2149 = vmatprep.subr.bf16.mxu0 0
        %2150 = vmatpush1.bf16.msra.mxu0 0
        %2151 = vmatprep.subr.bf16.mxu0 0
        %2152 = vmatpush1.bf16.msra.mxu0 0
        %2153 = vmatprep.subr.bf16.mxu0 0
        %2154 = vmatpush1.bf16.msra.mxu0 0
        %2155 = vmatprep.subr.bf16.mxu0 0
        %2156 = vmatpush1.bf16.msra.mxu0 0
        %2157 = vmatprep.subr.bf16.mxu0 0
        %2158 = vmatpush1.bf16.msra.mxu0 0
        %2159 = vmatprep.subr.bf16.mxu0 0
        %2160 = vmatpush1.bf16.msra.mxu0 0
        %2161 = vmatprep.mubr.bf16.mxu0 0
        %2162 = vmatmul.mubr.bf16.gmra.mrb[0].mxu0 %v488
        %v2163 = vpop.f32.mrb[0].mxu0
        %v2164 = vadd.f32 0.0, %v2163
        %v2165 = vpop.f32.mrb[0].mxu0
        %v2166 = vpop.f32.mrb[0].mxu0
        %v2167 = vadd.f32 0.0, %v2166
        %v2168 = vpop.f32.mrb[0].mxu0
        %2169 = vmatprep.mubr.bf16.mxu0 0
        %2170 = vmatmul.mubr.bf16.gmra.mrb[0].mxu0 %v491
        %v2171 = vpop.f32.mrb[0].mxu0
        %v2172 = vadd.f32 0.0, %v2171
        %v2173 = vpop.f32.mrb[0].mxu0
        %v2174 = vpop.f32.mrb[0].mxu0
        %v2175 = vpop.f32.mrb[0].mxu0
        %2176 = vdwg.mxu0
        %v2177 = vpack.c.bf16 %v2167, %v2164
        %v2178 = vpack.c.bf16 %v2172, %v2172
        %2179 = vmatprep.subr.bf16.mxu0 0
        %2180 = vmatpush1.bf16.msra.mxu0 %v259
        %2181 = vmatprep.subr.bf16.mxu0 0
        %2182 = vmatpush1.bf16.msra.mxu0 %v260
        %2183 = vmatprep.subr.bf16.mxu0 0
        %2184 = vmatpush1.bf16.msra.mxu0 %v261
        %2185 = vmatprep.subr.bf16.mxu0 0
        %2186 = vmatpush1.bf16.msra.mxu0 %v262
        %2187 = vmatprep.subr.bf16.mxu0 0
        %2188 = vmatpush1.bf16.msra.mxu0 %v263
        %2189 = vmatprep.subr.bf16.mxu0 0
        %2190 = vmatpush1.bf16.msra.mxu0 %v264
        %2191 = vmatprep.subr.bf16.mxu0 0
        %2192 = vmatpush1.bf16.msra.mxu0 %v265
        %2193 = vmatprep.subr.bf16.mxu0 0
        %2194 = vmatpush1.bf16.msra.mxu0 %v266
        %2195 = vmatprep.subr.bf16.mxu0 0
        %2196 = vmatpush1.bf16.msra.mxu0 0
        %2197 = vmatprep.subr.bf16.mxu0 0
        %2198 = vmatpush1.bf16.msra.mxu0 0
        %2199 = vmatprep.subr.bf16.mxu0 0
        %2200 = vmatpush1.bf16.msra.mxu0 0
        %2201 = vmatprep.subr.bf16.mxu0 0
        %2202 = vmatpush1.bf16.msra.mxu0 0
        %2203 = vmatprep.subr.bf16.mxu0 0
        %2204 = vmatpush1.bf16.msra.mxu0 0
        %2205 = vmatprep.subr.bf16.mxu0 0
        %2206 = vmatpush1.bf16.msra.mxu0 0
        %2207 = vmatprep.subr.bf16.mxu0 0
        %2208 = vmatpush1.bf16.msra.mxu0 0
        %2209 = vmatprep.subr.bf16.mxu0 0
        %2210 = vmatpush1.bf16.msra.mxu0 0
        %2211 = vmatprep.mubr.bf16.mxu0 0
        %2212 = vmatmul.mubr.bf16.gmra.mrb[0].mxu0 %v2124
        %v2213 = vpop.f32.mrb[0].mxu0
        %v2214 = vadd.f32 0.0, %v2213
        %v2215 = vpop.f32.mrb[0].mxu0
        %v2216 = vpop.f32.mrb[0].mxu0
        %v2217 = vadd.f32 0.0, %v2216
        %v2218 = vpop.f32.mrb[0].mxu0
        %2219 = vmatprep.mubr.bf16.mxu0 0
        %2220 = vmatmul.mubr.bf16.gmra.mrb[0].mxu0 %v2125
        %v2221 = vpop.f32.mrb[0].mxu0
        %v2222 = vadd.f32 0.0, %v2221
        %v2223 = vpop.f32.mrb[0].mxu0
        %v2224 = vpop.f32.mrb[0].mxu0
        %v2225 = vpop.f32.mrb[0].mxu0
        %2226 = vdwg.mxu0
        %2227 = vmatprep.subr.bf16.mxu0 0
        %2228 = vmatpush1.bf16.msra.mxu0 %v235
        %2229 = vmatprep.subr.bf16.mxu0 0
        %2230 = vmatpush1.bf16.msra.mxu0 %v236
        %2231 = vmatprep.subr.bf16.mxu0 0
        %2232 = vmatpush1.bf16.msra.mxu0 %v237
        %2233 = vmatprep.subr.bf16.mxu0 0
        %2234 = vmatpush1.bf16.msra.mxu0 %v238
        %2235 = vmatprep.subr.bf16.mxu0 0
        %2236 = vmatpush1.bf16.msra.mxu0 %v239
        %2237 = vmatprep.subr.bf16.mxu0 0
        %2238 = vmatpush1.bf16.msra.mxu0 %v240
        %2239 = vmatprep.subr.bf16.mxu0 0
        %2240 = vmatpush1.bf16.msra.mxu0 %v241
        %2241 = vmatprep.subr.bf16.mxu0 0
        %2242 = vmatpush1.bf16.msra.mxu0 %v242
        %2243 = vmatprep.subr.bf16.mxu0 0
        %2244 = vmatpush1.bf16.msra.mxu0 0
        %2245 = vmatprep.subr.bf16.mxu0 0
        %2246 = vmatpush1.bf16.msra.mxu0 0
        %2247 = vmatprep.subr.bf16.mxu0 0
        %2248 = vmatpush1.bf16.msra.mxu0 0
        %2249 = vmatprep.subr.bf16.mxu0 0
        %2250 = vmatpush1.bf16.msra.mxu0 0
        %2251 = vmatprep.subr.bf16.mxu0 0
        %2252 = vmatpush1.bf16.msra.mxu0 0
        %2253 = vmatprep.subr.bf16.mxu0 0
        %2254 = vmatpush1.bf16.msra.mxu0 0
        %2255 = vmatprep.subr.bf16.mxu0 0
        %2256 = vmatpush1.bf16.msra.mxu0 0
        %2257 = vmatprep.subr.bf16.mxu0 0
        %2258 = vmatpush1.bf16.msra.mxu0 0
        %2259 = vmatprep.mubr.bf16.mxu0 0
        %2260 = vmatmul.mubr.bf16.gmra.mrb[0].mxu0 %v2177
        %v2261 = vpop.f32.mrb[0].mxu0
        %v2262 = vadd.f32 %v2214, %v2261
        %v2263 = vpop.f32.mrb[0].mxu0
        %v2264 = vpop.f32.mrb[0].mxu0
        %v2265 = vadd.f32 %v2217, %v2264
        %v2266 = vpop.f32.mrb[0].mxu0
        %2267 = vmatprep.mubr.bf16.mxu0 0
        %2268 = vmatmul.mubr.bf16.gmra.mrb[0].mxu0 %v2178
        %v2269 = vpop.f32.mrb[0].mxu0
        %v2270 = vadd.f32 %v2222, %v2269
        %v2271 = vpop.f32.mrb[0].mxu0
        %v2272 = vpop.f32.mrb[0].mxu0
        %v2273 = vpop.f32.mrb[0].mxu0
        %2274 = vdwg.mxu0
        %v2275 = vadd.f32 %v2262, %v420
        %v2276 = vadd.f32 %v2265, %v420
        %v2277 = vadd.f32 %v2270, %v420
        %v2278 = vxor.u32 %v2275, 2147483648
        %v2279 = vxor.u32 %v2276, 2147483648
        %v2280 = vxor.u32 %v2277, 2147483648
        %v2281 = vmul.f32 %v2278, 1.442695
        %v2282 = vpow.pop %v2281
        %v2283 = vmul.f32 %v2279, 1.442695
        %v2284 = vpow.pop %v2283
        %v2285 = vmul.f32 %v2280, 1.442695
        %v2286 = vpow.pop %v2285
        %v2287 = vadd.f32 %v2282, 1.0
        %v2288 = vadd.f32 %v2284, 1.0
        %v2289 = vadd.f32 %v2286, 1.0
        %v2290 = vrcp.pop %v2287
        %v2291 = vmul.f32 1.0, %v2290
        %v2292 = vrcp.pop %v2288
        %v2293 = vmul.f32 1.0, %v2292
        %v2294 = vrcp.pop %v2289
        %v2295 = vmul.f32 1.0, %v2294
        %2296 = vmatprep.subr.bf16.mxu0 0
        %2297 = vmatpush1.bf16.msra.mxu0 %v307
        %2298 = vmatprep.subr.bf16.mxu0 0
        %2299 = vmatpush1.bf16.msra.mxu0 %v308
        %2300 = vmatprep.subr.bf16.mxu0 0
        %2301 = vmatpush1.bf16.msra.mxu0 %v309
        %2302 = vmatprep.subr.bf16.mxu0 0
        %2303 = vmatpush1.bf16.msra.mxu0 %v310
        %2304 = vmatprep.subr.bf16.mxu0 0
        %2305 = vmatpush1.bf16.msra.mxu0 %v311
        %2306 = vmatprep.subr.bf16.mxu0 0
        %2307 = vmatpush1.bf16.msra.mxu0 %v312
        %2308 = vmatprep.subr.bf16.mxu0 0
        %2309 = vmatpush1.bf16.msra.mxu0 %v313
        %2310 = vmatprep.subr.bf16.mxu0 0
        %2311 = vmatpush1.bf16.msra.mxu0 %v314
        %2312 = vmatprep.subr.bf16.mxu0 0
        %2313 = vmatpush1.bf16.msra.mxu0 0
        %2314 = vmatprep.subr.bf16.mxu0 0
        %2315 = vmatpush1.bf16.msra.mxu0 0
        %2316 = vmatprep.subr.bf16.mxu0 0
        %2317 = vmatpush1.bf16.msra.mxu0 0
        %2318 = vmatprep.subr.bf16.mxu0 0
        %2319 = vmatpush1.bf16.msra.mxu0 0
        %2320 = vmatprep.subr.bf16.mxu0 0
        %2321 = vmatpush1.bf16.msra.mxu0 0
        %2322 = vmatprep.subr.bf16.mxu0 0
        %2323 = vmatpush1.bf16.msra.mxu0 0
        %2324 = vmatprep.subr.bf16.mxu0 0
        %2325 = vmatpush1.bf16.msra.mxu0 0
        %2326 = vmatprep.subr.bf16.mxu0 0
        %2327 = vmatpush1.bf16.msra.mxu0 0
        %2328 = vmatprep.mubr.bf16.mxu0 0
        %2329 = vmatmul.mubr.bf16.gmra.mrb[0].mxu0 %v2124
        %v2330 = vpop.f32.mrb[0].mxu0
        %v2331 = vadd.f32 0.0, %v2330
        %v2332 = vpop.f32.mrb[0].mxu0
        %v2333 = vpop.f32.mrb[0].mxu0
        %v2334 = vadd.f32 0.0, %v2333
        %v2335 = vpop.f32.mrb[0].mxu0
        %2336 = vmatprep.mubr.bf16.mxu0 0
        %2337 = vmatmul.mubr.bf16.gmra.mrb[0].mxu0 %v2125
        %v2338 = vpop.f32.mrb[0].mxu0
        %v2339 = vadd.f32 0.0, %v2338
        %v2340 = vpop.f32.mrb[0].mxu0
        %v2341 = vpop.f32.mrb[0].mxu0
        %v2342 = vpop.f32.mrb[0].mxu0
        %2343 = vdwg.mxu0
        %2344 = vmatprep.subr.bf16.mxu0 0
        %2345 = vmatpush1.bf16.msra.mxu0 %v283
        %2346 = vmatprep.subr.bf16.mxu0 0
        %2347 = vmatpush1.bf16.msra.mxu0 %v284
        %2348 = vmatprep.subr.bf16.mxu0 0
        %2349 = vmatpush1.bf16.msra.mxu0 %v285
        %2350 = vmatprep.subr.bf16.mxu0 0
        %2351 = vmatpush1.bf16.msra.mxu0 %v286
        %2352 = vmatprep.subr.bf16.mxu0 0
        %2353 = vmatpush1.bf16.msra.mxu0 %v287
        %2354 = vmatprep.subr.bf16.mxu0 0
        %2355 = vmatpush1.bf16.msra.mxu0 %v288
        %2356 = vmatprep.subr.bf16.mxu0 0
        %2357 = vmatpush1.bf16.msra.mxu0 %v289
        %2358 = vmatprep.subr.bf16.mxu0 0
        %2359 = vmatpush1.bf16.msra.mxu0 %v290
        %2360 = vmatprep.subr.bf16.mxu0 0
        %2361 = vmatpush1.bf16.msra.mxu0 0
        %2362 = vmatprep.subr.bf16.mxu0 0
        %2363 = vmatpush1.bf16.msra.mxu0 0
        %2364 = vmatprep.subr.bf16.mxu0 0
        %2365 = vmatpush1.bf16.msra.mxu0 0
        %2366 = vmatprep.subr.bf16.mxu0 0
        %2367 = vmatpush1.bf16.msra.mxu0 0
        %2368 = vmatprep.subr.bf16.mxu0 0
        %2369 = vmatpush1.bf16.msra.mxu0 0
        %2370 = vmatprep.subr.bf16.mxu0 0
        %2371 = vmatpush1.bf16.msra.mxu0 0
        %2372 = vmatprep.subr.bf16.mxu0 0
        %2373 = vmatpush1.bf16.msra.mxu0 0
        %2374 = vmatprep.subr.bf16.mxu0 0
        %2375 = vmatpush1.bf16.msra.mxu0 0
        %2376 = vmatprep.mubr.bf16.mxu0 0
        %2377 = vmatmul.mubr.bf16.gmra.mrb[0].mxu0 %v2177
        %v2378 = vpop.f32.mrb[0].mxu0
        %v2379 = vadd.f32 %v2331, %v2378
        %v2380 = vpop.f32.mrb[0].mxu0
        %v2381 = vpop.f32.mrb[0].mxu0
        %v2382 = vadd.f32 %v2334, %v2381
        %v2383 = vpop.f32.mrb[0].mxu0
        %2384 = vmatprep.mubr.bf16.mxu0 0
        %2385 = vmatmul.mubr.bf16.gmra.mrb[0].mxu0 %v2178
        %v2386 = vpop.f32.mrb[0].mxu0
        %v2387 = vadd.f32 %v2339, %v2386
        %v2388 = vpop.f32.mrb[0].mxu0
        %v2389 = vpop.f32.mrb[0].mxu0
        %v2390 = vpop.f32.mrb[0].mxu0
        %2391 = vdwg.mxu0
        %v2392 = vadd.f32 %v2379, %v425
        %v2393 = vadd.f32 %v2382, %v425
        %v2394 = vadd.f32 %v2387, %v425
        %v2395 = vxor.u32 %v2392, 2147483648
        %v2396 = vxor.u32 %v2393, 2147483648
        %v2397 = vxor.u32 %v2394, 2147483648
        %v2398 = vmul.f32 %v2395, 1.442695
        %v2399 = vpow.pop %v2398
        %v2400 = vmul.f32 %v2396, 1.442695
        %v2401 = vpow.pop %v2400
        %v2402 = vmul.f32 %v2397, 1.442695
        %v2403 = vpow.pop %v2402
        %v2404 = vadd.f32 %v2399, 1.0
        %v2405 = vadd.f32 %v2401, 1.0
        %v2406 = vadd.f32 %v2403, 1.0
        %v2407 = vrcp.pop %v2404
        %v2408 = vmul.f32 1.0, %v2407
        %v2409 = vrcp.pop %v2405
        %v2410 = vmul.f32 1.0, %v2409
        %v2411 = vrcp.pop %v2406
        %v2412 = vmul.f32 1.0, %v2411
        %v2413 = vmul.f32 %v2291, %v2121
        %v2414 = vmul.f32 %v2293, %v2122
        %v2415 = vmul.f32 %v2295, %v2123
        %v2416 = vpack.c.bf16 %v2414, %v2413
        %v2417 = vpack.c.bf16 %v2415, %v2415
        %2418 = vmatprep.subr.bf16.mxu0 0
        %2419 = vmatpush1.bf16.msra.mxu0 %v355
        %2420 = vmatprep.subr.bf16.mxu0 0
        %2421 = vmatpush1.bf16.msra.mxu0 %v356
        %2422 = vmatprep.subr.bf16.mxu0 0
        %2423 = vmatpush1.bf16.msra.mxu0 %v357
        %2424 = vmatprep.subr.bf16.mxu0 0
        %2425 = vmatpush1.bf16.msra.mxu0 %v358
        %2426 = vmatprep.subr.bf16.mxu0 0
        %2427 = vmatpush1.bf16.msra.mxu0 %v359
        %2428 = vmatprep.subr.bf16.mxu0 0
        %2429 = vmatpush1.bf16.msra.mxu0 %v360
        %2430 = vmatprep.subr.bf16.mxu0 0
        %2431 = vmatpush1.bf16.msra.mxu0 %v361
        %2432 = vmatprep.subr.bf16.mxu0 0
        %2433 = vmatpush1.bf16.msra.mxu0 %v362
        %2434 = vmatprep.subr.bf16.mxu0 0
        %2435 = vmatpush1.bf16.msra.mxu0 0
        %2436 = vmatprep.subr.bf16.mxu0 0
        %2437 = vmatpush1.bf16.msra.mxu0 0
        %2438 = vmatprep.subr.bf16.mxu0 0
        %2439 = vmatpush1.bf16.msra.mxu0 0
        %2440 = vmatprep.subr.bf16.mxu0 0
        %2441 = vmatpush1.bf16.msra.mxu0 0
        %2442 = vmatprep.subr.bf16.mxu0 0
        %2443 = vmatpush1.bf16.msra.mxu0 0
        %2444 = vmatprep.subr.bf16.mxu0 0
        %2445 = vmatpush1.bf16.msra.mxu0 0
        %2446 = vmatprep.subr.bf16.mxu0 0
        %2447 = vmatpush1.bf16.msra.mxu0 0
        %2448 = vmatprep.subr.bf16.mxu0 0
        %2449 = vmatpush1.bf16.msra.mxu0 0
        %2450 = vmatprep.mubr.bf16.mxu0 0
        %2451 = vmatmul.mubr.bf16.gmra.mrb[0].mxu0 %v2416
        %v2452 = vpop.f32.mrb[0].mxu0
        %v2453 = vadd.f32 0.0, %v2452
        %v2454 = vpop.f32.mrb[0].mxu0
        %v2455 = vpop.f32.mrb[0].mxu0
        %v2456 = vadd.f32 0.0, %v2455
        %v2457 = vpop.f32.mrb[0].mxu0
        %2458 = vmatprep.mubr.bf16.mxu0 0
        %2459 = vmatmul.mubr.bf16.gmra.mrb[0].mxu0 %v2417
        %v2460 = vpop.f32.mrb[0].mxu0
        %v2461 = vadd.f32 0.0, %v2460
        %v2462 = vpop.f32.mrb[0].mxu0
        %v2463 = vpop.f32.mrb[0].mxu0
        %v2464 = vpop.f32.mrb[0].mxu0
        %2465 = vdwg.mxu0
        %2466 = vmatprep.subr.bf16.mxu0 0
        %2467 = vmatpush1.bf16.msra.mxu0 %v331
        %2468 = vmatprep.subr.bf16.mxu0 0
        %2469 = vmatpush1.bf16.msra.mxu0 %v332
        %2470 = vmatprep.subr.bf16.mxu0 0
        %2471 = vmatpush1.bf16.msra.mxu0 %v333
        %2472 = vmatprep.subr.bf16.mxu0 0
        %2473 = vmatpush1.bf16.msra.mxu0 %v334
        %2474 = vmatprep.subr.bf16.mxu0 0
        %2475 = vmatpush1.bf16.msra.mxu0 %v335
        %2476 = vmatprep.subr.bf16.mxu0 0
        %2477 = vmatpush1.bf16.msra.mxu0 %v336
        %2478 = vmatprep.subr.bf16.mxu0 0
        %2479 = vmatpush1.bf16.msra.mxu0 %v337
        %2480 = vmatprep.subr.bf16.mxu0 0
        %2481 = vmatpush1.bf16.msra.mxu0 %v338
        %2482 = vmatprep.subr.bf16.mxu0 0
        %2483 = vmatpush1.bf16.msra.mxu0 0
        %2484 = vmatprep.subr.bf16.mxu0 0
        %2485 = vmatpush1.bf16.msra.mxu0 0
        %2486 = vmatprep.subr.bf16.mxu0 0
        %2487 = vmatpush1.bf16.msra.mxu0 0
        %2488 = vmatprep.subr.bf16.mxu0 0
        %2489 = vmatpush1.bf16.msra.mxu0 0
        %2490 = vmatprep.subr.bf16.mxu0 0
        %2491 = vmatpush1.bf16.msra.mxu0 0
        %2492 = vmatprep.subr.bf16.mxu0 0
        %2493 = vmatpush1.bf16.msra.mxu0 0
        %2494 = vmatprep.subr.bf16.mxu0 0
        %2495 = vmatpush1.bf16.msra.mxu0 0
        %2496 = vmatprep.subr.bf16.mxu0 0
        %2497 = vmatpush1.bf16.msra.mxu0 0
        %2498 = vmatprep.mubr.bf16.mxu0 0
        %2499 = vmatmul.mubr.bf16.gmra.mrb[0].mxu0 %v2177
        %v2500 = vpop.f32.mrb[0].mxu0
        %v2501 = vadd.f32 %v2453, %v2500
        %v2502 = vpop.f32.mrb[0].mxu0
        %v2503 = vpop.f32.mrb[0].mxu0
        %v2504 = vadd.f32 %v2456, %v2503
        %v2505 = vpop.f32.mrb[0].mxu0
        %2506 = vmatprep.mubr.bf16.mxu0 0
        %2507 = vmatmul.mubr.bf16.gmra.mrb[0].mxu0 %v2178
        %v2508 = vpop.f32.mrb[0].mxu0
        %v2509 = vadd.f32 %v2461, %v2508
        %v2510 = vpop.f32.mrb[0].mxu0
        %v2511 = vpop.f32.mrb[0].mxu0
        %v2512 = vpop.f32.mrb[0].mxu0
        %2513 = vdwg.mxu0
        %v2514 = vadd.f32 %v2501, %v430
        %v2515 = vadd.f32 %v2504, %v430
        %v2516 = vadd.f32 %v2509, %v430
        %v2517 = vtanh.pop %v2514
        %v2518 = vtanh.pop %v2515
        %v2519 = vtanh.pop %v2516
        %v2520 = vsub.f32 1.0, %v2408
        %v2521 = vsub.f32 1.0, %v2410
        %v2522 = vsub.f32 1.0, %v2412
        %v2523 = vmul.f32 %v2520, %v2121
        %v2524 = vmul.f32 %v2521, %v2122
        %v2525 = vmul.f32 %v2522, %v2123
        %v2526 = vmul.f32 %v2408, %v2517
        %v2527 = vmul.f32 %v2410, %v2518
        %v2528 = vmul.f32 %v2412, %v2519
        %v2529 = vadd.f32 %v2523, %v2526
        %v2530 = vadd.f32 %v2524, %v2527
        %v2531 = vadd.f32 %v2525, %v2528
        %v2532 = vpack.c.bf16 %v2530, %v2529
        %v2533 = vpack.c.bf16 %v2531, %v2531
        %2534 = vmatprep.subr.bf16.mxu0 0
        %2535 = vmatpush1.bf16.msra.mxu0 %v379
        %2536 = vmatprep.subr.bf16.mxu0 0
        %2537 = vmatpush1.bf16.msra.mxu0 %v380
        %2538 = vmatprep.subr.bf16.mxu0 0
        %2539 = vmatpush1.bf16.msra.mxu0 %v381
        %2540 = vmatprep.subr.bf16.mxu0 0
        %2541 = vmatpush1.bf16.msra.mxu0 %v382
        %2542 = vmatprep.subr.bf16.mxu0 0
        %2543 = vmatpush1.bf16.msra.mxu0 %v383
        %2544 = vmatprep.subr.bf16.mxu0 0
        %2545 = vmatpush1.bf16.msra.mxu0 %v384
        %2546 = vmatprep.subr.bf16.mxu0 0
        %2547 = vmatpush1.bf16.msra.mxu0 %v385
        %2548 = vmatprep.subr.bf16.mxu0 0
        %2549 = vmatpush1.bf16.msra.mxu0 %v386
        %2550 = vmatprep.subr.bf16.mxu0 0
        %2551 = vmatpush1.bf16.msra.mxu0 0
        %2552 = vmatprep.subr.bf16.mxu0 0
        %2553 = vmatpush1.bf16.msra.mxu0 0
        %2554 = vmatprep.subr.bf16.mxu0 0
        %2555 = vmatpush1.bf16.msra.mxu0 0
        %2556 = vmatprep.subr.bf16.mxu0 0
        %2557 = vmatpush1.bf16.msra.mxu0 0
        %2558 = vmatprep.subr.bf16.mxu0 0
        %2559 = vmatpush1.bf16.msra.mxu0 0
        %2560 = vmatprep.subr.bf16.mxu0 0
        %2561 = vmatpush1.bf16.msra.mxu0 0
        %2562 = vmatprep.subr.bf16.mxu0 0
        %2563 = vmatpush1.bf16.msra.mxu0 0
        %2564 = vmatprep.subr.bf16.mxu0 0
        %2565 = vmatpush1.bf16.msra.mxu0 0
        %2566 = vmatprep.mubr.bf16.mxu0 0
        %2567 = vmatmul.mubr.bf16.gmra.mrb[0].mxu0 %v2532
        %v2568 = vpop.f32.mrb[0].mxu0
        %v2569 = vadd.f32 %v435, %v2568
        %v2570 = vpop.f32.mrb[0].mxu0
        %v2571 = vpop.f32.mrb[0].mxu0
        %v2572 = vadd.f32 %v435, %v2571
        %v2573 = vpop.f32.mrb[0].mxu0
        %2574 = vmatprep.mubr.bf16.mxu0 0
        %2575 = vmatmul.mubr.bf16.gmra.mrb[0].mxu0 %v2533
        %v2576 = vpop.f32.mrb[0].mxu0
        %v2577 = vadd.f32 %v435, %v2576
        %v2578 = vpop.f32.mrb[0].mxu0
        %v2579 = vpop.f32.mrb[0].mxu0
        %v2580 = vpop.f32.mrb[0].mxu0
        %2581 = vdwg.mxu0
        %v2582 = vpack.c.bf16 %v2572, %v2569
        %v2583 = vpack.c.bf16 %v2577, %v2577
        %2584 = vmatprep.subr.bf16.mxu0 0
        %2585 = vmatpush1.bf16.msra.mxu0 %v403
        %2586 = vmatprep.subr.bf16.mxu0 0
        %2587 = vmatpush1.bf16.msra.mxu0 %v404
        %2588 = vmatprep.subr.bf16.mxu0 0
        %2589 = vmatpush1.bf16.msra.mxu0 %v405
        %2590 = vmatprep.subr.bf16.mxu0 0
        %2591 = vmatpush1.bf16.msra.mxu0 %v406
        %2592 = vmatprep.subr.bf16.mxu0 0
        %2593 = vmatpush1.bf16.msra.mxu0 %v407
        %2594 = vmatprep.subr.bf16.mxu0 0
        %2595 = vmatpush1.bf16.msra.mxu0 %v408
        %2596 = vmatprep.subr.bf16.mxu0 0
        %2597 = vmatpush1.bf16.msra.mxu0 %v409
        %2598 = vmatprep.subr.bf16.mxu0 0
        %2599 = vmatpush1.bf16.msra.mxu0 %v410
        %2600 = vmatprep.subr.bf16.mxu0 0
        %2601 = vmatpush1.bf16.msra.mxu0 0
        %2602 = vmatprep.subr.bf16.mxu0 0
        %2603 = vmatpush1.bf16.msra.mxu0 0
        %2604 = vmatprep.subr.bf16.mxu0 0
        %2605 = vmatpush1.bf16.msra.mxu0 0
        %2606 = vmatprep.subr.bf16.mxu0 0
        %2607 = vmatpush1.bf16.msra.mxu0 0
        %2608 = vmatprep.subr.bf16.mxu0 0
        %2609 = vmatpush1.bf16.msra.mxu0 0
        %2610 = vmatprep.subr.bf16.mxu0 0
        %2611 = vmatpush1.bf16.msra.mxu0 0
        %2612 = vmatprep.subr.bf16.mxu0 0
        %2613 = vmatpush1.bf16.msra.mxu0 0
        %2614 = vmatprep.subr.bf16.mxu0 0
        %2615 = vmatpush1.bf16.msra.mxu0 0
        %2616 = vmatprep.mubr.bf16.mxu0 0
        %2617 = vmatmul.mubr.bf16.gmra.mrb[0].mxu0 %v2582
        %v2618 = vpop.f32.mrb[0].mxu0
        %v2619 = vadd.f32 0.0, %v2618
        %v2620 = vpop.f32.mrb[0].mxu0
        %v2621 = vpop.f32.mrb[0].mxu0
        %v2622 = vadd.f32 0.0, %v2621
        %v2623 = vpop.f32.mrb[0].mxu0
        %2624 = vmatprep.mubr.bf16.mxu0 0
        %2625 = vmatmul.mubr.bf16.gmra.mrb[0].mxu0 %v2583
        %v2626 = vpop.f32.mrb[0].mxu0
        %v2627 = vadd.f32 0.0, %v2626
        %v2628 = vpop.f32.mrb[0].mxu0
        %v2629 = vpop.f32.mrb[0].mxu0
        %v2630 = vpop.f32.mrb[0].mxu0
        %2631 = vdwg.mxu0
        %2632 = vst [vmem:[%s183] sm:$0xff] %v2619
        %2633 = vst [vmem:[%s183 + $0x8] sm:$0xff] %v2622
        %2634 = vst [vmem:[%s183 + $0x10] sm:$0xff] %v2627
        %p2635 = scmp.lt.s32.totalorder %s16, 2
        %s2636 = scalar_select %p2635, %s16, 2
        %s2637 = smul.addr %s2636, 3
        %s2638 = smul.addr %s2637, 8
        %s2639 = scalar_lea.vmem %s2, %s2638
        // Predicated region
        $region33: #{_lambda_.1} parent=27 // pred_check
          %p2640 = pneg %p86
        $region34: #{_lambda_.1} parent=27 // pred_check_branch
          %2642 = sbr.rel (%p2640) target = $region36
        $region35: #{_lambda_.1} parent=27 // pred_region
          _
        $region36: #{_lambda_.1} parent=27 // pred_fallthru
          _
      $region28: #{_lambda_.1} parent=5 // pred_fallthru
        _
      %p2643 = scmp.le.s32.totalorder 2, %s11
      // Predicated region
      $region37: #{_lambda_.1} parent=5 // pred_check
        %p2644 = pneg %p2643
      $region38: #{_lambda_.1} parent=5 // pred_check_branch
        %2646 = sbr.rel (%p2644) target = $region40
      $region39: #{_lambda_.1} parent=5 // pred_region
        %s2647 = ssub.s32 %s11, 2
        // Predicated region
        $region41: #{_lambda_.1} parent=39 // pred_check
          %p2648 = pneg %p92
        $region42: #{_lambda_.1} parent=39 // pred_check_branch
          %2650 = sbr.rel (%p2648) target = $region44
        $region43: #{_lambda_.1} parent=39 // pred_region
          %p2651 = scmp.lt.s32.totalorder %s17, 2
          %s2652 = scalar_select %p2651, %s17, 2
          %s2653 = smul.addr %s2652, 3
          %s2654 = smul.addr %s2653, 8
          %s2655 = scalar_lea.vmem %s2, %s2654
        $region44: #{_lambda_.1} parent=39 // pred_fallthru
          _
      $region40: #{_lambda_.1} parent=5 // pred_fallthru
        _
    $region6: #{_lambda_.1} parent=1 // loop_footer
      %s15 = sadd.s32 1, %s11
    $region7: #{_lambda_.1} parent=1 // loop_footer_branch
      %10 = sbr.rel target = $region3
    $region8: #{_lambda_.1} parent=1 // loop_exit
      _
    %2656 = vsyncpa [#allocation3], 1
    %s2657 = scalar_lea.sflag [#allocation3], 1
    %2658 = vsyncpa %s2657, 1

</llo_original>
